<compile_context>
chip_gen: v6e
topology: v6e:2x2x1
jax: 0.10.0
libtpu: 0.0.40
codegen_flags: <defaults>
</compile_context>

<pallas_src>
import functools

import jax
import jax.numpy as jnp
from jax.experimental import pallas as pl
from jax.experimental.pallas import tpu as pltpu


def _round_up(x, m):
    return ((x + m - 1) // m) * m


def _make_lstm_kernel(num_layers, hidden_pad, seq_len, batch_pad):
    L, Hp, T, Bp = num_layers, hidden_pad, seq_len, batch_pad

    def kernel(*args):
        x_ref = args[0]          # [T*Bp, Ep] bf16, time-major flattened
        h0_ref = args[1]         # [L*Bp, Hp] f32  initial hidden state
        c0_ref = args[2]         # [L*Bp, Hp] f32  initial cell state
        idx = 3
        w_ih_refs, w_hh_refs, b_refs = [], [], []
        for _ in range(L):
            w_ih_refs.append(args[idx])      # [in_p, 4*Hp] bf16 (pre-transposed)
            w_hh_refs.append(args[idx + 1])  # [Hp, 4*Hp]   bf16 (pre-transposed)
            b_refs.append(args[idx + 2])     # [1, 4*Hp]    f32  (b_ih + b_hh)
            idx += 3
        out_ref = args[idx]      # [T*Bp, Hp] f32, time-major flattened
        hn_ref = args[idx + 1]   # [L*Bp, Hp] f32
        cn_ref = args[idx + 2]   # [L*Bp, Hp] f32
        xg_ref = args[idx + 3]   # VMEM scratch [T*Bp, 4*Hp] f32

        seq_in = x_ref[...]      # bf16 [T*Bp, in_p]
        for l in range(L):
            # Hoisted, batched input projection for the whole sequence: one big
            # MXU matmul (M = T*Bp) written to a VMEM scratch so the unrolled
            # serial loop never keeps a [T*Bp, 4*Hp] value live in vregs.
            xg_ref[...] = (
                jnp.dot(seq_in, w_ih_refs[l][...],
                        preferred_element_type=jnp.float32)
                + b_refs[l][...]
            )

            h = h0_ref[l * Bp:(l + 1) * Bp, :]
            c = c0_ref[l * Bp:(l + 1) * Bp, :]
            hs = []
            for t in range(T):   # static unroll (T small & static here)
                gates = xg_ref[t * Bp:(t + 1) * Bp, :] + jnp.dot(
                    h.astype(jnp.bfloat16), w_hh_refs[l][...],
                    preferred_element_type=jnp.float32,
                )  # [Bp, 4*Hp] f32; gate order i, f, g, o (PyTorch convention)
                i_g = jax.nn.sigmoid(gates[:, 0 * Hp:1 * Hp])
                f_g = jax.nn.sigmoid(gates[:, 1 * Hp:2 * Hp])
                g_g = jnp.tanh(gates[:, 2 * Hp:3 * Hp])
                o_g = jax.nn.sigmoid(gates[:, 3 * Hp:4 * Hp])
                c = f_g * c + i_g * g_g
                h = o_g * jnp.tanh(c)
                hs.append(h)

            hn_ref[l * Bp:(l + 1) * Bp, :] = h
            cn_ref[l * Bp:(l + 1) * Bp, :] = c

            seq_f32 = jnp.concatenate(hs, axis=0)        # [T*Bp, Hp]
            if l == L - 1:
                out_ref[...] = seq_f32                   # single unmasked slab store
            else:
                seq_in = seq_f32.astype(jnp.bfloat16)    # feed next layer in-register

    return kernel


def _pad_gate_cols(w, H, Hp):
    """Pad the last (4*H) gate dim to 4*Hp, zero-filling inside each gate block."""
    if H == Hp:
        return w
    pad_width = [(0, 0)] * (w.ndim - 1) + [(0, Hp - H)]
    parts = [jnp.pad(w[..., k * H:(k + 1) * H], pad_width) for k in range(4)]
    return jnp.concatenate(parts, axis=-1)


def pack_lstm_params(params, embedding_size, hidden_size):
    """Pad + transpose + cast torch-style LSTM params for the kernel.

    Input per layer:  (w_ih [4H, in], w_hh [4H, H], b_ih [4H], b_hh [4H]) f32.
    Output per layer: (w_ih^T [in_p, 4*Hp] bf16, w_hh^T [Hp, 4*Hp] bf16,
                       b_ih+b_hh [1, 4*Hp] f32), all zero-padded.
    """
    H = hidden_size
    Hp = _round_up(H, 128)
    Ep = _round_up(embedding_size, 128)
    packed = []
    for l, (w_ih, w_hh, b_ih, b_hh) in enumerate(params):
        in_size = w_ih.shape[1]
        in_p = Ep if l == 0 else Hp
        w_ih_t = _pad_gate_cols(w_ih.T, H, Hp)               # [in, 4*Hp]
        w_ih_t = jnp.pad(w_ih_t, ((0, in_p - in_size), (0, 0)))
        w_hh_t = _pad_gate_cols(w_hh.T, H, Hp)               # [H, 4*Hp]
        w_hh_t = jnp.pad(w_hh_t, ((0, Hp - H), (0, 0)))
        b = _pad_gate_cols((b_ih + b_hh)[None, :], H, Hp)    # [1, 4*Hp]
        packed.append((w_ih_t.astype(jnp.bfloat16),
                       w_hh_t.astype(jnp.bfloat16),
                       b.astype(jnp.float32)))
    return packed


def basic_rnn_decoder_lstm(input_embeddings, packed_params, hidden_size,
                           num_layers, hidden_states=None):
    """Pallas forward of BasicRNNDecoder (LSTM cell, batch_first, dropout=0)."""
    B, T, E = input_embeddings.shape
    H, L = hidden_size, num_layers
    Bp = _round_up(B, 8)
    Hp = _round_up(H, 128)
    Ep = _round_up(E, 128)

    # Time-major, batch/embedding-padded, flattened, bf16 input: [T*Bp, Ep].
    x_tm = jnp.transpose(input_embeddings, (1, 0, 2))
    x_tm = jnp.pad(x_tm, ((0, 0), (0, Bp - B), (0, Ep - E)))
    x_flat = x_tm.reshape(T * Bp, Ep).astype(jnp.bfloat16)

    if hidden_states is None:
        h0 = jnp.zeros((L * Bp, Hp), jnp.float32)
        c0 = jnp.zeros((L * Bp, Hp), jnp.float32)
    else:
        h0_u, c0_u = hidden_states                            # each [L, B, H]
        pad = ((0, 0), (0, Bp - B), (0, Hp - H))
        h0 = jnp.pad(h0_u.astype(jnp.float32), pad).reshape(L * Bp, Hp)
        c0 = jnp.pad(c0_u.astype(jnp.float32), pad).reshape(L * Bp, Hp)

    flat_inputs = [x_flat, h0, c0]
    for l in range(L):
        flat_inputs += list(packed_params[l])

    vmem = pl.BlockSpec(memory_space=pltpu.MemorySpace.VMEM)
    out_shapes = (
        jax.ShapeDtypeStruct((T * Bp, Hp), jnp.float32),  # outputs (time-major, flat)
        jax.ShapeDtypeStruct((L * Bp, Hp), jnp.float32),  # h_n (flat)
        jax.ShapeDtypeStruct((L * Bp, Hp), jnp.float32),  # c_n (flat)
    )

    kernel = _make_lstm_kernel(L, Hp, T, Bp)
    out_flat, hn_flat, cn_flat = pl.pallas_call(
        kernel,
        out_shape=out_shapes,
        in_specs=[vmem] * len(flat_inputs),
        out_specs=(vmem, vmem, vmem),
        scratch_shapes=[pltpu.VMEM((T * Bp, 4 * Hp), jnp.float32)],
        compiler_params=pltpu.CompilerParams(
            vmem_limit_bytes=32 * 1024 * 1024),
    )(*flat_inputs)

    outputs = out_flat.reshape(T, Bp, Hp)[:, :B, :H].transpose(1, 0, 2)  # [B,T,H]
    h_n = hn_flat.reshape(L, Bp, Hp)[:, :B, :H]                          # [L,B,H]
    c_n = cn_flat.reshape(L, Bp, Hp)[:, :B, :H]                          # [L,B,H]
    return outputs, (h_n, c_n)


def init_lstm_params(key, embedding_size, hidden_size, num_layers):
    """nn.LSTM-style params U(-1/sqrt(H), 1/sqrt(H)): per layer
    (w_ih [4H, in], w_hh [4H, H], b_ih [4H], b_hh [4H])."""
    H = hidden_size
    bound = 1.0 / (H ** 0.5)
    params = []
    for l in range(num_layers):
        in_size = embedding_size if l == 0 else H
        key, k1, k2, k3, k4 = jax.random.split(key, 5)
        w_ih = jax.random.uniform(k1, (4 * H, in_size), jnp.float32, -bound, bound)
        w_hh = jax.random.uniform(k2, (4 * H, H), jnp.float32, -bound, bound)
        b_ih = jax.random.uniform(k3, (4 * H,), jnp.float32, -bound, bound)
        b_hh = jax.random.uniform(k4, (4 * H,), jnp.float32, -bound, bound)
        params.append((w_ih, w_hh, b_ih, b_hh))
    return params


def ref_lstm(x, params, hidden_size, num_layers, hidden_states=None,
             cast_bf16=False):
    """Pure-JAX reference of torch.nn.LSTM (batch_first).  With cast_bf16=True
    it mirrors the kernel's bf16-weight / bf16-LHS, f32-accumulate math."""
    B, T, E = x.shape
    H, L = hidden_size, num_layers
    bf = ((lambda a: a.astype(jnp.bfloat16).astype(jnp.float32))
          if cast_bf16 else (lambda a: a))
    if hidden_states is None:
        h = [jnp.zeros((B, H), jnp.float32) for _ in range(L)]
        c = [jnp.zeros((B, H), jnp.float32) for _ in range(L)]
    else:
        h0, c0 = hidden_states
        h = [h0[l] for l in range(L)]
        c = [c0[l] for l in range(L)]
    outs = []
    for t in range(T):
        inp = x[:, t, :]
        for l in range(L):
            w_ih, w_hh, b_ih, b_hh = params[l]
            gates = bf(inp) @ bf(w_ih.T) + bf(h[l]) @ bf(w_hh.T) + b_ih + b_hh
            i_g = jax.nn.sigmoid(gates[:, 0 * H:1 * H])
            f_g = jax.nn.sigmoid(gates[:, 1 * H:2 * H])
            g_g = jnp.tanh(gates[:, 2 * H:3 * H])
            o_g = jax.nn.sigmoid(gates[:, 3 * H:4 * H])
            c[l] = f_g * c[l] + i_g * g_g
            h[l] = o_g * jnp.tanh(c[l])
            inp = h[l]
        outs.append(inp)
    return jnp.stack(outs, axis=1), (jnp.stack(h, 0), jnp.stack(c, 0))


if __name__ == "__main__":
    batch = 2
    seq = 8
    embedding_size = 32
    hidden_size = 32
    num_layers = 2

    key = jax.random.PRNGKey(0)
    key, xk, hk, ck = jax.random.split(key, 4)
    input_embeddings = jax.random.normal(
        xk, (batch, seq, embedding_size), jnp.float32
    )
    params = init_lstm_params(key, embedding_size, hidden_size, num_layers)
    packed = pack_lstm_params(params, embedding_size, hidden_size)

    fwd = jax.jit(
        functools.partial(
            basic_rnn_decoder_lstm,
            hidden_size=hidden_size,
            num_layers=num_layers,
        )
    )

    # --- Path 1: hidden_states=None (zero init, the module's default) ---------
    outputs, (h_n, c_n) = fwd(input_embeddings, packed)
    jax.block_until_ready((outputs, h_n, c_n))

    assert outputs.shape == (batch, seq, hidden_size)
    assert h_n.shape == (num_layers, batch, hidden_size)
    assert c_n.shape == (num_layers, batch, hidden_size)

    # Tight check vs. a matched-precision (bf16-weight) reference.
    m_out, (m_h, m_c) = ref_lstm(input_embeddings, params, hidden_size,
                                 num_layers, cast_bf16=True)
    assert jnp.allclose(outputs, m_out, atol=1e-3, rtol=1e-3)
    assert jnp.allclose(h_n, m_h, atol=1e-3, rtol=1e-3)
    assert jnp.allclose(c_n, m_c, atol=1e-3, rtol=1e-3)

    # Loose check vs. the full-f32 reference (bf16 weight quantization error).
    f_out, (f_h, f_c) = ref_lstm(input_embeddings, params, hidden_size, num_layers)
    assert jnp.allclose(outputs, f_out, atol=3e-2, rtol=3e-2)
    assert jnp.allclose(h_n, f_h, atol=3e-2, rtol=3e-2)
    assert jnp.allclose(c_n, f_c, atol=3e-2, rtol=3e-2)

    # --- Path 2: user-supplied initial hidden state ----------------------------
    h0 = 0.5 * jax.random.normal(hk, (num_layers, batch, hidden_size), jnp.float32)
    c0 = 0.5 * jax.random.normal(ck, (num_layers, batch, hidden_size), jnp.float32)
    outputs2, (h_n2, c_n2) = fwd(input_embeddings, packed, hidden_states=(h0, c0))
    jax.block_until_ready((outputs2, h_n2, c_n2))
    m_out2, (m_h2, m_c2) = ref_lstm(input_embeddings, params, hidden_size,
                                    num_layers, hidden_states=(h0, c0),
                                    cast_bf16=True)
    assert jnp.allclose(outputs2, m_out2, atol=1e-3, rtol=1e-3)
    assert jnp.allclose(h_n2, m_h2, atol=1e-3, rtol=1e-3)
    assert jnp.allclose(c_n2, m_c2, atol=1e-3, rtol=1e-3)

    print("KERNEL_OK")
</pallas_src>

<mosaic_0001>
module attributes {stable_mosaic.version = 11 : i64} {
  func.func @kernel(%arg0: memref<64x128xbf16, #tpu.memory_space<vmem>>, %arg1: memref<16x128xf32, #tpu.memory_space<vmem>>, %arg2: memref<16x128xf32, #tpu.memory_space<vmem>>, %arg3: memref<128x512xbf16, #tpu.memory_space<vmem>>, %arg4: memref<128x512xbf16, #tpu.memory_space<vmem>>, %arg5: memref<1x512xf32, #tpu.memory_space<vmem>>, %arg6: memref<128x512xbf16, #tpu.memory_space<vmem>>, %arg7: memref<128x512xbf16, #tpu.memory_space<vmem>>, %arg8: memref<1x512xf32, #tpu.memory_space<vmem>>, %arg9: memref<64x128xf32, #tpu.memory_space<vmem>>, %arg10: memref<16x128xf32, #tpu.memory_space<vmem>>, %arg11: memref<16x128xf32, #tpu.memory_space<vmem>>, %arg12: memref<64x512xf32, #tpu.memory_space<vmem>>) attributes {dimension_semantics = [], scalar_prefetch = 0 : i64, scratch_operands = 1 : i64, tpu.core_type = #tpu.core_type<tc>} {
    %c0 = arith.constant 0 : index
    %c0_0 = arith.constant 0 : index
    %0 = vector.load %arg0[%c0, %c0_0] : memref<64x128xbf16, #tpu.memory_space<vmem>>, vector<64x128xbf16>
    %c0_1 = arith.constant 0 : index
    %c0_2 = arith.constant 0 : index
    %1 = vector.load %arg3[%c0_1, %c0_2] : memref<128x512xbf16, #tpu.memory_space<vmem>>, vector<128x512xbf16>
    %cst = arith.constant dense<0.000000e+00> : vector<64x512xf32>
    %2 = tpu.matmul %0, %1, %cst {dimension_numbers = #tpu.dot_dimension_numbers<[1], [0], [0], [1], [0, 0, 1, 1], [], []>} : vector<64x128xbf16>, vector<128x512xbf16>, vector<64x512xf32> -> vector<64x512xf32>
    %c0_3 = arith.constant 0 : index
    %c0_4 = arith.constant 0 : index
    %3 = vector.load %arg5[%c0_3, %c0_4] : memref<1x512xf32, #tpu.memory_space<vmem>>, vector<1x512xf32>
    %4 = vector.broadcast %3 : vector<1x512xf32> to vector<64x512xf32>
    %5 = arith.addf %2, %4 : vector<64x512xf32>
    %c0_5 = arith.constant 0 : index
    %c0_6 = arith.constant 0 : index
    %6 = vector.load %arg12[%c0_5, %c0_6] : memref<64x512xf32, #tpu.memory_space<vmem>>, vector<64x512xf32>
    tpu.vector_store %arg12[%c0_5, %c0_6], %5 {strides = array<i32>} : memref<64x512xf32, #tpu.memory_space<vmem>>, vector<64x512xf32>,
    %c0_7 = arith.constant 0 : index
    %c0_8 = arith.constant 0 : index
    %7 = vector.load %arg1[%c0_7, %c0_8] : memref<16x128xf32, #tpu.memory_space<vmem>>, vector<8x128xf32>
    %c0_9 = arith.constant 0 : index
    %c0_10 = arith.constant 0 : index
    %8 = vector.load %arg2[%c0_9, %c0_10] : memref<16x128xf32, #tpu.memory_space<vmem>>, vector<8x128xf32>
    %c0_11 = arith.constant 0 : index
    %c0_12 = arith.constant 0 : index
    %9 = vector.load %arg12[%c0_11, %c0_12] : memref<64x512xf32, #tpu.memory_space<vmem>>, vector<8x512xf32>
    %10 = arith.truncf %7 : vector<8x128xf32> to vector<8x128xbf16>
    %c0_13 = arith.constant 0 : index
    %c0_14 = arith.constant 0 : index
    %11 = vector.load %arg4[%c0_13, %c0_14] : memref<128x512xbf16, #tpu.memory_space<vmem>>, vector<128x512xbf16>
    %cst_15 = arith.constant dense<0.000000e+00> : vector<8x512xf32>
    %12 = tpu.matmul %10, %11, %cst_15 {dimension_numbers = #tpu.dot_dimension_numbers<[1], [0], [0], [1], [0, 0, 1, 1], [], []>} : vector<8x128xbf16>, vector<128x512xbf16>, vector<8x512xf32> -> vector<8x512xf32>
    %13 = arith.addf %9, %12 : vector<8x512xf32>
    %14 = vector.extract_strided_slice %13 {offsets = [0, 0], sizes = [8, 128], strides = [1, 1]} : vector<8x512xf32> to vector<8x128xf32>
    %15 = arith.negf %14 : vector<8x128xf32>
    %16 = math.exp %15 : vector<8x128xf32>
    %cst_16 = arith.constant 1.000000e+00 : f32
    %17 = vector.broadcast %cst_16 : f32 to vector<8x128xf32>
    %18 = arith.addf %17, %16 : vector<8x128xf32>
    %19 = arith.divf %17, %18 : vector<8x128xf32>
    %20 = vector.extract_strided_slice %13 {offsets = [0, 128], sizes = [8, 128], strides = [1, 1]} : vector<8x512xf32> to vector<8x128xf32>
    %21 = arith.negf %20 : vector<8x128xf32>
    %22 = math.exp %21 : vector<8x128xf32>
    %cst_17 = arith.constant 1.000000e+00 : f32
    %23 = vector.broadcast %cst_17 : f32 to vector<8x128xf32>
    %24 = arith.addf %23, %22 : vector<8x128xf32>
    %25 = arith.divf %23, %24 : vector<8x128xf32>
    %26 = vector.extract_strided_slice %13 {offsets = [0, 256], sizes = [8, 128], strides = [1, 1]} : vector<8x512xf32> to vector<8x128xf32>
    %27 = math.tanh %26 : vector<8x128xf32>
    %28 = vector.extract_strided_slice %13 {offsets = [0, 384], sizes = [8, 128], strides = [1, 1]} : vector<8x512xf32> to vector<8x128xf32>
    %29 = arith.negf %28 : vector<8x128xf32>
    %30 = math.exp %29 : vector<8x128xf32>
    %cst_18 = arith.constant 1.000000e+00 : f32
    %31 = vector.broadcast %cst_18 : f32 to vector<8x128xf32>
    %32 = arith.addf %31, %30 : vector<8x128xf32>
    %33 = arith.divf %31, %32 : vector<8x128xf32>
    %34 = arith.mulf %25, %8 : vector<8x128xf32>
    %35 = arith.mulf %19, %27 : vector<8x128xf32>
    %36 = arith.addf %34, %35 : vector<8x128xf32>
    %37 = math.tanh %36 : vector<8x128xf32>
    %38 = arith.mulf %33, %37 : vector<8x128xf32>
    %c8 = arith.constant 8 : index
    %c0_19 = arith.constant 0 : index
    %39 = vector.load %arg12[%c8, %c0_19] : memref<64x512xf32, #tpu.memory_space<vmem>>, vector<8x512xf32>
    %40 = arith.truncf %38 : vector<8x128xf32> to vector<8x128xbf16>
    %c0_20 = arith.constant 0 : index
    %c0_21 = arith.constant 0 : index
    %41 = vector.load %arg4[%c0_20, %c0_21] : memref<128x512xbf16, #tpu.memory_space<vmem>>, vector<128x512xbf16>
    %cst_22 = arith.constant dense<0.000000e+00> : vector<8x512xf32>
    %42 = tpu.matmul %40, %41, %cst_22 {dimension_numbers = #tpu.dot_dimension_numbers<[1], [0], [0], [1], [0, 0, 1, 1], [], []>} : vector<8x128xbf16>, vector<128x512xbf16>, vector<8x512xf32> -> vector<8x512xf32>
    %43 = arith.addf %39, %42 : vector<8x512xf32>
    %44 = vector.extract_strided_slice %43 {offsets = [0, 0], sizes = [8, 128], strides = [1, 1]} : vector<8x512xf32> to vector<8x128xf32>
    %45 = arith.negf %44 : vector<8x128xf32>
    %46 = math.exp %45 : vector<8x128xf32>
    %cst_23 = arith.constant 1.000000e+00 : f32
    %47 = vector.broadcast %cst_23 : f32 to vector<8x128xf32>
    %48 = arith.addf %47, %46 : vector<8x128xf32>
    %49 = arith.divf %47, %48 : vector<8x128xf32>
    %50 = vector.extract_strided_slice %43 {offsets = [0, 128], sizes = [8, 128], strides = [1, 1]} : vector<8x512xf32> to vector<8x128xf32>
    %51 = arith.negf %50 : vector<8x128xf32>
    %52 = math.exp %51 : vector<8x128xf32>
    %cst_24 = arith.constant 1.000000e+00 : f32
    %53 = vector.broadcast %cst_24 : f32 to vector<8x128xf32>
    %54 = arith.addf %53, %52 : vector<8x128xf32>
    %55 = arith.divf %53, %54 : vector<8x128xf32>
    %56 = vector.extract_strided_slice %43 {offsets = [0, 256], sizes = [8, 128], strides = [1, 1]} : vector<8x512xf32> to vector<8x128xf32>
    %57 = math.tanh %56 : vector<8x128xf32>
    %58 = vector.extract_strided_slice %43 {offsets = [0, 384], sizes = [8, 128], strides = [1, 1]} : vector<8x512xf32> to vector<8x128xf32>
    %59 = arith.negf %58 : vector<8x128xf32>
    %60 = math.exp %59 : vector<8x128xf32>
    %cst_25 = arith.constant 1.000000e+00 : f32
    %61 = vector.broadcast %cst_25 : f32 to vector<8x128xf32>
    %62 = arith.addf %61, %60 : vector<8x128xf32>
    %63 = arith.divf %61, %62 : vector<8x128xf32>
    %64 = arith.mulf %55, %36 : vector<8x128xf32>
    %65 = arith.mulf %49, %57 : vector<8x128xf32>
    %66 = arith.addf %64, %65 : vector<8x128xf32>
    %67 = math.tanh %66 : vector<8x128xf32>
    %68 = arith.mulf %63, %67 : vector<8x128xf32>
    %c16 = arith.constant 16 : index
    %c0_26 = arith.constant 0 : index
    %69 = vector.load %arg12[%c16, %c0_26] : memref<64x512xf32, #tpu.memory_space<vmem>>, vector<8x512xf32>
    %70 = arith.truncf %68 : vector<8x128xf32> to vector<8x128xbf16>
    %c0_27 = arith.constant 0 : index
    %c0_28 = arith.constant 0 : index
    %71 = vector.load %arg4[%c0_27, %c0_28] : memref<128x512xbf16, #tpu.memory_space<vmem>>, vector<128x512xbf16>
    %cst_29 = arith.constant dense<0.000000e+00> : vector<8x512xf32>
    %72 = tpu.matmul %70, %71, %cst_29 {dimension_numbers = #tpu.dot_dimension_numbers<[1], [0], [0], [1], [0, 0, 1, 1], [], []>} : vector<8x128xbf16>, vector<128x512xbf16>, vector<8x512xf32> -> vector<8x512xf32>
    %73 = arith.addf %69, %72 : vector<8x512xf32>
    %74 = vector.extract_strided_slice %73 {offsets = [0, 0], sizes = [8, 128], strides = [1, 1]} : vector<8x512xf32> to vector<8x128xf32>
    %75 = arith.negf %74 : vector<8x128xf32>
    %76 = math.exp %75 : vector<8x128xf32>
    %cst_30 = arith.constant 1.000000e+00 : f32
    %77 = vector.broadcast %cst_30 : f32 to vector<8x128xf32>
    %78 = arith.addf %77, %76 : vector<8x128xf32>
    %79 = arith.divf %77, %78 : vector<8x128xf32>
    %80 = vector.extract_strided_slice %73 {offsets = [0, 128], sizes = [8, 128], strides = [1, 1]} : vector<8x512xf32> to vector<8x128xf32>
    %81 = arith.negf %80 : vector<8x128xf32>
    %82 = math.exp %81 : vector<8x128xf32>
    %cst_31 = arith.constant 1.000000e+00 : f32
    %83 = vector.broadcast %cst_31 : f32 to vector<8x128xf32>
    %84 = arith.addf %83, %82 : vector<8x128xf32>
    %85 = arith.divf %83, %84 : vector<8x128xf32>
    %86 = vector.extract_strided_slice %73 {offsets = [0, 256], sizes = [8, 128], strides = [1, 1]} : vector<8x512xf32> to vector<8x128xf32>
    %87 = math.tanh %86 : vector<8x128xf32>
    %88 = vector.extract_strided_slice %73 {offsets = [0, 384], sizes = [8, 128], strides = [1, 1]} : vector<8x512xf32> to vector<8x128xf32>
    %89 = arith.negf %88 : vector<8x128xf32>
    %90 = math.exp %89 : vector<8x128xf32>
    %cst_32 = arith.constant 1.000000e+00 : f32
    %91 = vector.broadcast %cst_32 : f32 to vector<8x128xf32>
    %92 = arith.addf %91, %90 : vector<8x128xf32>
    %93 = arith.divf %91, %92 : vector<8x128xf32>
    %94 = arith.mulf %85, %66 : vector<8x128xf32>
    %95 = arith.mulf %79, %87 : vector<8x128xf32>
    %96 = arith.addf %94, %95 : vector<8x128xf32>
    %97 = math.tanh %96 : vector<8x128xf32>
    %98 = arith.mulf %93, %97 : vector<8x128xf32>
    %c24 = arith.constant 24 : index
    %c0_33 = arith.constant 0 : index
    %99 = vector.load %arg12[%c24, %c0_33] : memref<64x512xf32, #tpu.memory_space<vmem>>, vector<8x512xf32>
    %100 = arith.truncf %98 : vector<8x128xf32> to vector<8x128xbf16>
    %c0_34 = arith.constant 0 : index
    %c0_35 = arith.constant 0 : index
    %101 = vector.load %arg4[%c0_34, %c0_35] : memref<128x512xbf16, #tpu.memory_space<vmem>>, vector<128x512xbf16>
    %cst_36 = arith.constant dense<0.000000e+00> : vector<8x512xf32>
    %102 = tpu.matmul %100, %101, %cst_36 {dimension_numbers = #tpu.dot_dimension_numbers<[1], [0], [0], [1], [0, 0, 1, 1], [], []>} : vector<8x128xbf16>, vector<128x512xbf16>, vector<8x512xf32> -> vector<8x512xf32>
    %103 = arith.addf %99, %102 : vector<8x512xf32>
    %104 = vector.extract_strided_slice %103 {offsets = [0, 0], sizes = [8, 128], strides = [1, 1]} : vector<8x512xf32> to vector<8x128xf32>
    %105 = arith.negf %104 : vector<8x128xf32>
    %106 = math.exp %105 : vector<8x128xf32>
    %cst_37 = arith.constant 1.000000e+00 : f32
    %107 = vector.broadcast %cst_37 : f32 to vector<8x128xf32>
    %108 = arith.addf %107, %106 : vector<8x128xf32>
    %109 = arith.divf %107, %108 : vector<8x128xf32>
    %110 = vector.extract_strided_slice %103 {offsets = [0, 128], sizes = [8, 128], strides = [1, 1]} : vector<8x512xf32> to vector<8x128xf32>
    %111 = arith.negf %110 : vector<8x128xf32>
    %112 = math.exp %111 : vector<8x128xf32>
    %cst_38 = arith.constant 1.000000e+00 : f32
    %113 = vector.broadcast %cst_38 : f32 to vector<8x128xf32>
    %114 = arith.addf %113, %112 : vector<8x128xf32>
    %115 = arith.divf %113, %114 : vector<8x128xf32>
    %116 = vector.extract_strided_slice %103 {offsets = [0, 256], sizes = [8, 128], strides = [1, 1]} : vector<8x512xf32> to vector<8x128xf32>
    %117 = math.tanh %116 : vector<8x128xf32>
    %118 = vector.extract_strided_slice %103 {offsets = [0, 384], sizes = [8, 128], strides = [1, 1]} : vector<8x512xf32> to vector<8x128xf32>
    %119 = arith.negf %118 : vector<8x128xf32>
    %120 = math.exp %119 : vector<8x128xf32>
    %cst_39 = arith.constant 1.000000e+00 : f32
    %121 = vector.broadcast %cst_39 : f32 to vector<8x128xf32>
    %122 = arith.addf %121, %120 : vector<8x128xf32>
    %123 = arith.divf %121, %122 : vector<8x128xf32>
    %124 = arith.mulf %115, %96 : vector<8x128xf32>
    %125 = arith.mulf %109, %117 : vector<8x128xf32>
    %126 = arith.addf %124, %125 : vector<8x128xf32>
    %127 = math.tanh %126 : vector<8x128xf32>
    %128 = arith.mulf %123, %127 : vector<8x128xf32>
    %c32 = arith.constant 32 : index
    %c0_40 = arith.constant 0 : index
    %129 = vector.load %arg12[%c32, %c0_40] : memref<64x512xf32, #tpu.memory_space<vmem>>, vector<8x512xf32>
    %130 = arith.truncf %128 : vector<8x128xf32> to vector<8x128xbf16>
    %c0_41 = arith.constant 0 : index
    %c0_42 = arith.constant 0 : index
    %131 = vector.load %arg4[%c0_41, %c0_42] : memref<128x512xbf16, #tpu.memory_space<vmem>>, vector<128x512xbf16>
    %cst_43 = arith.constant dense<0.000000e+00> : vector<8x512xf32>
    %132 = tpu.matmul %130, %131, %cst_43 {dimension_numbers = #tpu.dot_dimension_numbers<[1], [0], [0], [1], [0, 0, 1, 1], [], []>} : vector<8x128xbf16>, vector<128x512xbf16>, vector<8x512xf32> -> vector<8x512xf32>
    %133 = arith.addf %129, %132 : vector<8x512xf32>
    %134 = vector.extract_strided_slice %133 {offsets = [0, 0], sizes = [8, 128], strides = [1, 1]} : vector<8x512xf32> to vector<8x128xf32>
    %135 = arith.negf %134 : vector<8x128xf32>
    %136 = math.exp %135 : vector<8x128xf32>
    %cst_44 = arith.constant 1.000000e+00 : f32
    %137 = vector.broadcast %cst_44 : f32 to vector<8x128xf32>
    %138 = arith.addf %137, %136 : vector<8x128xf32>
    %139 = arith.divf %137, %138 : vector<8x128xf32>
    %140 = vector.extract_strided_slice %133 {offsets = [0, 128], sizes = [8, 128], strides = [1, 1]} : vector<8x512xf32> to vector<8x128xf32>
    %141 = arith.negf %140 : vector<8x128xf32>
    %142 = math.exp %141 : vector<8x128xf32>
    %cst_45 = arith.constant 1.000000e+00 : f32
    %143 = vector.broadcast %cst_45 : f32 to vector<8x128xf32>
    %144 = arith.addf %143, %142 : vector<8x128xf32>
    %145 = arith.divf %143, %144 : vector<8x128xf32>
    %146 = vector.extract_strided_slice %133 {offsets = [0, 256], sizes = [8, 128], strides = [1, 1]} : vector<8x512xf32> to vector<8x128xf32>
    %147 = math.tanh %146 : vector<8x128xf32>
    %148 = vector.extract_strided_slice %133 {offsets = [0, 384], sizes = [8, 128], strides = [1, 1]} : vector<8x512xf32> to vector<8x128xf32>
    %149 = arith.negf %148 : vector<8x128xf32>
    %150 = math.exp %149 : vector<8x128xf32>
    %cst_46 = arith.constant 1.000000e+00 : f32
    %151 = vector.broadcast %cst_46 : f32 to vector<8x128xf32>
    %152 = arith.addf %151, %150 : vector<8x128xf32>
    %153 = arith.divf %151, %152 : vector<8x128xf32>
    %154 = arith.mulf %145, %126 : vector<8x128xf32>
    %155 = arith.mulf %139, %147 : vector<8x128xf32>
    %156 = arith.addf %154, %155 : vector<8x128xf32>
    %157 = math.tanh %156 : vector<8x128xf32>
    %158 = arith.mulf %153, %157 : vector<8x128xf32>
    %c40 = arith.constant 40 : index
    %c0_47 = arith.constant 0 : index
    %159 = vector.load %arg12[%c40, %c0_47] : memref<64x512xf32, #tpu.memory_space<vmem>>, vector<8x512xf32>
    %160 = arith.truncf %158 : vector<8x128xf32> to vector<8x128xbf16>
    %c0_48 = arith.constant 0 : index
    %c0_49 = arith.constant 0 : index
    %161 = vector.load %arg4[%c0_48, %c0_49] : memref<128x512xbf16, #tpu.memory_space<vmem>>, vector<128x512xbf16>
    %cst_50 = arith.constant dense<0.000000e+00> : vector<8x512xf32>
    %162 = tpu.matmul %160, %161, %cst_50 {dimension_numbers = #tpu.dot_dimension_numbers<[1], [0], [0], [1], [0, 0, 1, 1], [], []>} : vector<8x128xbf16>, vector<128x512xbf16>, vector<8x512xf32> -> vector<8x512xf32>
    %163 = arith.addf %159, %162 : vector<8x512xf32>
    %164 = vector.extract_strided_slice %163 {offsets = [0, 0], sizes = [8, 128], strides = [1, 1]} : vector<8x512xf32> to vector<8x128xf32>
    %165 = arith.negf %164 : vector<8x128xf32>
    %166 = math.exp %165 : vector<8x128xf32>
    %cst_51 = arith.constant 1.000000e+00 : f32
    %167 = vector.broadcast %cst_51 : f32 to vector<8x128xf32>
    %168 = arith.addf %167, %166 : vector<8x128xf32>
    %169 = arith.divf %167, %168 : vector<8x128xf32>
    %170 = vector.extract_strided_slice %163 {offsets = [0, 128], sizes = [8, 128], strides = [1, 1]} : vector<8x512xf32> to vector<8x128xf32>
    %171 = arith.negf %170 : vector<8x128xf32>
    %172 = math.exp %171 : vector<8x128xf32>
    %cst_52 = arith.constant 1.000000e+00 : f32
    %173 = vector.broadcast %cst_52 : f32 to vector<8x128xf32>
    %174 = arith.addf %173, %172 : vector<8x128xf32>
    %175 = arith.divf %173, %174 : vector<8x128xf32>
    %176 = vector.extract_strided_slice %163 {offsets = [0, 256], sizes = [8, 128], strides = [1, 1]} : vector<8x512xf32> to vector<8x128xf32>
    %177 = math.tanh %176 : vector<8x128xf32>
    %178 = vector.extract_strided_slice %163 {offsets = [0, 384], sizes = [8, 128], strides = [1, 1]} : vector<8x512xf32> to vector<8x128xf32>
    %179 = arith.negf %178 : vector<8x128xf32>
    %180 = math.exp %179 : vector<8x128xf32>
    %cst_53 = arith.constant 1.000000e+00 : f32
    %181 = vector.broadcast %cst_53 : f32 to vector<8x128xf32>
    %182 = arith.addf %181, %180 : vector<8x128xf32>
    %183 = arith.divf %181, %182 : vector<8x128xf32>
    %184 = arith.mulf %175, %156 : vector<8x128xf32>
    %185 = arith.mulf %169, %177 : vector<8x128xf32>
    %186 = arith.addf %184, %185 : vector<8x128xf32>
    %187 = math.tanh %186 : vector<8x128xf32>
    %188 = arith.mulf %183, %187 : vector<8x128xf32>
    %c48 = arith.constant 48 : index
    %c0_54 = arith.constant 0 : index
    %189 = vector.load %arg12[%c48, %c0_54] : memref<64x512xf32, #tpu.memory_space<vmem>>, vector<8x512xf32>
    %190 = arith.truncf %188 : vector<8x128xf32> to vector<8x128xbf16>
    %c0_55 = arith.constant 0 : index
    %c0_56 = arith.constant 0 : index
    %191 = vector.load %arg4[%c0_55, %c0_56] : memref<128x512xbf16, #tpu.memory_space<vmem>>, vector<128x512xbf16>
    %cst_57 = arith.constant dense<0.000000e+00> : vector<8x512xf32>
    %192 = tpu.matmul %190, %191, %cst_57 {dimension_numbers = #tpu.dot_dimension_numbers<[1], [0], [0], [1], [0, 0, 1, 1], [], []>} : vector<8x128xbf16>, vector<128x512xbf16>, vector<8x512xf32> -> vector<8x512xf32>
    %193 = arith.addf %189, %192 : vector<8x512xf32>
    %194 = vector.extract_strided_slice %193 {offsets = [0, 0], sizes = [8, 128], strides = [1, 1]} : vector<8x512xf32> to vector<8x128xf32>
    %195 = arith.negf %194 : vector<8x128xf32>
    %196 = math.exp %195 : vector<8x128xf32>
    %cst_58 = arith.constant 1.000000e+00 : f32
    %197 = vector.broadcast %cst_58 : f32 to vector<8x128xf32>
    %198 = arith.addf %197, %196 : vector<8x128xf32>
    %199 = arith.divf %197, %198 : vector<8x128xf32>
    %200 = vector.extract_strided_slice %193 {offsets = [0, 128], sizes = [8, 128], strides = [1, 1]} : vector<8x512xf32> to vector<8x128xf32>
    %201 = arith.negf %200 : vector<8x128xf32>
    %202 = math.exp %201 : vector<8x128xf32>
    %cst_59 = arith.constant 1.000000e+00 : f32
    %203 = vector.broadcast %cst_59 : f32 to vector<8x128xf32>
    %204 = arith.addf %203, %202 : vector<8x128xf32>
    %205 = arith.divf %203, %204 : vector<8x128xf32>
    %206 = vector.extract_strided_slice %193 {offsets = [0, 256], sizes = [8, 128], strides = [1, 1]} : vector<8x512xf32> to vector<8x128xf32>
    %207 = math.tanh %206 : vector<8x128xf32>
    %208 = vector.extract_strided_slice %193 {offsets = [0, 384], sizes = [8, 128], strides = [1, 1]} : vector<8x512xf32> to vector<8x128xf32>
    %209 = arith.negf %208 : vector<8x128xf32>
    %210 = math.exp %209 : vector<8x128xf32>
    %cst_60 = arith.constant 1.000000e+00 : f32
    %211 = vector.broadcast %cst_60 : f32 to vector<8x128xf32>
    %212 = arith.addf %211, %210 : vector<8x128xf32>
    %213 = arith.divf %211, %212 : vector<8x128xf32>
    %214 = arith.mulf %205, %186 : vector<8x128xf32>
    %215 = arith.mulf %199, %207 : vector<8x128xf32>
    %216 = arith.addf %214, %215 : vector<8x128xf32>
    %217 = math.tanh %216 : vector<8x128xf32>
    %218 = arith.mulf %213, %217 : vector<8x128xf32>
    %c56 = arith.constant 56 : index
    %c0_61 = arith.constant 0 : index
    %219 = vector.load %arg12[%c56, %c0_61] : memref<64x512xf32, #tpu.memory_space<vmem>>, vector<8x512xf32>
    %220 = arith.truncf %218 : vector<8x128xf32> to vector<8x128xbf16>
    %c0_62 = arith.constant 0 : index
    %c0_63 = arith.constant 0 : index
    %221 = vector.load %arg4[%c0_62, %c0_63] : memref<128x512xbf16, #tpu.memory_space<vmem>>, vector<128x512xbf16>
    %cst_64 = arith.constant dense<0.000000e+00> : vector<8x512xf32>
    %222 = tpu.matmul %220, %221, %cst_64 {dimension_numbers = #tpu.dot_dimension_numbers<[1], [0], [0], [1], [0, 0, 1, 1], [], []>} : vector<8x128xbf16>, vector<128x512xbf16>, vector<8x512xf32> -> vector<8x512xf32>
    %223 = arith.addf %219, %222 : vector<8x512xf32>
    %224 = vector.extract_strided_slice %223 {offsets = [0, 0], sizes = [8, 128], strides = [1, 1]} : vector<8x512xf32> to vector<8x128xf32>
    %225 = arith.negf %224 : vector<8x128xf32>
    %226 = math.exp %225 : vector<8x128xf32>
    %cst_65 = arith.constant 1.000000e+00 : f32
    %227 = vector.broadcast %cst_65 : f32 to vector<8x128xf32>
    %228 = arith.addf %227, %226 : vector<8x128xf32>
    %229 = arith.divf %227, %228 : vector<8x128xf32>
    %230 = vector.extract_strided_slice %223 {offsets = [0, 128], sizes = [8, 128], strides = [1, 1]} : vector<8x512xf32> to vector<8x128xf32>
    %231 = arith.negf %230 : vector<8x128xf32>
    %232 = math.exp %231 : vector<8x128xf32>
    %cst_66 = arith.constant 1.000000e+00 : f32
    %233 = vector.broadcast %cst_66 : f32 to vector<8x128xf32>
    %234 = arith.addf %233, %232 : vector<8x128xf32>
    %235 = arith.divf %233, %234 : vector<8x128xf32>
    %236 = vector.extract_strided_slice %223 {offsets = [0, 256], sizes = [8, 128], strides = [1, 1]} : vector<8x512xf32> to vector<8x128xf32>
    %237 = math.tanh %236 : vector<8x128xf32>
    %238 = vector.extract_strided_slice %223 {offsets = [0, 384], sizes = [8, 128], strides = [1, 1]} : vector<8x512xf32> to vector<8x128xf32>
    %239 = arith.negf %238 : vector<8x128xf32>
    %240 = math.exp %239 : vector<8x128xf32>
    %cst_67 = arith.constant 1.000000e+00 : f32
    %241 = vector.broadcast %cst_67 : f32 to vector<8x128xf32>
    %242 = arith.addf %241, %240 : vector<8x128xf32>
    %243 = arith.divf %241, %242 : vector<8x128xf32>
    %244 = arith.mulf %235, %216 : vector<8x128xf32>
    %245 = arith.mulf %229, %237 : vector<8x128xf32>
    %246 = arith.addf %244, %245 : vector<8x128xf32>
    %247 = math.tanh %246 : vector<8x128xf32>
    %248 = arith.mulf %243, %247 : vector<8x128xf32>
    %c0_68 = arith.constant 0 : index
    %c0_69 = arith.constant 0 : index
    %249 = vector.load %arg10[%c0_68, %c0_69] : memref<16x128xf32, #tpu.memory_space<vmem>>, vector<8x128xf32>
    tpu.vector_store %arg10[%c0_68, %c0_69], %248 {strides = array<i32>} : memref<16x128xf32, #tpu.memory_space<vmem>>, vector<8x128xf32>,
    %c0_70 = arith.constant 0 : index
    %c0_71 = arith.constant 0 : index
    %250 = vector.load %arg11[%c0_70, %c0_71] : memref<16x128xf32, #tpu.memory_space<vmem>>, vector<8x128xf32>
    tpu.vector_store %arg11[%c0_70, %c0_71], %246 {strides = array<i32>} : memref<16x128xf32, #tpu.memory_space<vmem>>, vector<8x128xf32>,
    %251 = tpu.concatenate %38, %68, %98, %128, %158, %188, %218, %248 in 0 : vector<8x128xf32>, vector<8x128xf32>, vector<8x128xf32>, vector<8x128xf32>, vector<8x128xf32>, vector<8x128xf32>, vector<8x128xf32>, vector<8x128xf32> -> vector<64x128xf32>
    %252 = arith.truncf %251 : vector<64x128xf32> to vector<64x128xbf16>
    %c0_72 = arith.constant 0 : index
    %c0_73 = arith.constant 0 : index
    %253 = vector.load %arg6[%c0_72, %c0_73] : memref<128x512xbf16, #tpu.memory_space<vmem>>, vector<128x512xbf16>
    %cst_74 = arith.constant dense<0.000000e+00> : vector<64x512xf32>
    %254 = tpu.matmul %252, %253, %cst_74 {dimension_numbers = #tpu.dot_dimension_numbers<[1], [0], [0], [1], [0, 0, 1, 1], [], []>} : vector<64x128xbf16>, vector<128x512xbf16>, vector<64x512xf32> -> vector<64x512xf32>
    %c0_75 = arith.constant 0 : index
    %c0_76 = arith.constant 0 : index
    %255 = vector.load %arg8[%c0_75, %c0_76] : memref<1x512xf32, #tpu.memory_space<vmem>>, vector<1x512xf32>
    %256 = vector.broadcast %255 : vector<1x512xf32> to vector<64x512xf32>
    %257 = arith.addf %254, %256 : vector<64x512xf32>
    %c0_77 = arith.constant 0 : index
    %c0_78 = arith.constant 0 : index
    %258 = vector.load %arg12[%c0_77, %c0_78] : memref<64x512xf32, #tpu.memory_space<vmem>>, vector<64x512xf32>
    tpu.vector_store %arg12[%c0_77, %c0_78], %257 {strides = array<i32>} : memref<64x512xf32, #tpu.memory_space<vmem>>, vector<64x512xf32>,
    %c8_79 = arith.constant 8 : index
    %c0_80 = arith.constant 0 : index
    %259 = vector.load %arg1[%c8_79, %c0_80] : memref<16x128xf32, #tpu.memory_space<vmem>>, vector<8x128xf32>
    %c8_81 = arith.constant 8 : index
    %c0_82 = arith.constant 0 : index
    %260 = vector.load %arg2[%c8_81, %c0_82] : memref<16x128xf32, #tpu.memory_space<vmem>>, vector<8x128xf32>
    %c0_83 = arith.constant 0 : index
    %c0_84 = arith.constant 0 : index
    %261 = vector.load %arg12[%c0_83, %c0_84] : memref<64x512xf32, #tpu.memory_space<vmem>>, vector<8x512xf32>
    %262 = arith.truncf %259 : vector<8x128xf32> to vector<8x128xbf16>
    %c0_85 = arith.constant 0 : index
    %c0_86 = arith.constant 0 : index
    %263 = vector.load %arg7[%c0_85, %c0_86] : memref<128x512xbf16, #tpu.memory_space<vmem>>, vector<128x512xbf16>
    %cst_87 = arith.constant dense<0.000000e+00> : vector<8x512xf32>
    %264 = tpu.matmul %262, %263, %cst_87 {dimension_numbers = #tpu.dot_dimension_numbers<[1], [0], [0], [1], [0, 0, 1, 1], [], []>} : vector<8x128xbf16>, vector<128x512xbf16>, vector<8x512xf32> -> vector<8x512xf32>
    %265 = arith.addf %261, %264 : vector<8x512xf32>
    %266 = vector.extract_strided_slice %265 {offsets = [0, 0], sizes = [8, 128], strides = [1, 1]} : vector<8x512xf32> to vector<8x128xf32>
    %267 = arith.negf %266 : vector<8x128xf32>
    %268 = math.exp %267 : vector<8x128xf32>
    %cst_88 = arith.constant 1.000000e+00 : f32
    %269 = vector.broadcast %cst_88 : f32 to vector<8x128xf32>
    %270 = arith.addf %269, %268 : vector<8x128xf32>
    %271 = arith.divf %269, %270 : vector<8x128xf32>
    %272 = vector.extract_strided_slice %265 {offsets = [0, 128], sizes = [8, 128], strides = [1, 1]} : vector<8x512xf32> to vector<8x128xf32>
    %273 = arith.negf %272 : vector<8x128xf32>
    %274 = math.exp %273 : vector<8x128xf32>
    %cst_89 = arith.constant 1.000000e+00 : f32
    %275 = vector.broadcast %cst_89 : f32 to vector<8x128xf32>
    %276 = arith.addf %275, %274 : vector<8x128xf32>
    %277 = arith.divf %275, %276 : vector<8x128xf32>
    %278 = vector.extract_strided_slice %265 {offsets = [0, 256], sizes = [8, 128], strides = [1, 1]} : vector<8x512xf32> to vector<8x128xf32>
    %279 = math.tanh %278 : vector<8x128xf32>
    %280 = vector.extract_strided_slice %265 {offsets = [0, 384], sizes = [8, 128], strides = [1, 1]} : vector<8x512xf32> to vector<8x128xf32>
    %281 = arith.negf %280 : vector<8x128xf32>
    %282 = math.exp %281 : vector<8x128xf32>
    %cst_90 = arith.constant 1.000000e+00 : f32
    %283 = vector.broadcast %cst_90 : f32 to vector<8x128xf32>
    %284 = arith.addf %283, %282 : vector<8x128xf32>
    %285 = arith.divf %283, %284 : vector<8x128xf32>
    %286 = arith.mulf %277, %260 : vector<8x128xf32>
    %287 = arith.mulf %271, %279 : vector<8x128xf32>
    %288 = arith.addf %286, %287 : vector<8x128xf32>
    %289 = math.tanh %288 : vector<8x128xf32>
    %290 = arith.mulf %285, %289 : vector<8x128xf32>
    %c8_91 = arith.constant 8 : index
    %c0_92 = arith.constant 0 : index
    %291 = vector.load %arg12[%c8_91, %c0_92] : memref<64x512xf32, #tpu.memory_space<vmem>>, vector<8x512xf32>
    %292 = arith.truncf %290 : vector<8x128xf32> to vector<8x128xbf16>
    %c0_93 = arith.constant 0 : index
    %c0_94 = arith.constant 0 : index
    %293 = vector.load %arg7[%c0_93, %c0_94] : memref<128x512xbf16, #tpu.memory_space<vmem>>, vector<128x512xbf16>
    %cst_95 = arith.constant dense<0.000000e+00> : vector<8x512xf32>
    %294 = tpu.matmul %292, %293, %cst_95 {dimension_numbers = #tpu.dot_dimension_numbers<[1], [0], [0], [1], [0, 0, 1, 1], [], []>} : vector<8x128xbf16>, vector<128x512xbf16>, vector<8x512xf32> -> vector<8x512xf32>
    %295 = arith.addf %291, %294 : vector<8x512xf32>
    %296 = vector.extract_strided_slice %295 {offsets = [0, 0], sizes = [8, 128], strides = [1, 1]} : vector<8x512xf32> to vector<8x128xf32>
    %297 = arith.negf %296 : vector<8x128xf32>
    %298 = math.exp %297 : vector<8x128xf32>
    %cst_96 = arith.constant 1.000000e+00 : f32
    %299 = vector.broadcast %cst_96 : f32 to vector<8x128xf32>
    %300 = arith.addf %299, %298 : vector<8x128xf32>
    %301 = arith.divf %299, %300 : vector<8x128xf32>
    %302 = vector.extract_strided_slice %295 {offsets = [0, 128], sizes = [8, 128], strides = [1, 1]} : vector<8x512xf32> to vector<8x128xf32>
    %303 = arith.negf %302 : vector<8x128xf32>
    %304 = math.exp %303 : vector<8x128xf32>
    %cst_97 = arith.constant 1.000000e+00 : f32
    %305 = vector.broadcast %cst_97 : f32 to vector<8x128xf32>
    %306 = arith.addf %305, %304 : vector<8x128xf32>
    %307 = arith.divf %305, %306 : vector<8x128xf32>
    %308 = vector.extract_strided_slice %295 {offsets = [0, 256], sizes = [8, 128], strides = [1, 1]} : vector<8x512xf32> to vector<8x128xf32>
    %309 = math.tanh %308 : vector<8x128xf32>
    %310 = vector.extract_strided_slice %295 {offsets = [0, 384], sizes = [8, 128], strides = [1, 1]} : vector<8x512xf32> to vector<8x128xf32>
    %311 = arith.negf %310 : vector<8x128xf32>
    %312 = math.exp %311 : vector<8x128xf32>
    %cst_98 = arith.constant 1.000000e+00 : f32
    %313 = vector.broadcast %cst_98 : f32 to vector<8x128xf32>
    %314 = arith.addf %313, %312 : vector<8x128xf32>
    %315 = arith.divf %313, %314 : vector<8x128xf32>
    %316 = arith.mulf %307, %288 : vector<8x128xf32>
    %317 = arith.mulf %301, %309 : vector<8x128xf32>
    %318 = arith.addf %316, %317 : vector<8x128xf32>
    %319 = math.tanh %318 : vector<8x128xf32>
    %320 = arith.mulf %315, %319 : vector<8x128xf32>
    %c16_99 = arith.constant 16 : index
    %c0_100 = arith.constant 0 : index
    %321 = vector.load %arg12[%c16_99, %c0_100] : memref<64x512xf32, #tpu.memory_space<vmem>>, vector<8x512xf32>
    %322 = arith.truncf %320 : vector<8x128xf32> to vector<8x128xbf16>
    %c0_101 = arith.constant 0 : index
    %c0_102 = arith.constant 0 : index
    %323 = vector.load %arg7[%c0_101, %c0_102] : memref<128x512xbf16, #tpu.memory_space<vmem>>, vector<128x512xbf16>
    %cst_103 = arith.constant dense<0.000000e+00> : vector<8x512xf32>
    %324 = tpu.matmul %322, %323, %cst_103 {dimension_numbers = #tpu.dot_dimension_numbers<[1], [0], [0], [1], [0, 0, 1, 1], [], []>} : vector<8x128xbf16>, vector<128x512xbf16>, vector<8x512xf32> -> vector<8x512xf32>
    %325 = arith.addf %321, %324 : vector<8x512xf32>
    %326 = vector.extract_strided_slice %325 {offsets = [0, 0], sizes = [8, 128], strides = [1, 1]} : vector<8x512xf32> to vector<8x128xf32>
    %327 = arith.negf %326 : vector<8x128xf32>
    %328 = math.exp %327 : vector<8x128xf32>
    %cst_104 = arith.constant 1.000000e+00 : f32
    %329 = vector.broadcast %cst_104 : f32 to vector<8x128xf32>
    %330 = arith.addf %329, %328 : vector<8x128xf32>
    %331 = arith.divf %329, %330 : vector<8x128xf32>
    %332 = vector.extract_strided_slice %325 {offsets = [0, 128], sizes = [8, 128], strides = [1, 1]} : vector<8x512xf32> to vector<8x128xf32>
    %333 = arith.negf %332 : vector<8x128xf32>
    %334 = math.exp %333 : vector<8x128xf32>
    %cst_105 = arith.constant 1.000000e+00 : f32
    %335 = vector.broadcast %cst_105 : f32 to vector<8x128xf32>
    %336 = arith.addf %335, %334 : vector<8x128xf32>
    %337 = arith.divf %335, %336 : vector<8x128xf32>
    %338 = vector.extract_strided_slice %325 {offsets = [0, 256], sizes = [8, 128], strides = [1, 1]} : vector<8x512xf32> to vector<8x128xf32>
    %339 = math.tanh %338 : vector<8x128xf32>
    %340 = vector.extract_strided_slice %325 {offsets = [0, 384], sizes = [8, 128], strides = [1, 1]} : vector<8x512xf32> to vector<8x128xf32>
    %341 = arith.negf %340 : vector<8x128xf32>
    %342 = math.exp %341 : vector<8x128xf32>
    %cst_106 = arith.constant 1.000000e+00 : f32
    %343 = vector.broadcast %cst_106 : f32 to vector<8x128xf32>
    %344 = arith.addf %343, %342 : vector<8x128xf32>
    %345 = arith.divf %343, %344 : vector<8x128xf32>
    %346 = arith.mulf %337, %318 : vector<8x128xf32>
    %347 = arith.mulf %331, %339 : vector<8x128xf32>
    %348 = arith.addf %346, %347 : vector<8x128xf32>
    %349 = math.tanh %348 : vector<8x128xf32>
    %350 = arith.mulf %345, %349 : vector<8x128xf32>
    %c24_107 = arith.constant 24 : index
    %c0_108 = arith.constant 0 : index
    %351 = vector.load %arg12[%c24_107, %c0_108] : memref<64x512xf32, #tpu.memory_space<vmem>>, vector<8x512xf32>
    %352 = arith.truncf %350 : vector<8x128xf32> to vector<8x128xbf16>
    %c0_109 = arith.constant 0 : index
    %c0_110 = arith.constant 0 : index
    %353 = vector.load %arg7[%c0_109, %c0_110] : memref<128x512xbf16, #tpu.memory_space<vmem>>, vector<128x512xbf16>
    %cst_111 = arith.constant dense<0.000000e+00> : vector<8x512xf32>
    %354 = tpu.matmul %352, %353, %cst_111 {dimension_numbers = #tpu.dot_dimension_numbers<[1], [0], [0], [1], [0, 0, 1, 1], [], []>} : vector<8x128xbf16>, vector<128x512xbf16>, vector<8x512xf32> -> vector<8x512xf32>
    %355 = arith.addf %351, %354 : vector<8x512xf32>
    %356 = vector.extract_strided_slice %355 {offsets = [0, 0], sizes = [8, 128], strides = [1, 1]} : vector<8x512xf32> to vector<8x128xf32>
    %357 = arith.negf %356 : vector<8x128xf32>
    %358 = math.exp %357 : vector<8x128xf32>
    %cst_112 = arith.constant 1.000000e+00 : f32
    %359 = vector.broadcast %cst_112 : f32 to vector<8x128xf32>
    %360 = arith.addf %359, %358 : vector<8x128xf32>
    %361 = arith.divf %359, %360 : vector<8x128xf32>
    %362 = vector.extract_strided_slice %355 {offsets = [0, 128], sizes = [8, 128], strides = [1, 1]} : vector<8x512xf32> to vector<8x128xf32>
    %363 = arith.negf %362 : vector<8x128xf32>
    %364 = math.exp %363 : vector<8x128xf32>
    %cst_113 = arith.constant 1.000000e+00 : f32
    %365 = vector.broadcast %cst_113 : f32 to vector<8x128xf32>
    %366 = arith.addf %365, %364 : vector<8x128xf32>
    %367 = arith.divf %365, %366 : vector<8x128xf32>
    %368 = vector.extract_strided_slice %355 {offsets = [0, 256], sizes = [8, 128], strides = [1, 1]} : vector<8x512xf32> to vector<8x128xf32>
    %369 = math.tanh %368 : vector<8x128xf32>
    %370 = vector.extract_strided_slice %355 {offsets = [0, 384], sizes = [8, 128], strides = [1, 1]} : vector<8x512xf32> to vector<8x128xf32>
    %371 = arith.negf %370 : vector<8x128xf32>
    %372 = math.exp %371 : vector<8x128xf32>
    %cst_114 = arith.constant 1.000000e+00 : f32
    %373 = vector.broadcast %cst_114 : f32 to vector<8x128xf32>
    %374 = arith.addf %373, %372 : vector<8x128xf32>
    %375 = arith.divf %373, %374 : vector<8x128xf32>
    %376 = arith.mulf %367, %348 : vector<8x128xf32>
    %377 = arith.mulf %361, %369 : vector<8x128xf32>
    %378 = arith.addf %376, %377 : vector<8x128xf32>
    %379 = math.tanh %378 : vector<8x128xf32>
    %380 = arith.mulf %375, %379 : vector<8x128xf32>
    %c32_115 = arith.constant 32 : index
    %c0_116 = arith.constant 0 : index
    %381 = vector.load %arg12[%c32_115, %c0_116] : memref<64x512xf32, #tpu.memory_space<vmem>>, vector<8x512xf32>
    %382 = arith.truncf %380 : vector<8x128xf32> to vector<8x128xbf16>
    %c0_117 = arith.constant 0 : index
    %c0_118 = arith.constant 0 : index
    %383 = vector.load %arg7[%c0_117, %c0_118] : memref<128x512xbf16, #tpu.memory_space<vmem>>, vector<128x512xbf16>
    %cst_119 = arith.constant dense<0.000000e+00> : vector<8x512xf32>
    %384 = tpu.matmul %382, %383, %cst_119 {dimension_numbers = #tpu.dot_dimension_numbers<[1], [0], [0], [1], [0, 0, 1, 1], [], []>} : vector<8x128xbf16>, vector<128x512xbf16>, vector<8x512xf32> -> vector<8x512xf32>
    %385 = arith.addf %381, %384 : vector<8x512xf32>
    %386 = vector.extract_strided_slice %385 {offsets = [0, 0], sizes = [8, 128], strides = [1, 1]} : vector<8x512xf32> to vector<8x128xf32>
    %387 = arith.negf %386 : vector<8x128xf32>
    %388 = math.exp %387 : vector<8x128xf32>
    %cst_120 = arith.constant 1.000000e+00 : f32
    %389 = vector.broadcast %cst_120 : f32 to vector<8x128xf32>
    %390 = arith.addf %389, %388 : vector<8x128xf32>
    %391 = arith.divf %389, %390 : vector<8x128xf32>
    %392 = vector.extract_strided_slice %385 {offsets = [0, 128], sizes = [8, 128], strides = [1, 1]} : vector<8x512xf32> to vector<8x128xf32>
    %393 = arith.negf %392 : vector<8x128xf32>
    %394 = math.exp %393 : vector<8x128xf32>
    %cst_121 = arith.constant 1.000000e+00 : f32
    %395 = vector.broadcast %cst_121 : f32 to vector<8x128xf32>
    %396 = arith.addf %395, %394 : vector<8x128xf32>
    %397 = arith.divf %395, %396 : vector<8x128xf32>
    %398 = vector.extract_strided_slice %385 {offsets = [0, 256], sizes = [8, 128], strides = [1, 1]} : vector<8x512xf32> to vector<8x128xf32>
    %399 = math.tanh %398 : vector<8x128xf32>
    %400 = vector.extract_strided_slice %385 {offsets = [0, 384], sizes = [8, 128], strides = [1, 1]} : vector<8x512xf32> to vector<8x128xf32>
    %401 = arith.negf %400 : vector<8x128xf32>
    %402 = math.exp %401 : vector<8x128xf32>
    %cst_122 = arith.constant 1.000000e+00 : f32
    %403 = vector.broadcast %cst_122 : f32 to vector<8x128xf32>
    %404 = arith.addf %403, %402 : vector<8x128xf32>
    %405 = arith.divf %403, %404 : vector<8x128xf32>
    %406 = arith.mulf %397, %378 : vector<8x128xf32>
    %407 = arith.mulf %391, %399 : vector<8x128xf32>
    %408 = arith.addf %406, %407 : vector<8x128xf32>
    %409 = math.tanh %408 : vector<8x128xf32>
    %410 = arith.mulf %405, %409 : vector<8x128xf32>
    %c40_123 = arith.constant 40 : index
    %c0_124 = arith.constant 0 : index
    %411 = vector.load %arg12[%c40_123, %c0_124] : memref<64x512xf32, #tpu.memory_space<vmem>>, vector<8x512xf32>
    %412 = arith.truncf %410 : vector<8x128xf32> to vector<8x128xbf16>
    %c0_125 = arith.constant 0 : index
    %c0_126 = arith.constant 0 : index
    %413 = vector.load %arg7[%c0_125, %c0_126] : memref<128x512xbf16, #tpu.memory_space<vmem>>, vector<128x512xbf16>
    %cst_127 = arith.constant dense<0.000000e+00> : vector<8x512xf32>
    %414 = tpu.matmul %412, %413, %cst_127 {dimension_numbers = #tpu.dot_dimension_numbers<[1], [0], [0], [1], [0, 0, 1, 1], [], []>} : vector<8x128xbf16>, vector<128x512xbf16>, vector<8x512xf32> -> vector<8x512xf32>
    %415 = arith.addf %411, %414 : vector<8x512xf32>
    %416 = vector.extract_strided_slice %415 {offsets = [0, 0], sizes = [8, 128], strides = [1, 1]} : vector<8x512xf32> to vector<8x128xf32>
    %417 = arith.negf %416 : vector<8x128xf32>
    %418 = math.exp %417 : vector<8x128xf32>
    %cst_128 = arith.constant 1.000000e+00 : f32
    %419 = vector.broadcast %cst_128 : f32 to vector<8x128xf32>
    %420 = arith.addf %419, %418 : vector<8x128xf32>
    %421 = arith.divf %419, %420 : vector<8x128xf32>
    %422 = vector.extract_strided_slice %415 {offsets = [0, 128], sizes = [8, 128], strides = [1, 1]} : vector<8x512xf32> to vector<8x128xf32>
    %423 = arith.negf %422 : vector<8x128xf32>
    %424 = math.exp %423 : vector<8x128xf32>
    %cst_129 = arith.constant 1.000000e+00 : f32
    %425 = vector.broadcast %cst_129 : f32 to vector<8x128xf32>
    %426 = arith.addf %425, %424 : vector<8x128xf32>
    %427 = arith.divf %425, %426 : vector<8x128xf32>
    %428 = vector.extract_strided_slice %415 {offsets = [0, 256], sizes = [8, 128], strides = [1, 1]} : vector<8x512xf32> to vector<8x128xf32>
    %429 = math.tanh %428 : vector<8x128xf32>
    %430 = vector.extract_strided_slice %415 {offsets = [0, 384], sizes = [8, 128], strides = [1, 1]} : vector<8x512xf32> to vector<8x128xf32>
    %431 = arith.negf %430 : vector<8x128xf32>
    %432 = math.exp %431 : vector<8x128xf32>
    %cst_130 = arith.constant 1.000000e+00 : f32
    %433 = vector.broadcast %cst_130 : f32 to vector<8x128xf32>
    %434 = arith.addf %433, %432 : vector<8x128xf32>
    %435 = arith.divf %433, %434 : vector<8x128xf32>
    %436 = arith.mulf %427, %408 : vector<8x128xf32>
    %437 = arith.mulf %421, %429 : vector<8x128xf32>
    %438 = arith.addf %436, %437 : vector<8x128xf32>
    %439 = math.tanh %438 : vector<8x128xf32>
    %440 = arith.mulf %435, %439 : vector<8x128xf32>
    %c48_131 = arith.constant 48 : index
    %c0_132 = arith.constant 0 : index
    %441 = vector.load %arg12[%c48_131, %c0_132] : memref<64x512xf32, #tpu.memory_space<vmem>>, vector<8x512xf32>
    %442 = arith.truncf %440 : vector<8x128xf32> to vector<8x128xbf16>
    %c0_133 = arith.constant 0 : index
    %c0_134 = arith.constant 0 : index
    %443 = vector.load %arg7[%c0_133, %c0_134] : memref<128x512xbf16, #tpu.memory_space<vmem>>, vector<128x512xbf16>
    %cst_135 = arith.constant dense<0.000000e+00> : vector<8x512xf32>
    %444 = tpu.matmul %442, %443, %cst_135 {dimension_numbers = #tpu.dot_dimension_numbers<[1], [0], [0], [1], [0, 0, 1, 1], [], []>} : vector<8x128xbf16>, vector<128x512xbf16>, vector<8x512xf32> -> vector<8x512xf32>
    %445 = arith.addf %441, %444 : vector<8x512xf32>
    %446 = vector.extract_strided_slice %445 {offsets = [0, 0], sizes = [8, 128], strides = [1, 1]} : vector<8x512xf32> to vector<8x128xf32>
    %447 = arith.negf %446 : vector<8x128xf32>
    %448 = math.exp %447 : vector<8x128xf32>
    %cst_136 = arith.constant 1.000000e+00 : f32
    %449 = vector.broadcast %cst_136 : f32 to vector<8x128xf32>
    %450 = arith.addf %449, %448 : vector<8x128xf32>
    %451 = arith.divf %449, %450 : vector<8x128xf32>
    %452 = vector.extract_strided_slice %445 {offsets = [0, 128], sizes = [8, 128], strides = [1, 1]} : vector<8x512xf32> to vector<8x128xf32>
    %453 = arith.negf %452 : vector<8x128xf32>
    %454 = math.exp %453 : vector<8x128xf32>
    %cst_137 = arith.constant 1.000000e+00 : f32
    %455 = vector.broadcast %cst_137 : f32 to vector<8x128xf32>
    %456 = arith.addf %455, %454 : vector<8x128xf32>
    %457 = arith.divf %455, %456 : vector<8x128xf32>
    %458 = vector.extract_strided_slice %445 {offsets = [0, 256], sizes = [8, 128], strides = [1, 1]} : vector<8x512xf32> to vector<8x128xf32>
    %459 = math.tanh %458 : vector<8x128xf32>
    %460 = vector.extract_strided_slice %445 {offsets = [0, 384], sizes = [8, 128], strides = [1, 1]} : vector<8x512xf32> to vector<8x128xf32>
    %461 = arith.negf %460 : vector<8x128xf32>
    %462 = math.exp %461 : vector<8x128xf32>
    %cst_138 = arith.constant 1.000000e+00 : f32
    %463 = vector.broadcast %cst_138 : f32 to vector<8x128xf32>
    %464 = arith.addf %463, %462 : vector<8x128xf32>
    %465 = arith.divf %463, %464 : vector<8x128xf32>
    %466 = arith.mulf %457, %438 : vector<8x128xf32>
    %467 = arith.mulf %451, %459 : vector<8x128xf32>
    %468 = arith.addf %466, %467 : vector<8x128xf32>
    %469 = math.tanh %468 : vector<8x128xf32>
    %470 = arith.mulf %465, %469 : vector<8x128xf32>
    %c56_139 = arith.constant 56 : index
    %c0_140 = arith.constant 0 : index
    %471 = vector.load %arg12[%c56_139, %c0_140] : memref<64x512xf32, #tpu.memory_space<vmem>>, vector<8x512xf32>
    %472 = arith.truncf %470 : vector<8x128xf32> to vector<8x128xbf16>
    %c0_141 = arith.constant 0 : index
    %c0_142 = arith.constant 0 : index
    %473 = vector.load %arg7[%c0_141, %c0_142] : memref<128x512xbf16, #tpu.memory_space<vmem>>, vector<128x512xbf16>
    %cst_143 = arith.constant dense<0.000000e+00> : vector<8x512xf32>
    %474 = tpu.matmul %472, %473, %cst_143 {dimension_numbers = #tpu.dot_dimension_numbers<[1], [0], [0], [1], [0, 0, 1, 1], [], []>} : vector<8x128xbf16>, vector<128x512xbf16>, vector<8x512xf32> -> vector<8x512xf32>
    %475 = arith.addf %471, %474 : vector<8x512xf32>
    %476 = vector.extract_strided_slice %475 {offsets = [0, 0], sizes = [8, 128], strides = [1, 1]} : vector<8x512xf32> to vector<8x128xf32>
    %477 = arith.negf %476 : vector<8x128xf32>
    %478 = math.exp %477 : vector<8x128xf32>
    %cst_144 = arith.constant 1.000000e+00 : f32
    %479 = vector.broadcast %cst_144 : f32 to vector<8x128xf32>
    %480 = arith.addf %479, %478 : vector<8x128xf32>
    %481 = arith.divf %479, %480 : vector<8x128xf32>
    %482 = vector.extract_strided_slice %475 {offsets = [0, 128], sizes = [8, 128], strides = [1, 1]} : vector<8x512xf32> to vector<8x128xf32>
    %483 = arith.negf %482 : vector<8x128xf32>
    %484 = math.exp %483 : vector<8x128xf32>
    %cst_145 = arith.constant 1.000000e+00 : f32
    %485 = vector.broadcast %cst_145 : f32 to vector<8x128xf32>
    %486 = arith.addf %485, %484 : vector<8x128xf32>
    %487 = arith.divf %485, %486 : vector<8x128xf32>
    %488 = vector.extract_strided_slice %475 {offsets = [0, 256], sizes = [8, 128], strides = [1, 1]} : vector<8x512xf32> to vector<8x128xf32>
    %489 = math.tanh %488 : vector<8x128xf32>
    %490 = vector.extract_strided_slice %475 {offsets = [0, 384], sizes = [8, 128], strides = [1, 1]} : vector<8x512xf32> to vector<8x128xf32>
    %491 = arith.negf %490 : vector<8x128xf32>
    %492 = math.exp %491 : vector<8x128xf32>
    %cst_146 = arith.constant 1.000000e+00 : f32
    %493 = vector.broadcast %cst_146 : f32 to vector<8x128xf32>
    %494 = arith.addf %493, %492 : vector<8x128xf32>
    %495 = arith.divf %493, %494 : vector<8x128xf32>
    %496 = arith.mulf %487, %468 : vector<8x128xf32>
    %497 = arith.mulf %481, %489 : vector<8x128xf32>
    %498 = arith.addf %496, %497 : vector<8x128xf32>
    %499 = math.tanh %498 : vector<8x128xf32>
    %500 = arith.mulf %495, %499 : vector<8x128xf32>
    %c8_147 = arith.constant 8 : index
    %c0_148 = arith.constant 0 : index
    %501 = vector.load %arg10[%c8_147, %c0_148] : memref<16x128xf32, #tpu.memory_space<vmem>>, vector<8x128xf32>
    tpu.vector_store %arg10[%c8_147, %c0_148], %500 {strides = array<i32>} : memref<16x128xf32, #tpu.memory_space<vmem>>, vector<8x128xf32>,
    %c8_149 = arith.constant 8 : index
    %c0_150 = arith.constant 0 : index
    %502 = vector.load %arg11[%c8_149, %c0_150] : memref<16x128xf32, #tpu.memory_space<vmem>>, vector<8x128xf32>
    tpu.vector_store %arg11[%c8_149, %c0_150], %498 {strides = array<i32>} : memref<16x128xf32, #tpu.memory_space<vmem>>, vector<8x128xf32>,
    %503 = tpu.concatenate %290, %320, %350, %380, %410, %440, %470, %500 in 0 : vector<8x128xf32>, vector<8x128xf32>, vector<8x128xf32>, vector<8x128xf32>, vector<8x128xf32>, vector<8x128xf32>, vector<8x128xf32>, vector<8x128xf32> -> vector<64x128xf32>
    %c0_151 = arith.constant 0 : index
    %c0_152 = arith.constant 0 : index
    %504 = vector.load %arg9[%c0_151, %c0_152] : memref<64x128xf32, #tpu.memory_space<vmem>>, vector<64x128xf32>
    tpu.vector_store %arg9[%c0_151, %c0_152], %503 {strides = array<i32>} : memref<64x128xf32, #tpu.memory_space<vmem>>, vector<64x128xf32>,
    return
  }
}

</mosaic_0001>

<llo_original>
// kernel: basic_rnn_decoder_lstm.1
$region0: #{basic_rnn_decoder_lstm.1}
  #allocation0 [shape = 'u32[]', space=smem, size = 0x4, offset = 0x4, fixed_abs, tag = 'smem constant byte address 0x4 - core index']
  #allocation1 [shape = 'u32[144,128]{1,0:T(1,128)}', space=vmem, size = 0x12000, scoped, tag = 'internal scratch']
  #allocation2 [shape = 'f32[64,512]{1,0:T(8,128)}', space=vmem, size = 0x20000, scoped, tag = 'scratch operand']
  %s0 = inlined_call_operand.vmem [shape: bf16[64,128], index: 0, kind: input, shape index: {}]
  %s1 = inlined_call_operand.vmem [shape: f32[16,128], index: 1, kind: input, shape index: {}, may-alias: {1,2}]
  %s2 = inlined_call_operand.vmem [shape: f32[16,128], index: 2, kind: input, shape index: {}, may-alias: {1,2}]
  %s3 = inlined_call_operand.hbm [shape: bf16[128,512], index: 3, kind: input, shape index: {}]
  %s4 = inlined_call_operand.hbm [shape: bf16[128,512], index: 4, kind: input, shape index: {}]
  %s5 = inlined_call_operand.vmem [shape: f32[1,512], index: 5, kind: input, shape index: {}]
  %s6 = inlined_call_operand.hbm [shape: bf16[128,512], index: 6, kind: input, shape index: {}]
  %s7 = inlined_call_operand.hbm [shape: bf16[128,512], index: 7, kind: input, shape index: {}]
  %s8 = inlined_call_operand.vmem [shape: f32[1,512], index: 8, kind: input, shape index: {}]
  %s9 = inlined_call_operand.vmem [shape: f32[64,128], index: 9, kind: output, shape index: {0}]
  %s10 = inlined_call_operand.vmem [shape: f32[16,128], index: 10, kind: output, shape index: {1}]
  %s11 = inlined_call_operand.vmem [shape: f32[16,128], index: 11, kind: output, shape index: {2}]
  %12 = xla_tuple %s9, %s10, %s11
  %s13 = sld [smem:[#allocation0]]
  $region78: #{basic_rnn_decoder_lstm.1} parent=0
    _
  %s15 = ssub.s32 1, %s13
  %s16 = scalar_select 0, %s15, %s13
  $region1: #{basic_rnn_decoder_lstm.1} parent=0
    #allocation3 [shape = 'u8[131072]{0}', space=vmem, size = 0x20000, scoped, tag = 'input window, operand 3, single buffered']
    #allocation4 [shape = 's32[1]{0}', space=sflag, size = 0x4, scoped, tag = 'scoped memory for basic_rnn_decoder_lstm.1']
    #allocation5 [shape = 'u8[131072]{0}', space=vmem, size = 0x20000, scoped, tag = 'input window, operand 4, single buffered']
    #allocation6 [shape = 's32[1]{0}', space=sflag, size = 0x4, scoped, tag = 'scoped memory for basic_rnn_decoder_lstm.1']
    #allocation7 [shape = 'u8[131072]{0}', space=vmem, size = 0x20000, scoped, tag = 'input window, operand 6, single buffered']
    #allocation8 [shape = 'u8[131072]{0}', space=vmem, size = 0x20000, scoped, tag = 'input window, operand 7, single buffered']
    #allocation9 [shape = 's32[1]{0}', space=sflag, size = 0x4, scoped, tag = 'scoped memory for basic_rnn_decoder_lstm.1']
    %17 = vsyncpa [#allocation4], 0
    %18 = vsyncpa [#allocation6], 0
    %19 = vsyncpa [#allocation9], 0
    // Predicated region
    $region2: #{basic_rnn_decoder_lstm.1} parent=1 // pred_check
      _
    $region3: #{basic_rnn_decoder_lstm.1} parent=1 // pred_check_branch
      %21 = sbr.rel (0) target = $region5
    $region4: #{basic_rnn_decoder_lstm.1} parent=1 // pred_region
      _
    $region5: #{basic_rnn_decoder_lstm.1} parent=1 // pred_fallthru
      _
    // Predicated region
    $region6: #{basic_rnn_decoder_lstm.1} parent=1 // pred_check
      _
    $region7: #{basic_rnn_decoder_lstm.1} parent=1 // pred_check_branch
      %23 = sbr.rel (0) target = $region9
    $region8: #{basic_rnn_decoder_lstm.1} parent=1 // pred_region
      _
    $region9: #{basic_rnn_decoder_lstm.1} parent=1 // pred_fallthru
      _
    // Predicated region
    $region10: #{basic_rnn_decoder_lstm.1} parent=1 // pred_check
      _
    $region11: #{basic_rnn_decoder_lstm.1} parent=1 // pred_check_branch
      %25 = sbr.rel (0) target = $region13
    $region12: #{basic_rnn_decoder_lstm.1} parent=1 // pred_region
      _
    $region13: #{basic_rnn_decoder_lstm.1} parent=1 // pred_fallthru
      _
    // Predicated region
    $region14: #{basic_rnn_decoder_lstm.1} parent=1 // pred_check
      _
    $region15: #{basic_rnn_decoder_lstm.1} parent=1 // pred_check_branch
      %27 = sbr.rel (0) target = $region17
    $region16: #{basic_rnn_decoder_lstm.1} parent=1 // pred_region
      %s29 = ssub.s32 4096, 4096
      %30 = vsyncadd [#allocation4], %s29
      %s31 = sshll.u32 [#allocation3], 4
      %s32 = int_to_ptr.vmem [resolvable:$true] %s31
      %37 = dma.hbm_to_vmem [thread:$0]  %s3, 4096, %s32, [#allocation4], 256, 256, 16
    $region17: #{basic_rnn_decoder_lstm.1} parent=1 // pred_fallthru
      _
    // Predicated region
    $region18: #{basic_rnn_decoder_lstm.1} parent=1 // pred_check
      _
    $region19: #{basic_rnn_decoder_lstm.1} parent=1 // pred_check_branch
      %39 = sbr.rel (0) target = $region21
    $region20: #{basic_rnn_decoder_lstm.1} parent=1 // pred_region
      %s41 = ssub.s32 4096, 4096
      %42 = vsyncadd [#allocation6], %s41
      %s43 = sshll.u32 [#allocation5], 4
      %s44 = int_to_ptr.vmem [resolvable:$true] %s43
      %49 = dma.hbm_to_vmem [thread:$0]  %s4, 4096, %s44, [#allocation6], 256, 256, 16
    $region21: #{basic_rnn_decoder_lstm.1} parent=1 // pred_fallthru
      _
    // Predicated region
    $region22: #{basic_rnn_decoder_lstm.1} parent=1 // pred_check
      _
    $region23: #{basic_rnn_decoder_lstm.1} parent=1 // pred_check_branch
      %51 = sbr.rel (0) target = $region25
    $region24: #{basic_rnn_decoder_lstm.1} parent=1 // pred_region
      _
    $region25: #{basic_rnn_decoder_lstm.1} parent=1 // pred_fallthru
      _
    // Predicated region
    $region26: #{basic_rnn_decoder_lstm.1} parent=1 // pred_check
      _
    $region27: #{basic_rnn_decoder_lstm.1} parent=1 // pred_check_branch
      %53 = sbr.rel (0) target = $region29
    $region28: #{basic_rnn_decoder_lstm.1} parent=1 // pred_region
      %s55 = ssub.s32 4096, 4096
      %56 = vsyncadd [#allocation6], %s55
      %s57 = sshll.u32 [#allocation7], 4
      %s58 = int_to_ptr.vmem [resolvable:$true] %s57
      %63 = dma.hbm_to_vmem [thread:$0]  %s6, 4096, %s58, [#allocation6], 256, 256, 16
    $region29: #{basic_rnn_decoder_lstm.1} parent=1 // pred_fallthru
      _
    // Predicated region
    $region30: #{basic_rnn_decoder_lstm.1} parent=1 // pred_check
      _
    $region31: #{basic_rnn_decoder_lstm.1} parent=1 // pred_check_branch
      %65 = sbr.rel (0) target = $region33
    $region32: #{basic_rnn_decoder_lstm.1} parent=1 // pred_region
      %s67 = ssub.s32 4096, 4096
      %68 = vsyncadd [#allocation9], %s67
      %s69 = sshll.u32 [#allocation8], 4
      %s70 = int_to_ptr.vmem [resolvable:$true] %s69
      %75 = dma.hbm_to_vmem [thread:$0]  %s7, 4096, %s70, [#allocation9], 256, 256, 16
    $region33: #{basic_rnn_decoder_lstm.1} parent=1 // pred_fallthru
      _
    // Predicated region
    $region34: #{basic_rnn_decoder_lstm.1} parent=1 // pred_check
      _
    $region35: #{basic_rnn_decoder_lstm.1} parent=1 // pred_check_branch
      %77 = sbr.rel (0) target = $region37
    $region36: #{basic_rnn_decoder_lstm.1} parent=1 // pred_region
      _
    $region37: #{basic_rnn_decoder_lstm.1} parent=1 // pred_fallthru
      _
    // Predicated region
    $region38: #{basic_rnn_decoder_lstm.1} parent=1 // pred_check
      _
    $region39: #{basic_rnn_decoder_lstm.1} parent=1 // pred_check_branch
      %79 = sbr.rel (0) target = $region41
    $region40: #{basic_rnn_decoder_lstm.1} parent=1 // pred_region
      %80 = dma.done [#allocation4], 4096
    $region41: #{basic_rnn_decoder_lstm.1} parent=1 // pred_fallthru
      _
    // Predicated region
    $region42: #{basic_rnn_decoder_lstm.1} parent=1 // pred_check
      _
    $region43: #{basic_rnn_decoder_lstm.1} parent=1 // pred_check_branch
      %82 = sbr.rel (0) target = $region45
    $region44: #{basic_rnn_decoder_lstm.1} parent=1 // pred_region
      %83 = dma.done [#allocation6], 4096
    $region45: #{basic_rnn_decoder_lstm.1} parent=1 // pred_fallthru
      _
    // Predicated region
    $region46: #{basic_rnn_decoder_lstm.1} parent=1 // pred_check
      _
    $region47: #{basic_rnn_decoder_lstm.1} parent=1 // pred_check_branch
      %85 = sbr.rel (0) target = $region49
    $region48: #{basic_rnn_decoder_lstm.1} parent=1 // pred_region
      %86 = dma.done [#allocation6], 4096
    $region49: #{basic_rnn_decoder_lstm.1} parent=1 // pred_fallthru
      _
    // Predicated region
    $region50: #{basic_rnn_decoder_lstm.1} parent=1 // pred_check
      _
    $region51: #{basic_rnn_decoder_lstm.1} parent=1 // pred_check_branch
      %88 = sbr.rel (0) target = $region53
    $region52: #{basic_rnn_decoder_lstm.1} parent=1 // pred_region
      %89 = dma.done [#allocation9], 4096
    $region53: #{basic_rnn_decoder_lstm.1} parent=1 // pred_fallthru
      _
    %v91 = vld [vmem:[%s0] sm:$0xf]
    %v92 = vld [vmem:[%s0 + $0x4] sm:$0xf]
    %v93 = vld [vmem:[%s0 + $0x8] sm:$0xf]
    %v94 = vld [vmem:[%s0 + $0xc] sm:$0xf]
    %v95 = vld [vmem:[%s0 + $0x10] sm:$0xf]
    %v96 = vld [vmem:[%s0 + $0x14] sm:$0xf]
    %v97 = vld [vmem:[%s0 + $0x18] sm:$0xf]
    %v98 = vld [vmem:[%s0 + $0x1c] sm:$0xf]
    %v99 = vld [vmem:[#allocation3] sm:$0xff]
    %v100 = vld [vmem:[#allocation3 + $0x8] sm:$0xff]
    %v101 = vld [vmem:[#allocation3 + $0x10] sm:$0xff]
    %v102 = vld [vmem:[#allocation3 + $0x18] sm:$0xff]
    %v103 = vld [vmem:[#allocation3 + $0x20] sm:$0xff]
    %v104 = vld [vmem:[#allocation3 + $0x28] sm:$0xff]
    %v105 = vld [vmem:[#allocation3 + $0x30] sm:$0xff]
    %v106 = vld [vmem:[#allocation3 + $0x38] sm:$0xff]
    %v107 = vld [vmem:[#allocation3 + $0x40] sm:$0xff]
    %v108 = vld [vmem:[#allocation3 + $0x48] sm:$0xff]
    %v109 = vld [vmem:[#allocation3 + $0x50] sm:$0xff]
    %v110 = vld [vmem:[#allocation3 + $0x58] sm:$0xff]
    %v111 = vld [vmem:[#allocation3 + $0x60] sm:$0xff]
    %v112 = vld [vmem:[#allocation3 + $0x68] sm:$0xff]
    %v113 = vld [vmem:[#allocation3 + $0x70] sm:$0xff]
    %v114 = vld [vmem:[#allocation3 + $0x78] sm:$0xff]
    %v115 = vld [vmem:[#allocation3 + $0x80] sm:$0xff]
    %v116 = vld [vmem:[#allocation3 + $0x88] sm:$0xff]
    %v117 = vld [vmem:[#allocation3 + $0x90] sm:$0xff]
    %v118 = vld [vmem:[#allocation3 + $0x98] sm:$0xff]
    %v119 = vld [vmem:[#allocation3 + $0xa0] sm:$0xff]
    %v120 = vld [vmem:[#allocation3 + $0xa8] sm:$0xff]
    %v121 = vld [vmem:[#allocation3 + $0xb0] sm:$0xff]
    %v122 = vld [vmem:[#allocation3 + $0xb8] sm:$0xff]
    %v123 = vld [vmem:[#allocation3 + $0xc0] sm:$0xff]
    %v124 = vld [vmem:[#allocation3 + $0xc8] sm:$0xff]
    %v125 = vld [vmem:[#allocation3 + $0xd0] sm:$0xff]
    %v126 = vld [vmem:[#allocation3 + $0xd8] sm:$0xff]
    %v127 = vld [vmem:[#allocation3 + $0xe0] sm:$0xff]
    %v128 = vld [vmem:[#allocation3 + $0xe8] sm:$0xff]
    %v129 = vld [vmem:[#allocation3 + $0xf0] sm:$0xff]
    %v130 = vld [vmem:[#allocation3 + $0xf8] sm:$0xff]
    %v131 = vld [vmem:[%s5] sm:$0xf]
    %v133 = vlaneseq
    %v134 = vshrl.u32 %v133, 7
    %v135 = vsub.s32 0, %v134
    %v136 = vrot.slane %v131, %v135
    %v137 = vlaneseq
    %v138 = vshrl.u32 %v137, 7
    %v139 = vsub.s32 1, %v138
    %v140 = vrot.slane %v131, %v139
    %v141 = vlaneseq
    %v142 = vshrl.u32 %v141, 7
    %v143 = vsub.s32 2, %v142
    %v144 = vrot.slane %v131, %v143
    %v145 = vlaneseq
    %v146 = vshrl.u32 %v145, 7
    %v147 = vsub.s32 3, %v146
    %v148 = vrot.slane %v131, %v147
    %v161 = vunpack.c.l.b16 %v91
    %v162 = vunpack.c.l.b16 %v92
    %v163 = vunpack.c.l.b16 %v93
    %v164 = vunpack.c.l.b16 %v94
    %v165 = vunpack.c.l.b16 %v95
    %v166 = vunpack.c.l.b16 %v96
    %v167 = vunpack.c.l.b16 %v97
    %v168 = vunpack.c.l.b16 %v98
    %v169 = vpack.c.b16 %v162, %v161
    %v170 = vpack.c.b16 %v164, %v163
    %v171 = vpack.c.b16 %v166, %v165
    %v172 = vpack.c.b16 %v168, %v167
    %v209 = vunpack.c.l.b16 %v99
    %v210 = vunpack.c.h.b16 %v99
    %v211 = vunpack.c.l.b16 %v100
    %v212 = vunpack.c.h.b16 %v100
    %v213 = vunpack.c.l.b16 %v101
    %v214 = vunpack.c.h.b16 %v101
    %v215 = vunpack.c.l.b16 %v102
    %v216 = vunpack.c.h.b16 %v102
    %v217 = vunpack.c.l.b16 %v103
    %v218 = vunpack.c.h.b16 %v103
    %v219 = vunpack.c.l.b16 %v104
    %v220 = vunpack.c.h.b16 %v104
    %v221 = vunpack.c.l.b16 %v105
    %v222 = vunpack.c.h.b16 %v105
    %v223 = vunpack.c.l.b16 %v106
    %v224 = vunpack.c.h.b16 %v106
    %v225 = vunpack.c.l.b16 %v107
    %v226 = vunpack.c.h.b16 %v107
    %v227 = vunpack.c.l.b16 %v108
    %v228 = vunpack.c.h.b16 %v108
    %v229 = vunpack.c.l.b16 %v109
    %v230 = vunpack.c.h.b16 %v109
    %v231 = vunpack.c.l.b16 %v110
    %v232 = vunpack.c.h.b16 %v110
    %v233 = vunpack.c.l.b16 %v111
    %v234 = vunpack.c.h.b16 %v111
    %v235 = vunpack.c.l.b16 %v112
    %v236 = vunpack.c.h.b16 %v112
    %v237 = vunpack.c.l.b16 %v113
    %v238 = vunpack.c.h.b16 %v113
    %v239 = vunpack.c.l.b16 %v114
    %v240 = vunpack.c.h.b16 %v114
    %v241 = vunpack.c.l.b16 %v115
    %v242 = vunpack.c.h.b16 %v115
    %v243 = vunpack.c.l.b16 %v116
    %v244 = vunpack.c.h.b16 %v116
    %v245 = vunpack.c.l.b16 %v117
    %v246 = vunpack.c.h.b16 %v117
    %v247 = vunpack.c.l.b16 %v118
    %v248 = vunpack.c.h.b16 %v118
    %v249 = vunpack.c.l.b16 %v119
    %v250 = vunpack.c.h.b16 %v119
    %v251 = vunpack.c.l.b16 %v120
    %v252 = vunpack.c.h.b16 %v120
    %v253 = vunpack.c.l.b16 %v121
    %v254 = vunpack.c.h.b16 %v121
    %v255 = vunpack.c.l.b16 %v122
    %v256 = vunpack.c.h.b16 %v122
    %v257 = vunpack.c.l.b16 %v123
    %v258 = vunpack.c.h.b16 %v123
    %v259 = vunpack.c.l.b16 %v124
    %v260 = vunpack.c.h.b16 %v124
    %v261 = vunpack.c.l.b16 %v125
    %v262 = vunpack.c.h.b16 %v125
    %v263 = vunpack.c.l.b16 %v126
    %v264 = vunpack.c.h.b16 %v126
    %v265 = vunpack.c.l.b16 %v127
    %v266 = vunpack.c.h.b16 %v127
    %v267 = vunpack.c.l.b16 %v128
    %v268 = vunpack.c.h.b16 %v128
    %v269 = vunpack.c.l.b16 %v129
    %v270 = vunpack.c.h.b16 %v129
    %v271 = vunpack.c.l.b16 %v130
    %v272 = vunpack.c.h.b16 %v130
    %v273 = vpack.c.b16 %v213, %v209
    %v274 = vpack.c.b16 %v214, %v210
    %v275 = vpack.c.b16 %v215, %v211
    %v276 = vpack.c.b16 %v216, %v212
    %v277 = vpack.c.b16 %v221, %v217
    %v278 = vpack.c.b16 %v222, %v218
    %v279 = vpack.c.b16 %v223, %v219
    %v280 = vpack.c.b16 %v224, %v220
    %v281 = vpack.c.b16 %v229, %v225
    %v282 = vpack.c.b16 %v230, %v226
    %v283 = vpack.c.b16 %v231, %v227
    %v284 = vpack.c.b16 %v232, %v228
    %v285 = vpack.c.b16 %v237, %v233
    %v286 = vpack.c.b16 %v238, %v234
    %v287 = vpack.c.b16 %v239, %v235
    %v288 = vpack.c.b16 %v240, %v236
    %v289 = vpack.c.b16 %v245, %v241
    %v290 = vpack.c.b16 %v246, %v242
    %v291 = vpack.c.b16 %v247, %v243
    %v292 = vpack.c.b16 %v248, %v244
    %v293 = vpack.c.b16 %v253, %v249
    %v294 = vpack.c.b16 %v254, %v250
    %v295 = vpack.c.b16 %v255, %v251
    %v296 = vpack.c.b16 %v256, %v252
    %v297 = vpack.c.b16 %v261, %v257
    %v298 = vpack.c.b16 %v262, %v258
    %v299 = vpack.c.b16 %v263, %v259
    %v300 = vpack.c.b16 %v264, %v260
    %v301 = vpack.c.b16 %v269, %v265
    %v302 = vpack.c.b16 %v270, %v266
    %v303 = vpack.c.b16 %v271, %v267
    %v304 = vpack.c.b16 %v272, %v268
    %337 = vmatprep.subr.bf16.mxu0 %v302
    %338 = vmatpush1.bf16.msra.mxu0 %v301
    %339 = vmatprep.subr.bf16.mxu0 %v298
    %340 = vmatpush1.bf16.msra.mxu0 %v297
    %341 = vmatprep.subr.bf16.mxu0 %v294
    %342 = vmatpush1.bf16.msra.mxu0 %v293
    %343 = vmatprep.subr.bf16.mxu0 %v290
    %344 = vmatpush1.bf16.msra.mxu0 %v289
    %345 = vmatprep.subr.bf16.mxu0 %v286
    %346 = vmatpush1.bf16.msra.mxu0 %v285
    %347 = vmatprep.subr.bf16.mxu0 %v282
    %348 = vmatpush1.bf16.msra.mxu0 %v281
    %349 = vmatprep.subr.bf16.mxu0 %v278
    %350 = vmatpush1.bf16.msra.mxu0 %v277
    %351 = vmatprep.subr.bf16.mxu0 %v274
    %352 = vmatpush1.bf16.msra.mxu0 %v273
    %353 = vmatprep.subr.bf16.mxu0 0
    %354 = vmatpush2.bf16.msra.mxu0 0
    %355 = vmatprep.subr.bf16.mxu0 0
    %356 = vmatpush2.bf16.msra.mxu0 0
    %357 = vmatprep.subr.bf16.mxu0 0
    %358 = vmatpush2.bf16.msra.mxu0 0
    %359 = vmatprep.subr.bf16.mxu0 0
    %360 = vmatpush2.bf16.msra.mxu0 0
    %361 = vmatprep.subr.bf16.mxu0 0
    %362 = vmatpush2.bf16.msra.mxu0 0
    %363 = vmatprep.subr.bf16.mxu0 0
    %364 = vmatpush2.bf16.msra.mxu0 0
    %365 = vmatprep.subr.bf16.mxu0 0
    %366 = vmatpush2.bf16.msra.mxu0 0
    %367 = vmatprep.subr.bf16.mxu0 0
    %368 = vmatpush2.bf16.msra.mxu0 0
    %369 = vmatprep.mubr.bf16.mxu0 0
    %370 = vmatmul.mubr.bf16.gmra.mxu0 %v169
    %v371 = vpop.f32.mrf.mxu0
    %v372 = vadd.f32 %v136, %v371
    %v373 = vpop.f32.mrf.mxu0
    %v374 = vadd.f32 %v140, %v373
    %v375 = vpop.f32.mrf.mxu0
    %v376 = vadd.f32 %v136, %v375
    %v377 = vpop.f32.mrf.mxu0
    %v378 = vadd.f32 %v140, %v377
    %379 = vmatprep.mubr.bf16.mxu0 0
    %380 = vmatmul.mubr.bf16.gmra.mxu0 %v170
    %v381 = vpop.f32.mrf.mxu0
    %v382 = vadd.f32 %v136, %v381
    %v383 = vpop.f32.mrf.mxu0
    %v384 = vadd.f32 %v140, %v383
    %v385 = vpop.f32.mrf.mxu0
    %v386 = vadd.f32 %v136, %v385
    %v387 = vpop.f32.mrf.mxu0
    %v388 = vadd.f32 %v140, %v387
    %389 = vmatprep.mubr.bf16.mxu0 0
    %390 = vmatmul.mubr.bf16.gmra.mxu0 %v171
    %v391 = vpop.f32.mrf.mxu0
    %v392 = vadd.f32 %v136, %v391
    %v393 = vpop.f32.mrf.mxu0
    %v394 = vadd.f32 %v140, %v393
    %v395 = vpop.f32.mrf.mxu0
    %v396 = vadd.f32 %v136, %v395
    %v397 = vpop.f32.mrf.mxu0
    %v398 = vadd.f32 %v140, %v397
    %399 = vmatprep.mubr.bf16.mxu0 0
    %400 = vmatmul.mubr.bf16.gmra.mxu0 %v172
    %v401 = vpop.f32.mrf.mxu0
    %v402 = vadd.f32 %v136, %v401
    %v403 = vpop.f32.mrf.mxu0
    %v404 = vadd.f32 %v140, %v403
    %v405 = vpop.f32.mrf.mxu0
    %v406 = vadd.f32 %v136, %v405
    %v407 = vpop.f32.mrf.mxu0
    %v408 = vadd.f32 %v140, %v407
    %409 = vdwg.mxu0
    %410 = vmatprep.subr.bf16.mxu0 %v304
    %411 = vmatpush1.bf16.msra.mxu0 %v303
    %412 = vmatprep.subr.bf16.mxu0 %v300
    %413 = vmatpush1.bf16.msra.mxu0 %v299
    %414 = vmatprep.subr.bf16.mxu0 %v296
    %415 = vmatpush1.bf16.msra.mxu0 %v295
    %416 = vmatprep.subr.bf16.mxu0 %v292
    %417 = vmatpush1.bf16.msra.mxu0 %v291
    %418 = vmatprep.subr.bf16.mxu0 %v288
    %419 = vmatpush1.bf16.msra.mxu0 %v287
    %420 = vmatprep.subr.bf16.mxu0 %v284
    %421 = vmatpush1.bf16.msra.mxu0 %v283
    %422 = vmatprep.subr.bf16.mxu0 %v280
    %423 = vmatpush1.bf16.msra.mxu0 %v279
    %424 = vmatprep.subr.bf16.mxu0 %v276
    %425 = vmatpush1.bf16.msra.mxu0 %v275
    %426 = vmatprep.subr.bf16.mxu0 0
    %427 = vmatpush2.bf16.msra.mxu0 0
    %428 = vmatprep.subr.bf16.mxu0 0
    %429 = vmatpush2.bf16.msra.mxu0 0
    %430 = vmatprep.subr.bf16.mxu0 0
    %431 = vmatpush2.bf16.msra.mxu0 0
    %432 = vmatprep.subr.bf16.mxu0 0
    %433 = vmatpush2.bf16.msra.mxu0 0
    %434 = vmatprep.subr.bf16.mxu0 0
    %435 = vmatpush2.bf16.msra.mxu0 0
    %436 = vmatprep.subr.bf16.mxu0 0
    %437 = vmatpush2.bf16.msra.mxu0 0
    %438 = vmatprep.subr.bf16.mxu0 0
    %439 = vmatpush2.bf16.msra.mxu0 0
    %440 = vmatprep.subr.bf16.mxu0 0
    %441 = vmatpush2.bf16.msra.mxu0 0
    %442 = vmatprep.mubr.bf16.mxu0 0
    %443 = vmatmul.mubr.bf16.gmra.mxu0 %v169
    %v444 = vpop.f32.mrf.mxu0
    %v445 = vadd.f32 %v144, %v444
    %v446 = vpop.f32.mrf.mxu0
    %v447 = vadd.f32 %v148, %v446
    %v448 = vpop.f32.mrf.mxu0
    %v449 = vadd.f32 %v144, %v448
    %v450 = vpop.f32.mrf.mxu0
    %v451 = vadd.f32 %v148, %v450
    %452 = vmatprep.mubr.bf16.mxu0 0
    %453 = vmatmul.mubr.bf16.gmra.mxu0 %v170
    %v454 = vpop.f32.mrf.mxu0
    %v455 = vadd.f32 %v144, %v454
    %v456 = vpop.f32.mrf.mxu0
    %v457 = vadd.f32 %v148, %v456
    %v458 = vpop.f32.mrf.mxu0
    %v459 = vadd.f32 %v144, %v458
    %v460 = vpop.f32.mrf.mxu0
    %v461 = vadd.f32 %v148, %v460
    %462 = vmatprep.mubr.bf16.mxu0 0
    %463 = vmatmul.mubr.bf16.gmra.mxu0 %v171
    %v464 = vpop.f32.mrf.mxu0
    %v465 = vadd.f32 %v144, %v464
    %v466 = vpop.f32.mrf.mxu0
    %v467 = vadd.f32 %v148, %v466
    %v468 = vpop.f32.mrf.mxu0
    %v469 = vadd.f32 %v144, %v468
    %v470 = vpop.f32.mrf.mxu0
    %v471 = vadd.f32 %v148, %v470
    %472 = vmatprep.mubr.bf16.mxu0 0
    %473 = vmatmul.mubr.bf16.gmra.mxu0 %v172
    %v474 = vpop.f32.mrf.mxu0
    %v475 = vadd.f32 %v144, %v474
    %v476 = vpop.f32.mrf.mxu0
    %v477 = vadd.f32 %v148, %v476
    %v478 = vpop.f32.mrf.mxu0
    %v479 = vadd.f32 %v144, %v478
    %v480 = vpop.f32.mrf.mxu0
    %v481 = vadd.f32 %v148, %v480
    %482 = vdwg.mxu0
    %483 = vst [vmem:[#allocation2] sm:$0xff] %v372
    %484 = vst [vmem:[#allocation2 + $0x8] sm:$0xff] %v374
    %485 = vst [vmem:[#allocation2 + $0x10] sm:$0xff] %v445
    %486 = vst [vmem:[#allocation2 + $0x18] sm:$0xff] %v447
    %487 = vst [vmem:[#allocation2 + $0x20] sm:$0xff] %v376
    %488 = vst [vmem:[#allocation2 + $0x28] sm:$0xff] %v378
    %489 = vst [vmem:[#allocation2 + $0x30] sm:$0xff] %v449
    %490 = vst [vmem:[#allocation2 + $0x38] sm:$0xff] %v451
    %491 = vst [vmem:[#allocation2 + $0x40] sm:$0xff] %v382
    %492 = vst [vmem:[#allocation2 + $0x48] sm:$0xff] %v384
    %493 = vst [vmem:[#allocation2 + $0x50] sm:$0xff] %v455
    %494 = vst [vmem:[#allocation2 + $0x58] sm:$0xff] %v457
    %495 = vst [vmem:[#allocation2 + $0x60] sm:$0xff] %v386
    %496 = vst [vmem:[#allocation2 + $0x68] sm:$0xff] %v388
    %497 = vst [vmem:[#allocation2 + $0x70] sm:$0xff] %v459
    %498 = vst [vmem:[#allocation2 + $0x78] sm:$0xff] %v461
    %499 = vst [vmem:[#allocation2 + $0x80] sm:$0xff] %v392
    %500 = vst [vmem:[#allocation2 + $0x88] sm:$0xff] %v394
    %501 = vst [vmem:[#allocation2 + $0x90] sm:$0xff] %v465
    %502 = vst [vmem:[#allocation2 + $0x98] sm:$0xff] %v467
    %503 = vst [vmem:[#allocation2 + $0xa0] sm:$0xff] %v396
    %504 = vst [vmem:[#allocation2 + $0xa8] sm:$0xff] %v398
    %505 = vst [vmem:[#allocation2 + $0xb0] sm:$0xff] %v469
    %506 = vst [vmem:[#allocation2 + $0xb8] sm:$0xff] %v471
    %507 = vst [vmem:[#allocation2 + $0xc0] sm:$0xff] %v402
    %508 = vst [vmem:[#allocation2 + $0xc8] sm:$0xff] %v404
    %509 = vst [vmem:[#allocation2 + $0xd0] sm:$0xff] %v475
    %510 = vst [vmem:[#allocation2 + $0xd8] sm:$0xff] %v477
    %511 = vst [vmem:[#allocation2 + $0xe0] sm:$0xff] %v406
    %512 = vst [vmem:[#allocation2 + $0xe8] sm:$0xff] %v408
    %513 = vst [vmem:[#allocation2 + $0xf0] sm:$0xff] %v479
    %514 = vst [vmem:[#allocation2 + $0xf8] sm:$0xff] %v481
    %v515 = vld [vmem:[%s1] sm:$0xff]
    %v516 = vld [vmem:[%s2] sm:$0xff]
    %v517 = vld [vmem:[#allocation2] sm:$0xff]
    %v518 = vld [vmem:[#allocation2 + $0x8] sm:$0xff]
    %v519 = vld [vmem:[#allocation2 + $0x10] sm:$0xff]
    %v520 = vld [vmem:[#allocation2 + $0x18] sm:$0xff]
    %v521 = vpack.c.bf16 %v515, %v515
    %v522 = vld [vmem:[#allocation5] sm:$0xff]
    %v523 = vld [vmem:[#allocation5 + $0x8] sm:$0xff]
    %v524 = vld [vmem:[#allocation5 + $0x10] sm:$0xff]
    %v525 = vld [vmem:[#allocation5 + $0x18] sm:$0xff]
    %v526 = vld [vmem:[#allocation5 + $0x20] sm:$0xff]
    %v527 = vld [vmem:[#allocation5 + $0x28] sm:$0xff]
    %v528 = vld [vmem:[#allocation5 + $0x30] sm:$0xff]
    %v529 = vld [vmem:[#allocation5 + $0x38] sm:$0xff]
    %v530 = vld [vmem:[#allocation5 + $0x40] sm:$0xff]
    %v531 = vld [vmem:[#allocation5 + $0x48] sm:$0xff]
    %v532 = vld [vmem:[#allocation5 + $0x50] sm:$0xff]
    %v533 = vld [vmem:[#allocation5 + $0x58] sm:$0xff]
    %v534 = vld [vmem:[#allocation5 + $0x60] sm:$0xff]
    %v535 = vld [vmem:[#allocation5 + $0x68] sm:$0xff]
    %v536 = vld [vmem:[#allocation5 + $0x70] sm:$0xff]
    %v537 = vld [vmem:[#allocation5 + $0x78] sm:$0xff]
    %v538 = vld [vmem:[#allocation5 + $0x80] sm:$0xff]
    %v539 = vld [vmem:[#allocation5 + $0x88] sm:$0xff]
    %v540 = vld [vmem:[#allocation5 + $0x90] sm:$0xff]
    %v541 = vld [vmem:[#allocation5 + $0x98] sm:$0xff]
    %v542 = vld [vmem:[#allocation5 + $0xa0] sm:$0xff]
    %v543 = vld [vmem:[#allocation5 + $0xa8] sm:$0xff]
    %v544 = vld [vmem:[#allocation5 + $0xb0] sm:$0xff]
    %v545 = vld [vmem:[#allocation5 + $0xb8] sm:$0xff]
    %v546 = vld [vmem:[#allocation5 + $0xc0] sm:$0xff]
    %v547 = vld [vmem:[#allocation5 + $0xc8] sm:$0xff]
    %v548 = vld [vmem:[#allocation5 + $0xd0] sm:$0xff]
    %v549 = vld [vmem:[#allocation5 + $0xd8] sm:$0xff]
    %v550 = vld [vmem:[#allocation5 + $0xe0] sm:$0xff]
    %v551 = vld [vmem:[#allocation5 + $0xe8] sm:$0xff]
    %v552 = vld [vmem:[#allocation5 + $0xf0] sm:$0xff]
    %v553 = vld [vmem:[#allocation5 + $0xf8] sm:$0xff]
    %v586 = vunpack.c.l.b16 %v522
    %v587 = vunpack.c.h.b16 %v522
    %v588 = vunpack.c.l.b16 %v523
    %v589 = vunpack.c.h.b16 %v523
    %v590 = vunpack.c.l.b16 %v524
    %v591 = vunpack.c.h.b16 %v524
    %v592 = vunpack.c.l.b16 %v525
    %v593 = vunpack.c.h.b16 %v525
    %v594 = vunpack.c.l.b16 %v526
    %v595 = vunpack.c.h.b16 %v526
    %v596 = vunpack.c.l.b16 %v527
    %v597 = vunpack.c.h.b16 %v527
    %v598 = vunpack.c.l.b16 %v528
    %v599 = vunpack.c.h.b16 %v528
    %v600 = vunpack.c.l.b16 %v529
    %v601 = vunpack.c.h.b16 %v529
    %v602 = vunpack.c.l.b16 %v530
    %v603 = vunpack.c.h.b16 %v530
    %v604 = vunpack.c.l.b16 %v531
    %v605 = vunpack.c.h.b16 %v531
    %v606 = vunpack.c.l.b16 %v532
    %v607 = vunpack.c.h.b16 %v532
    %v608 = vunpack.c.l.b16 %v533
    %v609 = vunpack.c.h.b16 %v533
    %v610 = vunpack.c.l.b16 %v534
    %v611 = vunpack.c.h.b16 %v534
    %v612 = vunpack.c.l.b16 %v535
    %v613 = vunpack.c.h.b16 %v535
    %v614 = vunpack.c.l.b16 %v536
    %v615 = vunpack.c.h.b16 %v536
    %v616 = vunpack.c.l.b16 %v537
    %v617 = vunpack.c.h.b16 %v537
    %v618 = vunpack.c.l.b16 %v538
    %v619 = vunpack.c.h.b16 %v538
    %v620 = vunpack.c.l.b16 %v539
    %v621 = vunpack.c.h.b16 %v539
    %v622 = vunpack.c.l.b16 %v540
    %v623 = vunpack.c.h.b16 %v540
    %v624 = vunpack.c.l.b16 %v541
    %v625 = vunpack.c.h.b16 %v541
    %v626 = vunpack.c.l.b16 %v542
    %v627 = vunpack.c.h.b16 %v542
    %v628 = vunpack.c.l.b16 %v543
    %v629 = vunpack.c.h.b16 %v543
    %v630 = vunpack.c.l.b16 %v544
    %v631 = vunpack.c.h.b16 %v544
    %v632 = vunpack.c.l.b16 %v545
    %v633 = vunpack.c.h.b16 %v545
    %v634 = vunpack.c.l.b16 %v546
    %v635 = vunpack.c.h.b16 %v546
    %v636 = vunpack.c.l.b16 %v547
    %v637 = vunpack.c.h.b16 %v547
    %v638 = vunpack.c.l.b16 %v548
    %v639 = vunpack.c.h.b16 %v548
    %v640 = vunpack.c.l.b16 %v549
    %v641 = vunpack.c.h.b16 %v549
    %v642 = vunpack.c.l.b16 %v550
    %v643 = vunpack.c.h.b16 %v550
    %v644 = vunpack.c.l.b16 %v551
    %v645 = vunpack.c.h.b16 %v551
    %v646 = vunpack.c.l.b16 %v552
    %v647 = vunpack.c.h.b16 %v552
    %v648 = vunpack.c.l.b16 %v553
    %v649 = vunpack.c.h.b16 %v553
    %v650 = vpack.c.b16 %v590, %v586
    %v651 = vpack.c.b16 %v591, %v587
    %v652 = vpack.c.b16 %v592, %v588
    %v653 = vpack.c.b16 %v593, %v589
    %v654 = vpack.c.b16 %v598, %v594
    %v655 = vpack.c.b16 %v599, %v595
    %v656 = vpack.c.b16 %v600, %v596
    %v657 = vpack.c.b16 %v601, %v597
    %v658 = vpack.c.b16 %v606, %v602
    %v659 = vpack.c.b16 %v607, %v603
    %v660 = vpack.c.b16 %v608, %v604
    %v661 = vpack.c.b16 %v609, %v605
    %v662 = vpack.c.b16 %v614, %v610
    %v663 = vpack.c.b16 %v615, %v611
    %v664 = vpack.c.b16 %v616, %v612
    %v665 = vpack.c.b16 %v617, %v613
    %v666 = vpack.c.b16 %v622, %v618
    %v667 = vpack.c.b16 %v623, %v619
    %v668 = vpack.c.b16 %v624, %v620
    %v669 = vpack.c.b16 %v625, %v621
    %v670 = vpack.c.b16 %v630, %v626
    %v671 = vpack.c.b16 %v631, %v627
    %v672 = vpack.c.b16 %v632, %v628
    %v673 = vpack.c.b16 %v633, %v629
    %v674 = vpack.c.b16 %v638, %v634
    %v675 = vpack.c.b16 %v639, %v635
    %v676 = vpack.c.b16 %v640, %v636
    %v677 = vpack.c.b16 %v641, %v637
    %v678 = vpack.c.b16 %v646, %v642
    %v679 = vpack.c.b16 %v647, %v643
    %v680 = vpack.c.b16 %v648, %v644
    %v681 = vpack.c.b16 %v649, %v645
    %714 = vmatprep.subr.bf16.mxu0 %v679
    %715 = vmatpush1.bf16.msra.mxu0 %v678
    %716 = vmatprep.subr.bf16.mxu0 %v675
    %717 = vmatpush1.bf16.msra.mxu0 %v674
    %718 = vmatprep.subr.bf16.mxu0 %v671
    %719 = vmatpush1.bf16.msra.mxu0 %v670
    %720 = vmatprep.subr.bf16.mxu0 %v667
    %721 = vmatpush1.bf16.msra.mxu0 %v666
    %722 = vmatprep.subr.bf16.mxu0 %v663
    %723 = vmatpush1.bf16.msra.mxu0 %v662
    %724 = vmatprep.subr.bf16.mxu0 %v659
    %725 = vmatpush1.bf16.msra.mxu0 %v658
    %726 = vmatprep.subr.bf16.mxu0 %v655
    %727 = vmatpush1.bf16.msra.mxu0 %v654
    %728 = vmatprep.subr.bf16.mxu0 %v651
    %729 = vmatpush1.bf16.msra.mxu0 %v650
    %730 = vmatprep.subr.bf16.mxu0 0
    %731 = vmatpush2.bf16.msra.mxu0 0
    %732 = vmatprep.subr.bf16.mxu0 0
    %733 = vmatpush2.bf16.msra.mxu0 0
    %734 = vmatprep.subr.bf16.mxu0 0
    %735 = vmatpush2.bf16.msra.mxu0 0
    %736 = vmatprep.subr.bf16.mxu0 0
    %737 = vmatpush2.bf16.msra.mxu0 0
    %738 = vmatprep.subr.bf16.mxu0 0
    %739 = vmatpush2.bf16.msra.mxu0 0
    %740 = vmatprep.subr.bf16.mxu0 0
    %741 = vmatpush2.bf16.msra.mxu0 0
    %742 = vmatprep.subr.bf16.mxu0 0
    %743 = vmatpush2.bf16.msra.mxu0 0
    %744 = vmatprep.subr.bf16.mxu0 0
    %745 = vmatpush2.bf16.msra.mxu0 0
    %746 = vmatprep.mubr.bf16.mxu0 0
    %747 = vmatmul.mubr.bf16.gmra.mxu0 %v521
    %v748 = vpop.f32.mrf.mxu0
    %v749 = vadd.f32 0.0, %v748
    %v750 = vpop.f32.mrf.mxu0
    %v751 = vadd.f32 0.0, %v750
    %v752 = vpop.f32.mrf.mxu0
    %v753 = vpop.f32.mrf.mxu0
    %754 = vdwg.mxu0
    %755 = vmatprep.subr.bf16.mxu0 %v681
    %756 = vmatpush1.bf16.msra.mxu0 %v680
    %757 = vmatprep.subr.bf16.mxu0 %v677
    %758 = vmatpush1.bf16.msra.mxu0 %v676
    %759 = vmatprep.subr.bf16.mxu0 %v673
    %760 = vmatpush1.bf16.msra.mxu0 %v672
    %761 = vmatprep.subr.bf16.mxu0 %v669
    %762 = vmatpush1.bf16.msra.mxu0 %v668
    %763 = vmatprep.subr.bf16.mxu0 %v665
    %764 = vmatpush1.bf16.msra.mxu0 %v664
    %765 = vmatprep.subr.bf16.mxu0 %v661
    %766 = vmatpush1.bf16.msra.mxu0 %v660
    %767 = vmatprep.subr.bf16.mxu0 %v657
    %768 = vmatpush1.bf16.msra.mxu0 %v656
    %769 = vmatprep.subr.bf16.mxu0 %v653
    %770 = vmatpush1.bf16.msra.mxu0 %v652
    %771 = vmatprep.subr.bf16.mxu0 0
    %772 = vmatpush2.bf16.msra.mxu0 0
    %773 = vmatprep.subr.bf16.mxu0 0
    %774 = vmatpush2.bf16.msra.mxu0 0
    %775 = vmatprep.subr.bf16.mxu0 0
    %776 = vmatpush2.bf16.msra.mxu0 0
    %777 = vmatprep.subr.bf16.mxu0 0
    %778 = vmatpush2.bf16.msra.mxu0 0
    %779 = vmatprep.subr.bf16.mxu0 0
    %780 = vmatpush2.bf16.msra.mxu0 0
    %781 = vmatprep.subr.bf16.mxu0 0
    %782 = vmatpush2.bf16.msra.mxu0 0
    %783 = vmatprep.subr.bf16.mxu0 0
    %784 = vmatpush2.bf16.msra.mxu0 0
    %785 = vmatprep.subr.bf16.mxu0 0
    %786 = vmatpush2.bf16.msra.mxu0 0
    %787 = vmatprep.mubr.bf16.mxu0 0
    %788 = vmatmul.mubr.bf16.gmra.mxu0 %v521
    %v789 = vpop.f32.mrf.mxu0
    %v790 = vadd.f32 0.0, %v789
    %v791 = vpop.f32.mrf.mxu0
    %v792 = vadd.f32 0.0, %v791
    %v793 = vpop.f32.mrf.mxu0
    %v794 = vpop.f32.mrf.mxu0
    %795 = vdwg.mxu0
    %v796 = vadd.f32 %v517, %v749
    %v797 = vadd.f32 %v518, %v751
    %v798 = vadd.f32 %v519, %v790
    %v799 = vadd.f32 %v520, %v792
    %v800 = vxor.u32 %v796, 2147483648
    %v801 = vmul.f32 %v800, 1.442695
    %v802 = vpow.pop %v801
    %v803 = vadd.f32 %v802, 1.0
    %v804 = vrcp.pop %v803
    %v805 = vmul.f32 1.0, %v804
    %v806 = vxor.u32 %v797, 2147483648
    %v807 = vmul.f32 %v806, 1.442695
    %v808 = vpow.pop %v807
    %v809 = vadd.f32 %v808, 1.0
    %v810 = vrcp.pop %v809
    %v811 = vmul.f32 1.0, %v810
    %v812 = vtanh.pop %v798
    %v813 = vxor.u32 %v799, 2147483648
    %v814 = vmul.f32 %v813, 1.442695
    %v815 = vpow.pop %v814
    %v816 = vadd.f32 %v815, 1.0
    %v817 = vrcp.pop %v816
    %v818 = vmul.f32 1.0, %v817
    %v819 = vmul.f32 %v811, %v516
    %v820 = vmul.f32 %v805, %v812
    %v821 = vadd.f32 %v819, %v820
    %v822 = vtanh.pop %v821
    %v823 = vmul.f32 %v818, %v822
    %v824 = vld [vmem:[#allocation2 + $0x20] sm:$0xff]
    %v825 = vld [vmem:[#allocation2 + $0x28] sm:$0xff]
    %v826 = vld [vmem:[#allocation2 + $0x30] sm:$0xff]
    %v827 = vld [vmem:[#allocation2 + $0x38] sm:$0xff]
    %v828 = vpack.c.bf16 %v823, %v823
    %829 = vmatprep.subr.bf16.mxu0 %v679
    %830 = vmatpush1.bf16.msra.mxu0 %v678
    %831 = vmatprep.subr.bf16.mxu0 %v675
    %832 = vmatpush1.bf16.msra.mxu0 %v674
    %833 = vmatprep.subr.bf16.mxu0 %v671
    %834 = vmatpush1.bf16.msra.mxu0 %v670
    %835 = vmatprep.subr.bf16.mxu0 %v667
    %836 = vmatpush1.bf16.msra.mxu0 %v666
    %837 = vmatprep.subr.bf16.mxu0 %v663
    %838 = vmatpush1.bf16.msra.mxu0 %v662
    %839 = vmatprep.subr.bf16.mxu0 %v659
    %840 = vmatpush1.bf16.msra.mxu0 %v658
    %841 = vmatprep.subr.bf16.mxu0 %v655
    %842 = vmatpush1.bf16.msra.mxu0 %v654
    %843 = vmatprep.subr.bf16.mxu0 %v651
    %844 = vmatpush1.bf16.msra.mxu0 %v650
    %845 = vmatprep.subr.bf16.mxu0 0
    %846 = vmatpush2.bf16.msra.mxu0 0
    %847 = vmatprep.subr.bf16.mxu0 0
    %848 = vmatpush2.bf16.msra.mxu0 0
    %849 = vmatprep.subr.bf16.mxu0 0
    %850 = vmatpush2.bf16.msra.mxu0 0
    %851 = vmatprep.subr.bf16.mxu0 0
    %852 = vmatpush2.bf16.msra.mxu0 0
    %853 = vmatprep.subr.bf16.mxu0 0
    %854 = vmatpush2.bf16.msra.mxu0 0
    %855 = vmatprep.subr.bf16.mxu0 0
    %856 = vmatpush2.bf16.msra.mxu0 0
    %857 = vmatprep.subr.bf16.mxu0 0
    %858 = vmatpush2.bf16.msra.mxu0 0
    %859 = vmatprep.subr.bf16.mxu0 0
    %860 = vmatpush2.bf16.msra.mxu0 0
    %861 = vmatprep.mubr.bf16.mxu0 0
    %862 = vmatmul.mubr.bf16.gmra.mxu0 %v828
    %v863 = vpop.f32.mrf.mxu0
    %v864 = vadd.f32 0.0, %v863
    %v865 = vpop.f32.mrf.mxu0
    %v866 = vadd.f32 0.0, %v865
    %v867 = vpop.f32.mrf.mxu0
    %v868 = vpop.f32.mrf.mxu0
    %869 = vdwg.mxu0
    %870 = vmatprep.subr.bf16.mxu0 %v681
    %871 = vmatpush1.bf16.msra.mxu0 %v680
    %872 = vmatprep.subr.bf16.mxu0 %v677
    %873 = vmatpush1.bf16.msra.mxu0 %v676
    %874 = vmatprep.subr.bf16.mxu0 %v673
    %875 = vmatpush1.bf16.msra.mxu0 %v672
    %876 = vmatprep.subr.bf16.mxu0 %v669
    %877 = vmatpush1.bf16.msra.mxu0 %v668
    %878 = vmatprep.subr.bf16.mxu0 %v665
    %879 = vmatpush1.bf16.msra.mxu0 %v664
    %880 = vmatprep.subr.bf16.mxu0 %v661
    %881 = vmatpush1.bf16.msra.mxu0 %v660
    %882 = vmatprep.subr.bf16.mxu0 %v657
    %883 = vmatpush1.bf16.msra.mxu0 %v656
    %884 = vmatprep.subr.bf16.mxu0 %v653
    %885 = vmatpush1.bf16.msra.mxu0 %v652
    %886 = vmatprep.subr.bf16.mxu0 0
    %887 = vmatpush2.bf16.msra.mxu0 0
    %888 = vmatprep.subr.bf16.mxu0 0
    %889 = vmatpush2.bf16.msra.mxu0 0
    %890 = vmatprep.subr.bf16.mxu0 0
    %891 = vmatpush2.bf16.msra.mxu0 0
    %892 = vmatprep.subr.bf16.mxu0 0
    %893 = vmatpush2.bf16.msra.mxu0 0
    %894 = vmatprep.subr.bf16.mxu0 0
    %895 = vmatpush2.bf16.msra.mxu0 0
    %896 = vmatprep.subr.bf16.mxu0 0
    %897 = vmatpush2.bf16.msra.mxu0 0
    %898 = vmatprep.subr.bf16.mxu0 0
    %899 = vmatpush2.bf16.msra.mxu0 0
    %900 = vmatprep.subr.bf16.mxu0 0
    %901 = vmatpush2.bf16.msra.mxu0 0
    %902 = vmatprep.mubr.bf16.mxu0 0
    %903 = vmatmul.mubr.bf16.gmra.mxu0 %v828
    %v904 = vpop.f32.mrf.mxu0
    %v905 = vadd.f32 0.0, %v904
    %v906 = vpop.f32.mrf.mxu0
    %v907 = vadd.f32 0.0, %v906
    %v908 = vpop.f32.mrf.mxu0
    %v909 = vpop.f32.mrf.mxu0
    %910 = vdwg.mxu0
    %v911 = vadd.f32 %v824, %v864
    %v912 = vadd.f32 %v825, %v866
    %v913 = vadd.f32 %v826, %v905
    %v914 = vadd.f32 %v827, %v907
    %v915 = vxor.u32 %v911, 2147483648
    %v916 = vmul.f32 %v915, 1.442695
    %v917 = vpow.pop %v916
    %v918 = vadd.f32 %v917, 1.0
    %v919 = vrcp.pop %v918
    %v920 = vmul.f32 1.0, %v919
    %v921 = vxor.u32 %v912, 2147483648
    %v922 = vmul.f32 %v921, 1.442695
    %v923 = vpow.pop %v922
    %v924 = vadd.f32 %v923, 1.0
    %v925 = vrcp.pop %v924
    %v926 = vmul.f32 1.0, %v925
    %v927 = vtanh.pop %v913
    %v928 = vxor.u32 %v914, 2147483648
    %v929 = vmul.f32 %v928, 1.442695
    %v930 = vpow.pop %v929
    %v931 = vadd.f32 %v930, 1.0
    %v932 = vrcp.pop %v931
    %v933 = vmul.f32 1.0, %v932
    %v934 = vmul.f32 %v926, %v821
    %v935 = vmul.f32 %v920, %v927
    %v936 = vadd.f32 %v934, %v935
    %v937 = vtanh.pop %v936
    %v938 = vmul.f32 %v933, %v937
    %v939 = vld [vmem:[#allocation2 + $0x40] sm:$0xff]
    %v940 = vld [vmem:[#allocation2 + $0x48] sm:$0xff]
    %v941 = vld [vmem:[#allocation2 + $0x50] sm:$0xff]
    %v942 = vld [vmem:[#allocation2 + $0x58] sm:$0xff]
    %v943 = vpack.c.bf16 %v938, %v938
    %944 = vmatprep.subr.bf16.mxu0 %v679
    %945 = vmatpush1.bf16.msra.mxu0 %v678
    %946 = vmatprep.subr.bf16.mxu0 %v675
    %947 = vmatpush1.bf16.msra.mxu0 %v674
    %948 = vmatprep.subr.bf16.mxu0 %v671
    %949 = vmatpush1.bf16.msra.mxu0 %v670
    %950 = vmatprep.subr.bf16.mxu0 %v667
    %951 = vmatpush1.bf16.msra.mxu0 %v666
    %952 = vmatprep.subr.bf16.mxu0 %v663
    %953 = vmatpush1.bf16.msra.mxu0 %v662
    %954 = vmatprep.subr.bf16.mxu0 %v659
    %955 = vmatpush1.bf16.msra.mxu0 %v658
    %956 = vmatprep.subr.bf16.mxu0 %v655
    %957 = vmatpush1.bf16.msra.mxu0 %v654
    %958 = vmatprep.subr.bf16.mxu0 %v651
    %959 = vmatpush1.bf16.msra.mxu0 %v650
    %960 = vmatprep.subr.bf16.mxu0 0
    %961 = vmatpush2.bf16.msra.mxu0 0
    %962 = vmatprep.subr.bf16.mxu0 0
    %963 = vmatpush2.bf16.msra.mxu0 0
    %964 = vmatprep.subr.bf16.mxu0 0
    %965 = vmatpush2.bf16.msra.mxu0 0
    %966 = vmatprep.subr.bf16.mxu0 0
    %967 = vmatpush2.bf16.msra.mxu0 0
    %968 = vmatprep.subr.bf16.mxu0 0
    %969 = vmatpush2.bf16.msra.mxu0 0
    %970 = vmatprep.subr.bf16.mxu0 0
    %971 = vmatpush2.bf16.msra.mxu0 0
    %972 = vmatprep.subr.bf16.mxu0 0
    %973 = vmatpush2.bf16.msra.mxu0 0
    %974 = vmatprep.subr.bf16.mxu0 0
    %975 = vmatpush2.bf16.msra.mxu0 0
    %976 = vmatprep.mubr.bf16.mxu0 0
    %977 = vmatmul.mubr.bf16.gmra.mxu0 %v943
    %v978 = vpop.f32.mrf.mxu0
    %v979 = vadd.f32 0.0, %v978
    %v980 = vpop.f32.mrf.mxu0
    %v981 = vadd.f32 0.0, %v980
    %v982 = vpop.f32.mrf.mxu0
    %v983 = vpop.f32.mrf.mxu0
    %984 = vdwg.mxu0
    %985 = vmatprep.subr.bf16.mxu0 %v681
    %986 = vmatpush1.bf16.msra.mxu0 %v680
    %987 = vmatprep.subr.bf16.mxu0 %v677
    %988 = vmatpush1.bf16.msra.mxu0 %v676
    %989 = vmatprep.subr.bf16.mxu0 %v673
    %990 = vmatpush1.bf16.msra.mxu0 %v672
    %991 = vmatprep.subr.bf16.mxu0 %v669
    %992 = vmatpush1.bf16.msra.mxu0 %v668
    %993 = vmatprep.subr.bf16.mxu0 %v665
    %994 = vmatpush1.bf16.msra.mxu0 %v664
    %995 = vmatprep.subr.bf16.mxu0 %v661
    %996 = vmatpush1.bf16.msra.mxu0 %v660
    %997 = vmatprep.subr.bf16.mxu0 %v657
    %998 = vmatpush1.bf16.msra.mxu0 %v656
    %999 = vmatprep.subr.bf16.mxu0 %v653
    %1000 = vmatpush1.bf16.msra.mxu0 %v652
    %1001 = vmatprep.subr.bf16.mxu0 0
    %1002 = vmatpush2.bf16.msra.mxu0 0
    %1003 = vmatprep.subr.bf16.mxu0 0
    %1004 = vmatpush2.bf16.msra.mxu0 0
    %1005 = vmatprep.subr.bf16.mxu0 0
    %1006 = vmatpush2.bf16.msra.mxu0 0
    %1007 = vmatprep.subr.bf16.mxu0 0
    %1008 = vmatpush2.bf16.msra.mxu0 0
    %1009 = vmatprep.subr.bf16.mxu0 0
    %1010 = vmatpush2.bf16.msra.mxu0 0
    %1011 = vmatprep.subr.bf16.mxu0 0
    %1012 = vmatpush2.bf16.msra.mxu0 0
    %1013 = vmatprep.subr.bf16.mxu0 0
    %1014 = vmatpush2.bf16.msra.mxu0 0
    %1015 = vmatprep.subr.bf16.mxu0 0
    %1016 = vmatpush2.bf16.msra.mxu0 0
    %1017 = vmatprep.mubr.bf16.mxu0 0
    %1018 = vmatmul.mubr.bf16.gmra.mxu0 %v943
    %v1019 = vpop.f32.mrf.mxu0
    %v1020 = vadd.f32 0.0, %v1019
    %v1021 = vpop.f32.mrf.mxu0
    %v1022 = vadd.f32 0.0, %v1021
    %v1023 = vpop.f32.mrf.mxu0
    %v1024 = vpop.f32.mrf.mxu0
    %1025 = vdwg.mxu0
    %v1026 = vadd.f32 %v939, %v979
    %v1027 = vadd.f32 %v940, %v981
    %v1028 = vadd.f32 %v941, %v1020
    %v1029 = vadd.f32 %v942, %v1022
    %v1030 = vxor.u32 %v1026, 2147483648
    %v1031 = vmul.f32 %v1030, 1.442695
    %v1032 = vpow.pop %v1031
    %v1033 = vadd.f32 %v1032, 1.0
    %v1034 = vrcp.pop %v1033
    %v1035 = vmul.f32 1.0, %v1034
    %v1036 = vxor.u32 %v1027, 2147483648
    %v1037 = vmul.f32 %v1036, 1.442695
    %v1038 = vpow.pop %v1037
    %v1039 = vadd.f32 %v1038, 1.0
    %v1040 = vrcp.pop %v1039
    %v1041 = vmul.f32 1.0, %v1040
    %v1042 = vtanh.pop %v1028
    %v1043 = vxor.u32 %v1029, 2147483648
    %v1044 = vmul.f32 %v1043, 1.442695
    %v1045 = vpow.pop %v1044
    %v1046 = vadd.f32 %v1045, 1.0
    %v1047 = vrcp.pop %v1046
    %v1048 = vmul.f32 1.0, %v1047
    %v1049 = vmul.f32 %v1041, %v936
    %v1050 = vmul.f32 %v1035, %v1042
    %v1051 = vadd.f32 %v1049, %v1050
    %v1052 = vtanh.pop %v1051
    %v1053 = vmul.f32 %v1048, %v1052
    %v1054 = vld [vmem:[#allocation2 + $0x60] sm:$0xff]
    %v1055 = vld [vmem:[#allocation2 + $0x68] sm:$0xff]
    %v1056 = vld [vmem:[#allocation2 + $0x70] sm:$0xff]
    %v1057 = vld [vmem:[#allocation2 + $0x78] sm:$0xff]
    %v1058 = vpack.c.bf16 %v1053, %v1053
    %1059 = vmatprep.subr.bf16.mxu0 %v679
    %1060 = vmatpush1.bf16.msra.mxu0 %v678
    %1061 = vmatprep.subr.bf16.mxu0 %v675
    %1062 = vmatpush1.bf16.msra.mxu0 %v674
    %1063 = vmatprep.subr.bf16.mxu0 %v671
    %1064 = vmatpush1.bf16.msra.mxu0 %v670
    %1065 = vmatprep.subr.bf16.mxu0 %v667
    %1066 = vmatpush1.bf16.msra.mxu0 %v666
    %1067 = vmatprep.subr.bf16.mxu0 %v663
    %1068 = vmatpush1.bf16.msra.mxu0 %v662
    %1069 = vmatprep.subr.bf16.mxu0 %v659
    %1070 = vmatpush1.bf16.msra.mxu0 %v658
    %1071 = vmatprep.subr.bf16.mxu0 %v655
    %1072 = vmatpush1.bf16.msra.mxu0 %v654
    %1073 = vmatprep.subr.bf16.mxu0 %v651
    %1074 = vmatpush1.bf16.msra.mxu0 %v650
    %1075 = vmatprep.subr.bf16.mxu0 0
    %1076 = vmatpush2.bf16.msra.mxu0 0
    %1077 = vmatprep.subr.bf16.mxu0 0
    %1078 = vmatpush2.bf16.msra.mxu0 0
    %1079 = vmatprep.subr.bf16.mxu0 0
    %1080 = vmatpush2.bf16.msra.mxu0 0
    %1081 = vmatprep.subr.bf16.mxu0 0
    %1082 = vmatpush2.bf16.msra.mxu0 0
    %1083 = vmatprep.subr.bf16.mxu0 0
    %1084 = vmatpush2.bf16.msra.mxu0 0
    %1085 = vmatprep.subr.bf16.mxu0 0
    %1086 = vmatpush2.bf16.msra.mxu0 0
    %1087 = vmatprep.subr.bf16.mxu0 0
    %1088 = vmatpush2.bf16.msra.mxu0 0
    %1089 = vmatprep.subr.bf16.mxu0 0
    %1090 = vmatpush2.bf16.msra.mxu0 0
    %1091 = vmatprep.mubr.bf16.mxu0 0
    %1092 = vmatmul.mubr.bf16.gmra.mxu0 %v1058
    %v1093 = vpop.f32.mrf.mxu0
    %v1094 = vadd.f32 0.0, %v1093
    %v1095 = vpop.f32.mrf.mxu0
    %v1096 = vadd.f32 0.0, %v1095
    %v1097 = vpop.f32.mrf.mxu0
    %v1098 = vpop.f32.mrf.mxu0
    %1099 = vdwg.mxu0
    %1100 = vmatprep.subr.bf16.mxu0 %v681
    %1101 = vmatpush1.bf16.msra.mxu0 %v680
    %1102 = vmatprep.subr.bf16.mxu0 %v677
    %1103 = vmatpush1.bf16.msra.mxu0 %v676
    %1104 = vmatprep.subr.bf16.mxu0 %v673
    %1105 = vmatpush1.bf16.msra.mxu0 %v672
    %1106 = vmatprep.subr.bf16.mxu0 %v669
    %1107 = vmatpush1.bf16.msra.mxu0 %v668
    %1108 = vmatprep.subr.bf16.mxu0 %v665
    %1109 = vmatpush1.bf16.msra.mxu0 %v664
    %1110 = vmatprep.subr.bf16.mxu0 %v661
    %1111 = vmatpush1.bf16.msra.mxu0 %v660
    %1112 = vmatprep.subr.bf16.mxu0 %v657
    %1113 = vmatpush1.bf16.msra.mxu0 %v656
    %1114 = vmatprep.subr.bf16.mxu0 %v653
    %1115 = vmatpush1.bf16.msra.mxu0 %v652
    %1116 = vmatprep.subr.bf16.mxu0 0
    %1117 = vmatpush2.bf16.msra.mxu0 0
    %1118 = vmatprep.subr.bf16.mxu0 0
    %1119 = vmatpush2.bf16.msra.mxu0 0
    %1120 = vmatprep.subr.bf16.mxu0 0
    %1121 = vmatpush2.bf16.msra.mxu0 0
    %1122 = vmatprep.subr.bf16.mxu0 0
    %1123 = vmatpush2.bf16.msra.mxu0 0
    %1124 = vmatprep.subr.bf16.mxu0 0
    %1125 = vmatpush2.bf16.msra.mxu0 0
    %1126 = vmatprep.subr.bf16.mxu0 0
    %1127 = vmatpush2.bf16.msra.mxu0 0
    %1128 = vmatprep.subr.bf16.mxu0 0
    %1129 = vmatpush2.bf16.msra.mxu0 0
    %1130 = vmatprep.subr.bf16.mxu0 0
    %1131 = vmatpush2.bf16.msra.mxu0 0
    %1132 = vmatprep.mubr.bf16.mxu0 0
    %1133 = vmatmul.mubr.bf16.gmra.mxu0 %v1058
    %v1134 = vpop.f32.mrf.mxu0
    %v1135 = vadd.f32 0.0, %v1134
    %v1136 = vpop.f32.mrf.mxu0
    %v1137 = vadd.f32 0.0, %v1136
    %v1138 = vpop.f32.mrf.mxu0
    %v1139 = vpop.f32.mrf.mxu0
    %1140 = vdwg.mxu0
    %v1141 = vadd.f32 %v1054, %v1094
    %v1142 = vadd.f32 %v1055, %v1096
    %v1143 = vadd.f32 %v1056, %v1135
    %v1144 = vadd.f32 %v1057, %v1137
    %v1145 = vxor.u32 %v1141, 2147483648
    %v1146 = vmul.f32 %v1145, 1.442695
    %v1147 = vpow.pop %v1146
    %v1148 = vadd.f32 %v1147, 1.0
    %v1149 = vrcp.pop %v1148
    %v1150 = vmul.f32 1.0, %v1149
    %v1151 = vxor.u32 %v1142, 2147483648
    %v1152 = vmul.f32 %v1151, 1.442695
    %v1153 = vpow.pop %v1152
    %v1154 = vadd.f32 %v1153, 1.0
    %v1155 = vrcp.pop %v1154
    %v1156 = vmul.f32 1.0, %v1155
    %v1157 = vtanh.pop %v1143
    %v1158 = vxor.u32 %v1144, 2147483648
    %v1159 = vmul.f32 %v1158, 1.442695
    %v1160 = vpow.pop %v1159
    %v1161 = vadd.f32 %v1160, 1.0
    %v1162 = vrcp.pop %v1161
    %v1163 = vmul.f32 1.0, %v1162
    %v1164 = vmul.f32 %v1156, %v1051
    %v1165 = vmul.f32 %v1150, %v1157
    %v1166 = vadd.f32 %v1164, %v1165
    %v1167 = vtanh.pop %v1166
    %v1168 = vmul.f32 %v1163, %v1167
    %v1169 = vld [vmem:[#allocation2 + $0x80] sm:$0xff]
    %v1170 = vld [vmem:[#allocation2 + $0x88] sm:$0xff]
    %v1171 = vld [vmem:[#allocation2 + $0x90] sm:$0xff]
    %v1172 = vld [vmem:[#allocation2 + $0x98] sm:$0xff]
    %v1173 = vpack.c.bf16 %v1168, %v1168
    %1174 = vmatprep.subr.bf16.mxu0 %v679
    %1175 = vmatpush1.bf16.msra.mxu0 %v678
    %1176 = vmatprep.subr.bf16.mxu0 %v675
    %1177 = vmatpush1.bf16.msra.mxu0 %v674
    %1178 = vmatprep.subr.bf16.mxu0 %v671
    %1179 = vmatpush1.bf16.msra.mxu0 %v670
    %1180 = vmatprep.subr.bf16.mxu0 %v667
    %1181 = vmatpush1.bf16.msra.mxu0 %v666
    %1182 = vmatprep.subr.bf16.mxu0 %v663
    %1183 = vmatpush1.bf16.msra.mxu0 %v662
    %1184 = vmatprep.subr.bf16.mxu0 %v659
    %1185 = vmatpush1.bf16.msra.mxu0 %v658
    %1186 = vmatprep.subr.bf16.mxu0 %v655
    %1187 = vmatpush1.bf16.msra.mxu0 %v654
    %1188 = vmatprep.subr.bf16.mxu0 %v651
    %1189 = vmatpush1.bf16.msra.mxu0 %v650
    %1190 = vmatprep.subr.bf16.mxu0 0
    %1191 = vmatpush2.bf16.msra.mxu0 0
    %1192 = vmatprep.subr.bf16.mxu0 0
    %1193 = vmatpush2.bf16.msra.mxu0 0
    %1194 = vmatprep.subr.bf16.mxu0 0
    %1195 = vmatpush2.bf16.msra.mxu0 0
    %1196 = vmatprep.subr.bf16.mxu0 0
    %1197 = vmatpush2.bf16.msra.mxu0 0
    %1198 = vmatprep.subr.bf16.mxu0 0
    %1199 = vmatpush2.bf16.msra.mxu0 0
    %1200 = vmatprep.subr.bf16.mxu0 0
    %1201 = vmatpush2.bf16.msra.mxu0 0
    %1202 = vmatprep.subr.bf16.mxu0 0
    %1203 = vmatpush2.bf16.msra.mxu0 0
    %1204 = vmatprep.subr.bf16.mxu0 0
    %1205 = vmatpush2.bf16.msra.mxu0 0
    %1206 = vmatprep.mubr.bf16.mxu0 0
    %1207 = vmatmul.mubr.bf16.gmra.mxu0 %v1173
    %v1208 = vpop.f32.mrf.mxu0
    %v1209 = vadd.f32 0.0, %v1208
    %v1210 = vpop.f32.mrf.mxu0
    %v1211 = vadd.f32 0.0, %v1210
    %v1212 = vpop.f32.mrf.mxu0
    %v1213 = vpop.f32.mrf.mxu0
    %1214 = vdwg.mxu0
    %1215 = vmatprep.subr.bf16.mxu0 %v681
    %1216 = vmatpush1.bf16.msra.mxu0 %v680
    %1217 = vmatprep.subr.bf16.mxu0 %v677
    %1218 = vmatpush1.bf16.msra.mxu0 %v676
    %1219 = vmatprep.subr.bf16.mxu0 %v673
    %1220 = vmatpush1.bf16.msra.mxu0 %v672
    %1221 = vmatprep.subr.bf16.mxu0 %v669
    %1222 = vmatpush1.bf16.msra.mxu0 %v668
    %1223 = vmatprep.subr.bf16.mxu0 %v665
    %1224 = vmatpush1.bf16.msra.mxu0 %v664
    %1225 = vmatprep.subr.bf16.mxu0 %v661
    %1226 = vmatpush1.bf16.msra.mxu0 %v660
    %1227 = vmatprep.subr.bf16.mxu0 %v657
    %1228 = vmatpush1.bf16.msra.mxu0 %v656
    %1229 = vmatprep.subr.bf16.mxu0 %v653
    %1230 = vmatpush1.bf16.msra.mxu0 %v652
    %1231 = vmatprep.subr.bf16.mxu0 0
    %1232 = vmatpush2.bf16.msra.mxu0 0
    %1233 = vmatprep.subr.bf16.mxu0 0
    %1234 = vmatpush2.bf16.msra.mxu0 0
    %1235 = vmatprep.subr.bf16.mxu0 0
    %1236 = vmatpush2.bf16.msra.mxu0 0
    %1237 = vmatprep.subr.bf16.mxu0 0
    %1238 = vmatpush2.bf16.msra.mxu0 0
    %1239 = vmatprep.subr.bf16.mxu0 0
    %1240 = vmatpush2.bf16.msra.mxu0 0
    %1241 = vmatprep.subr.bf16.mxu0 0
    %1242 = vmatpush2.bf16.msra.mxu0 0
    %1243 = vmatprep.subr.bf16.mxu0 0
    %1244 = vmatpush2.bf16.msra.mxu0 0
    %1245 = vmatprep.subr.bf16.mxu0 0
    %1246 = vmatpush2.bf16.msra.mxu0 0
    %1247 = vmatprep.mubr.bf16.mxu0 0
    %1248 = vmatmul.mubr.bf16.gmra.mxu0 %v1173
    %v1249 = vpop.f32.mrf.mxu0
    %v1250 = vadd.f32 0.0, %v1249
    %v1251 = vpop.f32.mrf.mxu0
    %v1252 = vadd.f32 0.0, %v1251
    %v1253 = vpop.f32.mrf.mxu0
    %v1254 = vpop.f32.mrf.mxu0
    %1255 = vdwg.mxu0
    %v1256 = vadd.f32 %v1169, %v1209
    %v1257 = vadd.f32 %v1170, %v1211
    %v1258 = vadd.f32 %v1171, %v1250
    %v1259 = vadd.f32 %v1172, %v1252
    %v1260 = vxor.u32 %v1256, 2147483648
    %v1261 = vmul.f32 %v1260, 1.442695
    %v1262 = vpow.pop %v1261
    %v1263 = vadd.f32 %v1262, 1.0
    %v1264 = vrcp.pop %v1263
    %v1265 = vmul.f32 1.0, %v1264
    %v1266 = vxor.u32 %v1257, 2147483648
    %v1267 = vmul.f32 %v1266, 1.442695
    %v1268 = vpow.pop %v1267
    %v1269 = vadd.f32 %v1268, 1.0
    %v1270 = vrcp.pop %v1269
    %v1271 = vmul.f32 1.0, %v1270
    %v1272 = vtanh.pop %v1258
    %v1273 = vxor.u32 %v1259, 2147483648
    %v1274 = vmul.f32 %v1273, 1.442695
    %v1275 = vpow.pop %v1274
    %v1276 = vadd.f32 %v1275, 1.0
    %v1277 = vrcp.pop %v1276
    %v1278 = vmul.f32 1.0, %v1277
    %v1279 = vmul.f32 %v1271, %v1166
    %v1280 = vmul.f32 %v1265, %v1272
    %v1281 = vadd.f32 %v1279, %v1280
    %v1282 = vtanh.pop %v1281
    %v1283 = vmul.f32 %v1278, %v1282
    %v1284 = vld [vmem:[#allocation2 + $0xa0] sm:$0xff]
    %v1285 = vld [vmem:[#allocation2 + $0xa8] sm:$0xff]
    %v1286 = vld [vmem:[#allocation2 + $0xb0] sm:$0xff]
    %v1287 = vld [vmem:[#allocation2 + $0xb8] sm:$0xff]
    %v1288 = vpack.c.bf16 %v1283, %v1283
    %1289 = vmatprep.subr.bf16.mxu0 %v679
    %1290 = vmatpush1.bf16.msra.mxu0 %v678
    %1291 = vmatprep.subr.bf16.mxu0 %v675
    %1292 = vmatpush1.bf16.msra.mxu0 %v674
    %1293 = vmatprep.subr.bf16.mxu0 %v671
    %1294 = vmatpush1.bf16.msra.mxu0 %v670
    %1295 = vmatprep.subr.bf16.mxu0 %v667
    %1296 = vmatpush1.bf16.msra.mxu0 %v666
    %1297 = vmatprep.subr.bf16.mxu0 %v663
    %1298 = vmatpush1.bf16.msra.mxu0 %v662
    %1299 = vmatprep.subr.bf16.mxu0 %v659
    %1300 = vmatpush1.bf16.msra.mxu0 %v658
    %1301 = vmatprep.subr.bf16.mxu0 %v655
    %1302 = vmatpush1.bf16.msra.mxu0 %v654
    %1303 = vmatprep.subr.bf16.mxu0 %v651
    %1304 = vmatpush1.bf16.msra.mxu0 %v650
    %1305 = vmatprep.subr.bf16.mxu0 0
    %1306 = vmatpush2.bf16.msra.mxu0 0
    %1307 = vmatprep.subr.bf16.mxu0 0
    %1308 = vmatpush2.bf16.msra.mxu0 0
    %1309 = vmatprep.subr.bf16.mxu0 0
    %1310 = vmatpush2.bf16.msra.mxu0 0
    %1311 = vmatprep.subr.bf16.mxu0 0
    %1312 = vmatpush2.bf16.msra.mxu0 0
    %1313 = vmatprep.subr.bf16.mxu0 0
    %1314 = vmatpush2.bf16.msra.mxu0 0
    %1315 = vmatprep.subr.bf16.mxu0 0
    %1316 = vmatpush2.bf16.msra.mxu0 0
    %1317 = vmatprep.subr.bf16.mxu0 0
    %1318 = vmatpush2.bf16.msra.mxu0 0
    %1319 = vmatprep.subr.bf16.mxu0 0
    %1320 = vmatpush2.bf16.msra.mxu0 0
    %1321 = vmatprep.mubr.bf16.mxu0 0
    %1322 = vmatmul.mubr.bf16.gmra.mxu0 %v1288
    %v1323 = vpop.f32.mrf.mxu0
    %v1324 = vadd.f32 0.0, %v1323
    %v1325 = vpop.f32.mrf.mxu0
    %v1326 = vadd.f32 0.0, %v1325
    %v1327 = vpop.f32.mrf.mxu0
    %v1328 = vpop.f32.mrf.mxu0
    %1329 = vdwg.mxu0
    %1330 = vmatprep.subr.bf16.mxu0 %v681
    %1331 = vmatpush1.bf16.msra.mxu0 %v680
    %1332 = vmatprep.subr.bf16.mxu0 %v677
    %1333 = vmatpush1.bf16.msra.mxu0 %v676
    %1334 = vmatprep.subr.bf16.mxu0 %v673
    %1335 = vmatpush1.bf16.msra.mxu0 %v672
    %1336 = vmatprep.subr.bf16.mxu0 %v669
    %1337 = vmatpush1.bf16.msra.mxu0 %v668
    %1338 = vmatprep.subr.bf16.mxu0 %v665
    %1339 = vmatpush1.bf16.msra.mxu0 %v664
    %1340 = vmatprep.subr.bf16.mxu0 %v661
    %1341 = vmatpush1.bf16.msra.mxu0 %v660
    %1342 = vmatprep.subr.bf16.mxu0 %v657
    %1343 = vmatpush1.bf16.msra.mxu0 %v656
    %1344 = vmatprep.subr.bf16.mxu0 %v653
    %1345 = vmatpush1.bf16.msra.mxu0 %v652
    %1346 = vmatprep.subr.bf16.mxu0 0
    %1347 = vmatpush2.bf16.msra.mxu0 0
    %1348 = vmatprep.subr.bf16.mxu0 0
    %1349 = vmatpush2.bf16.msra.mxu0 0
    %1350 = vmatprep.subr.bf16.mxu0 0
    %1351 = vmatpush2.bf16.msra.mxu0 0
    %1352 = vmatprep.subr.bf16.mxu0 0
    %1353 = vmatpush2.bf16.msra.mxu0 0
    %1354 = vmatprep.subr.bf16.mxu0 0
    %1355 = vmatpush2.bf16.msra.mxu0 0
    %1356 = vmatprep.subr.bf16.mxu0 0
    %1357 = vmatpush2.bf16.msra.mxu0 0
    %1358 = vmatprep.subr.bf16.mxu0 0
    %1359 = vmatpush2.bf16.msra.mxu0 0
    %1360 = vmatprep.subr.bf16.mxu0 0
    %1361 = vmatpush2.bf16.msra.mxu0 0
    %1362 = vmatprep.mubr.bf16.mxu0 0
    %1363 = vmatmul.mubr.bf16.gmra.mxu0 %v1288
    %v1364 = vpop.f32.mrf.mxu0
    %v1365 = vadd.f32 0.0, %v1364
    %v1366 = vpop.f32.mrf.mxu0
    %v1367 = vadd.f32 0.0, %v1366
    %v1368 = vpop.f32.mrf.mxu0
    %v1369 = vpop.f32.mrf.mxu0
    %1370 = vdwg.mxu0
    %v1371 = vadd.f32 %v1284, %v1324
    %v1372 = vadd.f32 %v1285, %v1326
    %v1373 = vadd.f32 %v1286, %v1365
    %v1374 = vadd.f32 %v1287, %v1367
    %v1375 = vxor.u32 %v1371, 2147483648
    %v1376 = vmul.f32 %v1375, 1.442695
    %v1377 = vpow.pop %v1376
    %v1378 = vadd.f32 %v1377, 1.0
    %v1379 = vrcp.pop %v1378
    %v1380 = vmul.f32 1.0, %v1379
    %v1381 = vxor.u32 %v1372, 2147483648
    %v1382 = vmul.f32 %v1381, 1.442695
    %v1383 = vpow.pop %v1382
    %v1384 = vadd.f32 %v1383, 1.0
    %v1385 = vrcp.pop %v1384
    %v1386 = vmul.f32 1.0, %v1385
    %v1387 = vtanh.pop %v1373
    %v1388 = vxor.u32 %v1374, 2147483648
    %v1389 = vmul.f32 %v1388, 1.442695
    %v1390 = vpow.pop %v1389
    %v1391 = vadd.f32 %v1390, 1.0
    %v1392 = vrcp.pop %v1391
    %v1393 = vmul.f32 1.0, %v1392
    %v1394 = vmul.f32 %v1386, %v1281
    %v1395 = vmul.f32 %v1380, %v1387
    %v1396 = vadd.f32 %v1394, %v1395
    %v1397 = vtanh.pop %v1396
    %v1398 = vmul.f32 %v1393, %v1397
    %v1399 = vld [vmem:[#allocation2 + $0xc0] sm:$0xff]
    %v1400 = vld [vmem:[#allocation2 + $0xc8] sm:$0xff]
    %v1401 = vld [vmem:[#allocation2 + $0xd0] sm:$0xff]
    %v1402 = vld [vmem:[#allocation2 + $0xd8] sm:$0xff]
    %v1403 = vpack.c.bf16 %v1398, %v1398
    %1404 = vmatprep.subr.bf16.mxu0 %v679
    %1405 = vmatpush1.bf16.msra.mxu0 %v678
    %1406 = vmatprep.subr.bf16.mxu0 %v675
    %1407 = vmatpush1.bf16.msra.mxu0 %v674
    %1408 = vmatprep.subr.bf16.mxu0 %v671
    %1409 = vmatpush1.bf16.msra.mxu0 %v670
    %1410 = vmatprep.subr.bf16.mxu0 %v667
    %1411 = vmatpush1.bf16.msra.mxu0 %v666
    %1412 = vmatprep.subr.bf16.mxu0 %v663
    %1413 = vmatpush1.bf16.msra.mxu0 %v662
    %1414 = vmatprep.subr.bf16.mxu0 %v659
    %1415 = vmatpush1.bf16.msra.mxu0 %v658
    %1416 = vmatprep.subr.bf16.mxu0 %v655
    %1417 = vmatpush1.bf16.msra.mxu0 %v654
    %1418 = vmatprep.subr.bf16.mxu0 %v651
    %1419 = vmatpush1.bf16.msra.mxu0 %v650
    %1420 = vmatprep.subr.bf16.mxu0 0
    %1421 = vmatpush2.bf16.msra.mxu0 0
    %1422 = vmatprep.subr.bf16.mxu0 0
    %1423 = vmatpush2.bf16.msra.mxu0 0
    %1424 = vmatprep.subr.bf16.mxu0 0
    %1425 = vmatpush2.bf16.msra.mxu0 0
    %1426 = vmatprep.subr.bf16.mxu0 0
    %1427 = vmatpush2.bf16.msra.mxu0 0
    %1428 = vmatprep.subr.bf16.mxu0 0
    %1429 = vmatpush2.bf16.msra.mxu0 0
    %1430 = vmatprep.subr.bf16.mxu0 0
    %1431 = vmatpush2.bf16.msra.mxu0 0
    %1432 = vmatprep.subr.bf16.mxu0 0
    %1433 = vmatpush2.bf16.msra.mxu0 0
    %1434 = vmatprep.subr.bf16.mxu0 0
    %1435 = vmatpush2.bf16.msra.mxu0 0
    %1436 = vmatprep.mubr.bf16.mxu0 0
    %1437 = vmatmul.mubr.bf16.gmra.mxu0 %v1403
    %v1438 = vpop.f32.mrf.mxu0
    %v1439 = vadd.f32 0.0, %v1438
    %v1440 = vpop.f32.mrf.mxu0
    %v1441 = vadd.f32 0.0, %v1440
    %v1442 = vpop.f32.mrf.mxu0
    %v1443 = vpop.f32.mrf.mxu0
    %1444 = vdwg.mxu0
    %1445 = vmatprep.subr.bf16.mxu0 %v681
    %1446 = vmatpush1.bf16.msra.mxu0 %v680
    %1447 = vmatprep.subr.bf16.mxu0 %v677
    %1448 = vmatpush1.bf16.msra.mxu0 %v676
    %1449 = vmatprep.subr.bf16.mxu0 %v673
    %1450 = vmatpush1.bf16.msra.mxu0 %v672
    %1451 = vmatprep.subr.bf16.mxu0 %v669
    %1452 = vmatpush1.bf16.msra.mxu0 %v668
    %1453 = vmatprep.subr.bf16.mxu0 %v665
    %1454 = vmatpush1.bf16.msra.mxu0 %v664
    %1455 = vmatprep.subr.bf16.mxu0 %v661
    %1456 = vmatpush1.bf16.msra.mxu0 %v660
    %1457 = vmatprep.subr.bf16.mxu0 %v657
    %1458 = vmatpush1.bf16.msra.mxu0 %v656
    %1459 = vmatprep.subr.bf16.mxu0 %v653
    %1460 = vmatpush1.bf16.msra.mxu0 %v652
    %1461 = vmatprep.subr.bf16.mxu0 0
    %1462 = vmatpush2.bf16.msra.mxu0 0
    %1463 = vmatprep.subr.bf16.mxu0 0
    %1464 = vmatpush2.bf16.msra.mxu0 0
    %1465 = vmatprep.subr.bf16.mxu0 0
    %1466 = vmatpush2.bf16.msra.mxu0 0
    %1467 = vmatprep.subr.bf16.mxu0 0
    %1468 = vmatpush2.bf16.msra.mxu0 0
    %1469 = vmatprep.subr.bf16.mxu0 0
    %1470 = vmatpush2.bf16.msra.mxu0 0
    %1471 = vmatprep.subr.bf16.mxu0 0
    %1472 = vmatpush2.bf16.msra.mxu0 0
    %1473 = vmatprep.subr.bf16.mxu0 0
    %1474 = vmatpush2.bf16.msra.mxu0 0
    %1475 = vmatprep.subr.bf16.mxu0 0
    %1476 = vmatpush2.bf16.msra.mxu0 0
    %1477 = vmatprep.mubr.bf16.mxu0 0
    %1478 = vmatmul.mubr.bf16.gmra.mxu0 %v1403
    %v1479 = vpop.f32.mrf.mxu0
    %v1480 = vadd.f32 0.0, %v1479
    %v1481 = vpop.f32.mrf.mxu0
    %v1482 = vadd.f32 0.0, %v1481
    %v1483 = vpop.f32.mrf.mxu0
    %v1484 = vpop.f32.mrf.mxu0
    %1485 = vdwg.mxu0
    %v1486 = vadd.f32 %v1399, %v1439
    %v1487 = vadd.f32 %v1400, %v1441
    %v1488 = vadd.f32 %v1401, %v1480
    %v1489 = vadd.f32 %v1402, %v1482
    %v1490 = vxor.u32 %v1486, 2147483648
    %v1491 = vmul.f32 %v1490, 1.442695
    %v1492 = vpow.pop %v1491
    %v1493 = vadd.f32 %v1492, 1.0
    %v1494 = vrcp.pop %v1493
    %v1495 = vmul.f32 1.0, %v1494
    %v1496 = vxor.u32 %v1487, 2147483648
    %v1497 = vmul.f32 %v1496, 1.442695
    %v1498 = vpow.pop %v1497
    %v1499 = vadd.f32 %v1498, 1.0
    %v1500 = vrcp.pop %v1499
    %v1501 = vmul.f32 1.0, %v1500
    %v1502 = vtanh.pop %v1488
    %v1503 = vxor.u32 %v1489, 2147483648
    %v1504 = vmul.f32 %v1503, 1.442695
    %v1505 = vpow.pop %v1504
    %v1506 = vadd.f32 %v1505, 1.0
    %v1507 = vrcp.pop %v1506
    %v1508 = vmul.f32 1.0, %v1507
    %v1509 = vmul.f32 %v1501, %v1396
    %v1510 = vmul.f32 %v1495, %v1502
    %v1511 = vadd.f32 %v1509, %v1510
    %v1512 = vtanh.pop %v1511
    %v1513 = vmul.f32 %v1508, %v1512
    %v1514 = vld [vmem:[#allocation2 + $0xe0] sm:$0xff]
    %v1515 = vld [vmem:[#allocation2 + $0xe8] sm:$0xff]
    %v1516 = vld [vmem:[#allocation2 + $0xf0] sm:$0xff]
    %v1517 = vld [vmem:[#allocation2 + $0xf8] sm:$0xff]
    %v1518 = vpack.c.bf16 %v1513, %v1513
    %1519 = vmatprep.subr.bf16.mxu0 %v679
    %1520 = vmatpush1.bf16.msra.mxu0 %v678
    %1521 = vmatprep.subr.bf16.mxu0 %v675
    %1522 = vmatpush1.bf16.msra.mxu0 %v674
    %1523 = vmatprep.subr.bf16.mxu0 %v671
    %1524 = vmatpush1.bf16.msra.mxu0 %v670
    %1525 = vmatprep.subr.bf16.mxu0 %v667
    %1526 = vmatpush1.bf16.msra.mxu0 %v666
    %1527 = vmatprep.subr.bf16.mxu0 %v663
    %1528 = vmatpush1.bf16.msra.mxu0 %v662
    %1529 = vmatprep.subr.bf16.mxu0 %v659
    %1530 = vmatpush1.bf16.msra.mxu0 %v658
    %1531 = vmatprep.subr.bf16.mxu0 %v655
    %1532 = vmatpush1.bf16.msra.mxu0 %v654
    %1533 = vmatprep.subr.bf16.mxu0 %v651
    %1534 = vmatpush1.bf16.msra.mxu0 %v650
    %1535 = vmatprep.subr.bf16.mxu0 0
    %1536 = vmatpush2.bf16.msra.mxu0 0
    %1537 = vmatprep.subr.bf16.mxu0 0
    %1538 = vmatpush2.bf16.msra.mxu0 0
    %1539 = vmatprep.subr.bf16.mxu0 0
    %1540 = vmatpush2.bf16.msra.mxu0 0
    %1541 = vmatprep.subr.bf16.mxu0 0
    %1542 = vmatpush2.bf16.msra.mxu0 0
    %1543 = vmatprep.subr.bf16.mxu0 0
    %1544 = vmatpush2.bf16.msra.mxu0 0
    %1545 = vmatprep.subr.bf16.mxu0 0
    %1546 = vmatpush2.bf16.msra.mxu0 0
    %1547 = vmatprep.subr.bf16.mxu0 0
    %1548 = vmatpush2.bf16.msra.mxu0 0
    %1549 = vmatprep.subr.bf16.mxu0 0
    %1550 = vmatpush2.bf16.msra.mxu0 0
    %1551 = vmatprep.mubr.bf16.mxu0 0
    %1552 = vmatmul.mubr.bf16.gmra.mxu0 %v1518
    %v1553 = vpop.f32.mrf.mxu0
    %v1554 = vadd.f32 0.0, %v1553
    %v1555 = vpop.f32.mrf.mxu0
    %v1556 = vadd.f32 0.0, %v1555
    %v1557 = vpop.f32.mrf.mxu0
    %v1558 = vpop.f32.mrf.mxu0
    %1559 = vdwg.mxu0
    %1560 = vmatprep.subr.bf16.mxu0 %v681
    %1561 = vmatpush1.bf16.msra.mxu0 %v680
    %1562 = vmatprep.subr.bf16.mxu0 %v677
    %1563 = vmatpush1.bf16.msra.mxu0 %v676
    %1564 = vmatprep.subr.bf16.mxu0 %v673
    %1565 = vmatpush1.bf16.msra.mxu0 %v672
    %1566 = vmatprep.subr.bf16.mxu0 %v669
    %1567 = vmatpush1.bf16.msra.mxu0 %v668
    %1568 = vmatprep.subr.bf16.mxu0 %v665
    %1569 = vmatpush1.bf16.msra.mxu0 %v664
    %1570 = vmatprep.subr.bf16.mxu0 %v661
    %1571 = vmatpush1.bf16.msra.mxu0 %v660
    %1572 = vmatprep.subr.bf16.mxu0 %v657
    %1573 = vmatpush1.bf16.msra.mxu0 %v656
    %1574 = vmatprep.subr.bf16.mxu0 %v653
    %1575 = vmatpush1.bf16.msra.mxu0 %v652
    %1576 = vmatprep.subr.bf16.mxu0 0
    %1577 = vmatpush2.bf16.msra.mxu0 0
    %1578 = vmatprep.subr.bf16.mxu0 0
    %1579 = vmatpush2.bf16.msra.mxu0 0
    %1580 = vmatprep.subr.bf16.mxu0 0
    %1581 = vmatpush2.bf16.msra.mxu0 0
    %1582 = vmatprep.subr.bf16.mxu0 0
    %1583 = vmatpush2.bf16.msra.mxu0 0
    %1584 = vmatprep.subr.bf16.mxu0 0
    %1585 = vmatpush2.bf16.msra.mxu0 0
    %1586 = vmatprep.subr.bf16.mxu0 0
    %1587 = vmatpush2.bf16.msra.mxu0 0
    %1588 = vmatprep.subr.bf16.mxu0 0
    %1589 = vmatpush2.bf16.msra.mxu0 0
    %1590 = vmatprep.subr.bf16.mxu0 0
    %1591 = vmatpush2.bf16.msra.mxu0 0
    %1592 = vmatprep.mubr.bf16.mxu0 0
    %1593 = vmatmul.mubr.bf16.gmra.mxu0 %v1518
    %v1594 = vpop.f32.mrf.mxu0
    %v1595 = vadd.f32 0.0, %v1594
    %v1596 = vpop.f32.mrf.mxu0
    %v1597 = vadd.f32 0.0, %v1596
    %v1598 = vpop.f32.mrf.mxu0
    %v1599 = vpop.f32.mrf.mxu0
    %1600 = vdwg.mxu0
    %v1601 = vadd.f32 %v1514, %v1554
    %v1602 = vadd.f32 %v1515, %v1556
    %v1603 = vadd.f32 %v1516, %v1595
    %v1604 = vadd.f32 %v1517, %v1597
    %v1605 = vxor.u32 %v1601, 2147483648
    %v1606 = vmul.f32 %v1605, 1.442695
    %v1607 = vpow.pop %v1606
    %v1608 = vadd.f32 %v1607, 1.0
    %v1609 = vrcp.pop %v1608
    %v1610 = vmul.f32 1.0, %v1609
    %v1611 = vxor.u32 %v1602, 2147483648
    %v1612 = vmul.f32 %v1611, 1.442695
    %v1613 = vpow.pop %v1612
    %v1614 = vadd.f32 %v1613, 1.0
    %v1615 = vrcp.pop %v1614
    %v1616 = vmul.f32 1.0, %v1615
    %v1617 = vtanh.pop %v1603
    %v1618 = vxor.u32 %v1604, 2147483648
    %v1619 = vmul.f32 %v1618, 1.442695
    %v1620 = vpow.pop %v1619
    %v1621 = vadd.f32 %v1620, 1.0
    %v1622 = vrcp.pop %v1621
    %v1623 = vmul.f32 1.0, %v1622
    %v1624 = vmul.f32 %v1616, %v1511
    %v1625 = vmul.f32 %v1610, %v1617
    %v1626 = vadd.f32 %v1624, %v1625
    %v1627 = vtanh.pop %v1626
    %v1628 = vmul.f32 %v1623, %v1627
    %1629 = vst [vmem:[%s10] sm:$0xff] %v1628
    %1630 = vst [vmem:[%s11] sm:$0xff] %v1626
    %v1631 = vpack.c.bf16 %v938, %v823
    %v1632 = vpack.c.bf16 %v1168, %v1053
    %v1633 = vpack.c.bf16 %v1398, %v1283
    %v1634 = vpack.c.bf16 %v1628, %v1513
    %v1635 = vld [vmem:[#allocation7] sm:$0xff]
    %v1636 = vld [vmem:[#allocation7 + $0x8] sm:$0xff]
    %v1637 = vld [vmem:[#allocation7 + $0x10] sm:$0xff]
    %v1638 = vld [vmem:[#allocation7 + $0x18] sm:$0xff]
    %v1639 = vld [vmem:[#allocation7 + $0x20] sm:$0xff]
    %v1640 = vld [vmem:[#allocation7 + $0x28] sm:$0xff]
    %v1641 = vld [vmem:[#allocation7 + $0x30] sm:$0xff]
    %v1642 = vld [vmem:[#allocation7 + $0x38] sm:$0xff]
    %v1643 = vld [vmem:[#allocation7 + $0x40] sm:$0xff]
    %v1644 = vld [vmem:[#allocation7 + $0x48] sm:$0xff]
    %v1645 = vld [vmem:[#allocation7 + $0x50] sm:$0xff]
    %v1646 = vld [vmem:[#allocation7 + $0x58] sm:$0xff]
    %v1647 = vld [vmem:[#allocation7 + $0x60] sm:$0xff]
    %v1648 = vld [vmem:[#allocation7 + $0x68] sm:$0xff]
    %v1649 = vld [vmem:[#allocation7 + $0x70] sm:$0xff]
    %v1650 = vld [vmem:[#allocation7 + $0x78] sm:$0xff]
    %v1651 = vld [vmem:[#allocation7 + $0x80] sm:$0xff]
    %v1652 = vld [vmem:[#allocation7 + $0x88] sm:$0xff]
    %v1653 = vld [vmem:[#allocation7 + $0x90] sm:$0xff]
    %v1654 = vld [vmem:[#allocation7 + $0x98] sm:$0xff]
    %v1655 = vld [vmem:[#allocation7 + $0xa0] sm:$0xff]
    %v1656 = vld [vmem:[#allocation7 + $0xa8] sm:$0xff]
    %v1657 = vld [vmem:[#allocation7 + $0xb0] sm:$0xff]
    %v1658 = vld [vmem:[#allocation7 + $0xb8] sm:$0xff]
    %v1659 = vld [vmem:[#allocation7 + $0xc0] sm:$0xff]
    %v1660 = vld [vmem:[#allocation7 + $0xc8] sm:$0xff]
    %v1661 = vld [vmem:[#allocation7 + $0xd0] sm:$0xff]
    %v1662 = vld [vmem:[#allocation7 + $0xd8] sm:$0xff]
    %v1663 = vld [vmem:[#allocation7 + $0xe0] sm:$0xff]
    %v1664 = vld [vmem:[#allocation7 + $0xe8] sm:$0xff]
    %v1665 = vld [vmem:[#allocation7 + $0xf0] sm:$0xff]
    %v1666 = vld [vmem:[#allocation7 + $0xf8] sm:$0xff]
    %v1667 = vld [vmem:[%s8] sm:$0xf]
    %v1669 = vlaneseq
    %v1670 = vshrl.u32 %v1669, 7
    %v1671 = vsub.s32 0, %v1670
    %v1672 = vrot.slane %v1667, %v1671
    %v1673 = vlaneseq
    %v1674 = vshrl.u32 %v1673, 7
    %v1675 = vsub.s32 1, %v1674
    %v1676 = vrot.slane %v1667, %v1675
    %v1677 = vlaneseq
    %v1678 = vshrl.u32 %v1677, 7
    %v1679 = vsub.s32 2, %v1678
    %v1680 = vrot.slane %v1667, %v1679
    %v1681 = vlaneseq
    %v1682 = vshrl.u32 %v1681, 7
    %v1683 = vsub.s32 3, %v1682
    %v1684 = vrot.slane %v1667, %v1683
    %v1721 = vunpack.c.l.b16 %v1635
    %v1722 = vunpack.c.h.b16 %v1635
    %v1723 = vunpack.c.l.b16 %v1636
    %v1724 = vunpack.c.h.b16 %v1636
    %v1725 = vunpack.c.l.b16 %v1637
    %v1726 = vunpack.c.h.b16 %v1637
    %v1727 = vunpack.c.l.b16 %v1638
    %v1728 = vunpack.c.h.b16 %v1638
    %v1729 = vunpack.c.l.b16 %v1639
    %v1730 = vunpack.c.h.b16 %v1639
    %v1731 = vunpack.c.l.b16 %v1640
    %v1732 = vunpack.c.h.b16 %v1640
    %v1733 = vunpack.c.l.b16 %v1641
    %v1734 = vunpack.c.h.b16 %v1641
    %v1735 = vunpack.c.l.b16 %v1642
    %v1736 = vunpack.c.h.b16 %v1642
    %v1737 = vunpack.c.l.b16 %v1643
    %v1738 = vunpack.c.h.b16 %v1643
    %v1739 = vunpack.c.l.b16 %v1644
    %v1740 = vunpack.c.h.b16 %v1644
    %v1741 = vunpack.c.l.b16 %v1645
    %v1742 = vunpack.c.h.b16 %v1645
    %v1743 = vunpack.c.l.b16 %v1646
    %v1744 = vunpack.c.h.b16 %v1646
    %v1745 = vunpack.c.l.b16 %v1647
    %v1746 = vunpack.c.h.b16 %v1647
    %v1747 = vunpack.c.l.b16 %v1648
    %v1748 = vunpack.c.h.b16 %v1648
    %v1749 = vunpack.c.l.b16 %v1649
    %v1750 = vunpack.c.h.b16 %v1649
    %v1751 = vunpack.c.l.b16 %v1650
    %v1752 = vunpack.c.h.b16 %v1650
    %v1753 = vunpack.c.l.b16 %v1651
    %v1754 = vunpack.c.h.b16 %v1651
    %v1755 = vunpack.c.l.b16 %v1652
    %v1756 = vunpack.c.h.b16 %v1652
    %v1757 = vunpack.c.l.b16 %v1653
    %v1758 = vunpack.c.h.b16 %v1653
    %v1759 = vunpack.c.l.b16 %v1654
    %v1760 = vunpack.c.h.b16 %v1654
    %v1761 = vunpack.c.l.b16 %v1655
    %v1762 = vunpack.c.h.b16 %v1655
    %v1763 = vunpack.c.l.b16 %v1656
    %v1764 = vunpack.c.h.b16 %v1656
    %v1765 = vunpack.c.l.b16 %v1657
    %v1766 = vunpack.c.h.b16 %v1657
    %v1767 = vunpack.c.l.b16 %v1658
    %v1768 = vunpack.c.h.b16 %v1658
    %v1769 = vunpack.c.l.b16 %v1659
    %v1770 = vunpack.c.h.b16 %v1659
    %v1771 = vunpack.c.l.b16 %v1660
    %v1772 = vunpack.c.h.b16 %v1660
    %v1773 = vunpack.c.l.b16 %v1661
    %v1774 = vunpack.c.h.b16 %v1661
    %v1775 = vunpack.c.l.b16 %v1662
    %v1776 = vunpack.c.h.b16 %v1662
    %v1777 = vunpack.c.l.b16 %v1663
    %v1778 = vunpack.c.h.b16 %v1663
    %v1779 = vunpack.c.l.b16 %v1664
    %v1780 = vunpack.c.h.b16 %v1664
    %v1781 = vunpack.c.l.b16 %v1665
    %v1782 = vunpack.c.h.b16 %v1665
    %v1783 = vunpack.c.l.b16 %v1666
    %v1784 = vunpack.c.h.b16 %v1666
    %v1785 = vpack.c.b16 %v1725, %v1721
    %v1786 = vpack.c.b16 %v1726, %v1722
    %v1787 = vpack.c.b16 %v1727, %v1723
    %v1788 = vpack.c.b16 %v1728, %v1724
    %v1789 = vpack.c.b16 %v1733, %v1729
    %v1790 = vpack.c.b16 %v1734, %v1730
    %v1791 = vpack.c.b16 %v1735, %v1731
    %v1792 = vpack.c.b16 %v1736, %v1732
    %v1793 = vpack.c.b16 %v1741, %v1737
    %v1794 = vpack.c.b16 %v1742, %v1738
    %v1795 = vpack.c.b16 %v1743, %v1739
    %v1796 = vpack.c.b16 %v1744, %v1740
    %v1797 = vpack.c.b16 %v1749, %v1745
    %v1798 = vpack.c.b16 %v1750, %v1746
    %v1799 = vpack.c.b16 %v1751, %v1747
    %v1800 = vpack.c.b16 %v1752, %v1748
    %v1801 = vpack.c.b16 %v1757, %v1753
    %v1802 = vpack.c.b16 %v1758, %v1754
    %v1803 = vpack.c.b16 %v1759, %v1755
    %v1804 = vpack.c.b16 %v1760, %v1756
    %v1805 = vpack.c.b16 %v1765, %v1761
    %v1806 = vpack.c.b16 %v1766, %v1762
    %v1807 = vpack.c.b16 %v1767, %v1763
    %v1808 = vpack.c.b16 %v1768, %v1764
    %v1809 = vpack.c.b16 %v1773, %v1769
    %v1810 = vpack.c.b16 %v1774, %v1770
    %v1811 = vpack.c.b16 %v1775, %v1771
    %v1812 = vpack.c.b16 %v1776, %v1772
    %v1813 = vpack.c.b16 %v1781, %v1777
    %v1814 = vpack.c.b16 %v1782, %v1778
    %v1815 = vpack.c.b16 %v1783, %v1779
    %v1816 = vpack.c.b16 %v1784, %v1780
    %1849 = vmatprep.subr.bf16.mxu0 %v1814
    %1850 = vmatpush1.bf16.msra.mxu0 %v1813
    %1851 = vmatprep.subr.bf16.mxu0 %v1810
    %1852 = vmatpush1.bf16.msra.mxu0 %v1809
    %1853 = vmatprep.subr.bf16.mxu0 %v1806
    %1854 = vmatpush1.bf16.msra.mxu0 %v1805
    %1855 = vmatprep.subr.bf16.mxu0 %v1802
    %1856 = vmatpush1.bf16.msra.mxu0 %v1801
    %1857 = vmatprep.subr.bf16.mxu0 %v1798
    %1858 = vmatpush1.bf16.msra.mxu0 %v1797
    %1859 = vmatprep.subr.bf16.mxu0 %v1794
    %1860 = vmatpush1.bf16.msra.mxu0 %v1793
    %1861 = vmatprep.subr.bf16.mxu0 %v1790
    %1862 = vmatpush1.bf16.msra.mxu0 %v1789
    %1863 = vmatprep.subr.bf16.mxu0 %v1786
    %1864 = vmatpush1.bf16.msra.mxu0 %v1785
    %1865 = vmatprep.subr.bf16.mxu0 0
    %1866 = vmatpush2.bf16.msra.mxu0 0
    %1867 = vmatprep.subr.bf16.mxu0 0
    %1868 = vmatpush2.bf16.msra.mxu0 0
    %1869 = vmatprep.subr.bf16.mxu0 0
    %1870 = vmatpush2.bf16.msra.mxu0 0
    %1871 = vmatprep.subr.bf16.mxu0 0
    %1872 = vmatpush2.bf16.msra.mxu0 0
    %1873 = vmatprep.subr.bf16.mxu0 0
    %1874 = vmatpush2.bf16.msra.mxu0 0
    %1875 = vmatprep.subr.bf16.mxu0 0
    %1876 = vmatpush2.bf16.msra.mxu0 0
    %1877 = vmatprep.subr.bf16.mxu0 0
    %1878 = vmatpush2.bf16.msra.mxu0 0
    %1879 = vmatprep.subr.bf16.mxu0 0
    %1880 = vmatpush2.bf16.msra.mxu0 0
    %1881 = vmatprep.mubr.bf16.mxu0 0
    %1882 = vmatmul.mubr.bf16.gmra.mxu0 %v1631
    %v1883 = vpop.f32.mrf.mxu0
    %v1884 = vadd.f32 %v1672, %v1883
    %v1885 = vpop.f32.mrf.mxu0
    %v1886 = vadd.f32 %v1676, %v1885
    %v1887 = vpop.f32.mrf.mxu0
    %v1888 = vadd.f32 %v1672, %v1887
    %v1889 = vpop.f32.mrf.mxu0
    %v1890 = vadd.f32 %v1676, %v1889
    %1891 = vmatprep.mubr.bf16.mxu0 0
    %1892 = vmatmul.mubr.bf16.gmra.mxu0 %v1632
    %v1893 = vpop.f32.mrf.mxu0
    %v1894 = vadd.f32 %v1672, %v1893
    %v1895 = vpop.f32.mrf.mxu0
    %v1896 = vadd.f32 %v1676, %v1895
    %v1897 = vpop.f32.mrf.mxu0
    %v1898 = vadd.f32 %v1672, %v1897
    %v1899 = vpop.f32.mrf.mxu0
    %v1900 = vadd.f32 %v1676, %v1899
    %1901 = vmatprep.mubr.bf16.mxu0 0
    %1902 = vmatmul.mubr.bf16.gmra.mxu0 %v1633
    %v1903 = vpop.f32.mrf.mxu0
    %v1904 = vadd.f32 %v1672, %v1903
    %v1905 = vpop.f32.mrf.mxu0
    %v1906 = vadd.f32 %v1676, %v1905
    %v1907 = vpop.f32.mrf.mxu0
    %v1908 = vadd.f32 %v1672, %v1907
    %v1909 = vpop.f32.mrf.mxu0
    %v1910 = vadd.f32 %v1676, %v1909
    %1911 = vmatprep.mubr.bf16.mxu0 0
    %1912 = vmatmul.mubr.bf16.gmra.mxu0 %v1634
    %v1913 = vpop.f32.mrf.mxu0
    %v1914 = vadd.f32 %v1672, %v1913
    %v1915 = vpop.f32.mrf.mxu0
    %v1916 = vadd.f32 %v1676, %v1915
    %v1917 = vpop.f32.mrf.mxu0
    %v1918 = vadd.f32 %v1672, %v1917
    %v1919 = vpop.f32.mrf.mxu0
    %v1920 = vadd.f32 %v1676, %v1919
    %1921 = vdwg.mxu0
    %1922 = vmatprep.subr.bf16.mxu0 %v1816
    %1923 = vmatpush1.bf16.msra.mxu0 %v1815
    %1924 = vmatprep.subr.bf16.mxu0 %v1812
    %1925 = vmatpush1.bf16.msra.mxu0 %v1811
    %1926 = vmatprep.subr.bf16.mxu0 %v1808
    %1927 = vmatpush1.bf16.msra.mxu0 %v1807
    %1928 = vmatprep.subr.bf16.mxu0 %v1804
    %1929 = vmatpush1.bf16.msra.mxu0 %v1803
    %1930 = vmatprep.subr.bf16.mxu0 %v1800
    %1931 = vmatpush1.bf16.msra.mxu0 %v1799
    %1932 = vmatprep.subr.bf16.mxu0 %v1796
    %1933 = vmatpush1.bf16.msra.mxu0 %v1795
    %1934 = vmatprep.subr.bf16.mxu0 %v1792
    %1935 = vmatpush1.bf16.msra.mxu0 %v1791
    %1936 = vmatprep.subr.bf16.mxu0 %v1788
    %1937 = vmatpush1.bf16.msra.mxu0 %v1787
    %1938 = vmatprep.subr.bf16.mxu0 0
    %1939 = vmatpush2.bf16.msra.mxu0 0
    %1940 = vmatprep.subr.bf16.mxu0 0
    %1941 = vmatpush2.bf16.msra.mxu0 0
    %1942 = vmatprep.subr.bf16.mxu0 0
    %1943 = vmatpush2.bf16.msra.mxu0 0
    %1944 = vmatprep.subr.bf16.mxu0 0
    %1945 = vmatpush2.bf16.msra.mxu0 0
    %1946 = vmatprep.subr.bf16.mxu0 0
    %1947 = vmatpush2.bf16.msra.mxu0 0
    %1948 = vmatprep.subr.bf16.mxu0 0
    %1949 = vmatpush2.bf16.msra.mxu0 0
    %1950 = vmatprep.subr.bf16.mxu0 0
    %1951 = vmatpush2.bf16.msra.mxu0 0
    %1952 = vmatprep.subr.bf16.mxu0 0
    %1953 = vmatpush2.bf16.msra.mxu0 0
    %1954 = vmatprep.mubr.bf16.mxu0 0
    %1955 = vmatmul.mubr.bf16.gmra.mxu0 %v1631
    %v1956 = vpop.f32.mrf.mxu0
    %v1957 = vadd.f32 %v1680, %v1956
    %v1958 = vpop.f32.mrf.mxu0
    %v1959 = vadd.f32 %v1684, %v1958
    %v1960 = vpop.f32.mrf.mxu0
    %v1961 = vadd.f32 %v1680, %v1960
    %v1962 = vpop.f32.mrf.mxu0
    %v1963 = vadd.f32 %v1684, %v1962
    %1964 = vmatprep.mubr.bf16.mxu0 0
    %1965 = vmatmul.mubr.bf16.gmra.mxu0 %v1632
    %v1966 = vpop.f32.mrf.mxu0
    %v1967 = vadd.f32 %v1680, %v1966
    %v1968 = vpop.f32.mrf.mxu0
    %v1969 = vadd.f32 %v1684, %v1968
    %v1970 = vpop.f32.mrf.mxu0
    %v1971 = vadd.f32 %v1680, %v1970
    %v1972 = vpop.f32.mrf.mxu0
    %v1973 = vadd.f32 %v1684, %v1972
    %1974 = vmatprep.mubr.bf16.mxu0 0
    %1975 = vmatmul.mubr.bf16.gmra.mxu0 %v1633
    %v1976 = vpop.f32.mrf.mxu0
    %v1977 = vadd.f32 %v1680, %v1976
    %v1978 = vpop.f32.mrf.mxu0
    %v1979 = vadd.f32 %v1684, %v1978
    %v1980 = vpop.f32.mrf.mxu0
    %v1981 = vadd.f32 %v1680, %v1980
    %v1982 = vpop.f32.mrf.mxu0
    %v1983 = vadd.f32 %v1684, %v1982
    %1984 = vmatprep.mubr.bf16.mxu0 0
    %1985 = vmatmul.mubr.bf16.gmra.mxu0 %v1634
    %v1986 = vpop.f32.mrf.mxu0
    %v1987 = vadd.f32 %v1680, %v1986
    %v1988 = vpop.f32.mrf.mxu0
    %v1989 = vadd.f32 %v1684, %v1988
    %v1990 = vpop.f32.mrf.mxu0
    %v1991 = vadd.f32 %v1680, %v1990
    %v1992 = vpop.f32.mrf.mxu0
    %v1993 = vadd.f32 %v1684, %v1992
    %1994 = vdwg.mxu0
    %1995 = vst [vmem:[#allocation2] sm:$0xff] %v1884
    %1996 = vst [vmem:[#allocation2 + $0x8] sm:$0xff] %v1886
    %1997 = vst [vmem:[#allocation2 + $0x10] sm:$0xff] %v1957
    %1998 = vst [vmem:[#allocation2 + $0x18] sm:$0xff] %v1959
    %1999 = vst [vmem:[#allocation2 + $0x20] sm:$0xff] %v1888
    %2000 = vst [vmem:[#allocation2 + $0x28] sm:$0xff] %v1890
    %2001 = vst [vmem:[#allocation2 + $0x30] sm:$0xff] %v1961
    %2002 = vst [vmem:[#allocation2 + $0x38] sm:$0xff] %v1963
    %2003 = vst [vmem:[#allocation2 + $0x40] sm:$0xff] %v1894
    %2004 = vst [vmem:[#allocation2 + $0x48] sm:$0xff] %v1896
    %2005 = vst [vmem:[#allocation2 + $0x50] sm:$0xff] %v1967
    %2006 = vst [vmem:[#allocation2 + $0x58] sm:$0xff] %v1969
    %2007 = vst [vmem:[#allocation2 + $0x60] sm:$0xff] %v1898
    %2008 = vst [vmem:[#allocation2 + $0x68] sm:$0xff] %v1900
    %2009 = vst [vmem:[#allocation2 + $0x70] sm:$0xff] %v1971
    %2010 = vst [vmem:[#allocation2 + $0x78] sm:$0xff] %v1973
    %2011 = vst [vmem:[#allocation2 + $0x80] sm:$0xff] %v1904
    %2012 = vst [vmem:[#allocation2 + $0x88] sm:$0xff] %v1906
    %2013 = vst [vmem:[#allocation2 + $0x90] sm:$0xff] %v1977
    %2014 = vst [vmem:[#allocation2 + $0x98] sm:$0xff] %v1979
    %2015 = vst [vmem:[#allocation2 + $0xa0] sm:$0xff] %v1908
    %2016 = vst [vmem:[#allocation2 + $0xa8] sm:$0xff] %v1910
    %2017 = vst [vmem:[#allocation2 + $0xb0] sm:$0xff] %v1981
    %2018 = vst [vmem:[#allocation2 + $0xb8] sm:$0xff] %v1983
    %2019 = vst [vmem:[#allocation2 + $0xc0] sm:$0xff] %v1914
    %2020 = vst [vmem:[#allocation2 + $0xc8] sm:$0xff] %v1916
    %2021 = vst [vmem:[#allocation2 + $0xd0] sm:$0xff] %v1987
    %2022 = vst [vmem:[#allocation2 + $0xd8] sm:$0xff] %v1989
    %2023 = vst [vmem:[#allocation2 + $0xe0] sm:$0xff] %v1918
    %2024 = vst [vmem:[#allocation2 + $0xe8] sm:$0xff] %v1920
    %2025 = vst [vmem:[#allocation2 + $0xf0] sm:$0xff] %v1991
    %2026 = vst [vmem:[#allocation2 + $0xf8] sm:$0xff] %v1993
    %v2027 = vld [vmem:[%s1 + $0x8] sm:$0xff]
    %v2028 = vld [vmem:[%s2 + $0x8] sm:$0xff]
    %v2029 = vld [vmem:[#allocation2] sm:$0xff]
    %v2030 = vld [vmem:[#allocation2 + $0x8] sm:$0xff]
    %v2031 = vld [vmem:[#allocation2 + $0x10] sm:$0xff]
    %v2032 = vld [vmem:[#allocation2 + $0x18] sm:$0xff]
    %v2033 = vpack.c.bf16 %v2027, %v2027
    %v2034 = vld [vmem:[#allocation8] sm:$0xff]
    %v2035 = vld [vmem:[#allocation8 + $0x8] sm:$0xff]
    %v2036 = vld [vmem:[#allocation8 + $0x10] sm:$0xff]
    %v2037 = vld [vmem:[#allocation8 + $0x18] sm:$0xff]
    %v2038 = vld [vmem:[#allocation8 + $0x20] sm:$0xff]
    %v2039 = vld [vmem:[#allocation8 + $0x28] sm:$0xff]
    %v2040 = vld [vmem:[#allocation8 + $0x30] sm:$0xff]
    %v2041 = vld [vmem:[#allocation8 + $0x38] sm:$0xff]
    %v2042 = vld [vmem:[#allocation8 + $0x40] sm:$0xff]
    %v2043 = vld [vmem:[#allocation8 + $0x48] sm:$0xff]
    %v2044 = vld [vmem:[#allocation8 + $0x50] sm:$0xff]
    %v2045 = vld [vmem:[#allocation8 + $0x58] sm:$0xff]
    %v2046 = vld [vmem:[#allocation8 + $0x60] sm:$0xff]
    %v2047 = vld [vmem:[#allocation8 + $0x68] sm:$0xff]
    %v2048 = vld [vmem:[#allocation8 + $0x70] sm:$0xff]
    %v2049 = vld [vmem:[#allocation8 + $0x78] sm:$0xff]
    %v2050 = vld [vmem:[#allocation8 + $0x80] sm:$0xff]
    %v2051 = vld [vmem:[#allocation8 + $0x88] sm:$0xff]
    %v2052 = vld [vmem:[#allocation8 + $0x90] sm:$0xff]
    %v2053 = vld [vmem:[#allocation8 + $0x98] sm:$0xff]
    %v2054 = vld [vmem:[#allocation8 + $0xa0] sm:$0xff]
    %v2055 = vld [vmem:[#allocation8 + $0xa8] sm:$0xff]
    %v2056 = vld [vmem:[#allocation8 + $0xb0] sm:$0xff]
    %v2057 = vld [vmem:[#allocation8 + $0xb8] sm:$0xff]
    %v2058 = vld [vmem:[#allocation8 + $0xc0] sm:$0xff]
    %v2059 = vld [vmem:[#allocation8 + $0xc8] sm:$0xff]
    %v2060 = vld [vmem:[#allocation8 + $0xd0] sm:$0xff]
    %v2061 = vld [vmem:[#allocation8 + $0xd8] sm:$0xff]
    %v2062 = vld [vmem:[#allocation8 + $0xe0] sm:$0xff]
    %v2063 = vld [vmem:[#allocation8 + $0xe8] sm:$0xff]
    %v2064 = vld [vmem:[#allocation8 + $0xf0] sm:$0xff]
    %v2065 = vld [vmem:[#allocation8 + $0xf8] sm:$0xff]
    %v2098 = vunpack.c.l.b16 %v2034
    %v2099 = vunpack.c.h.b16 %v2034
    %v2100 = vunpack.c.l.b16 %v2035
    %v2101 = vunpack.c.h.b16 %v2035
    %v2102 = vunpack.c.l.b16 %v2036
    %v2103 = vunpack.c.h.b16 %v2036
    %v2104 = vunpack.c.l.b16 %v2037
    %v2105 = vunpack.c.h.b16 %v2037
    %v2106 = vunpack.c.l.b16 %v2038
    %v2107 = vunpack.c.h.b16 %v2038
    %v2108 = vunpack.c.l.b16 %v2039
    %v2109 = vunpack.c.h.b16 %v2039
    %v2110 = vunpack.c.l.b16 %v2040
    %v2111 = vunpack.c.h.b16 %v2040
    %v2112 = vunpack.c.l.b16 %v2041
    %v2113 = vunpack.c.h.b16 %v2041
    %v2114 = vunpack.c.l.b16 %v2042
    %v2115 = vunpack.c.h.b16 %v2042
    %v2116 = vunpack.c.l.b16 %v2043
    %v2117 = vunpack.c.h.b16 %v2043
    %v2118 = vunpack.c.l.b16 %v2044
    %v2119 = vunpack.c.h.b16 %v2044
    %v2120 = vunpack.c.l.b16 %v2045
    %v2121 = vunpack.c.h.b16 %v2045
    %v2122 = vunpack.c.l.b16 %v2046
    %v2123 = vunpack.c.h.b16 %v2046
    %v2124 = vunpack.c.l.b16 %v2047
    %v2125 = vunpack.c.h.b16 %v2047
    %v2126 = vunpack.c.l.b16 %v2048
    %v2127 = vunpack.c.h.b16 %v2048
    %v2128 = vunpack.c.l.b16 %v2049
    %v2129 = vunpack.c.h.b16 %v2049
    %v2130 = vunpack.c.l.b16 %v2050
    %v2131 = vunpack.c.h.b16 %v2050
    %v2132 = vunpack.c.l.b16 %v2051
    %v2133 = vunpack.c.h.b16 %v2051
    %v2134 = vunpack.c.l.b16 %v2052
    %v2135 = vunpack.c.h.b16 %v2052
    %v2136 = vunpack.c.l.b16 %v2053
    %v2137 = vunpack.c.h.b16 %v2053
    %v2138 = vunpack.c.l.b16 %v2054
    %v2139 = vunpack.c.h.b16 %v2054
    %v2140 = vunpack.c.l.b16 %v2055
    %v2141 = vunpack.c.h.b16 %v2055
    %v2142 = vunpack.c.l.b16 %v2056
    %v2143 = vunpack.c.h.b16 %v2056
    %v2144 = vunpack.c.l.b16 %v2057
    %v2145 = vunpack.c.h.b16 %v2057
    %v2146 = vunpack.c.l.b16 %v2058
    %v2147 = vunpack.c.h.b16 %v2058
    %v2148 = vunpack.c.l.b16 %v2059
    %v2149 = vunpack.c.h.b16 %v2059
    %v2150 = vunpack.c.l.b16 %v2060
    %v2151 = vunpack.c.h.b16 %v2060
    %v2152 = vunpack.c.l.b16 %v2061
    %v2153 = vunpack.c.h.b16 %v2061
    %v2154 = vunpack.c.l.b16 %v2062
    %v2155 = vunpack.c.h.b16 %v2062
    %v2156 = vunpack.c.l.b16 %v2063
    %v2157 = vunpack.c.h.b16 %v2063
    %v2158 = vunpack.c.l.b16 %v2064
    %v2159 = vunpack.c.h.b16 %v2064
    %v2160 = vunpack.c.l.b16 %v2065
    %v2161 = vunpack.c.h.b16 %v2065
    %v2162 = vpack.c.b16 %v2102, %v2098
    %v2163 = vpack.c.b16 %v2103, %v2099
    %v2164 = vpack.c.b16 %v2104, %v2100
    %v2165 = vpack.c.b16 %v2105, %v2101
    %v2166 = vpack.c.b16 %v2110, %v2106
    %v2167 = vpack.c.b16 %v2111, %v2107
    %v2168 = vpack.c.b16 %v2112, %v2108
    %v2169 = vpack.c.b16 %v2113, %v2109
    %v2170 = vpack.c.b16 %v2118, %v2114
    %v2171 = vpack.c.b16 %v2119, %v2115
    %v2172 = vpack.c.b16 %v2120, %v2116
    %v2173 = vpack.c.b16 %v2121, %v2117
    %v2174 = vpack.c.b16 %v2126, %v2122
    %v2175 = vpack.c.b16 %v2127, %v2123
    %v2176 = vpack.c.b16 %v2128, %v2124
    %v2177 = vpack.c.b16 %v2129, %v2125
    %v2178 = vpack.c.b16 %v2134, %v2130
    %v2179 = vpack.c.b16 %v2135, %v2131
    %v2180 = vpack.c.b16 %v2136, %v2132
    %v2181 = vpack.c.b16 %v2137, %v2133
    %v2182 = vpack.c.b16 %v2142, %v2138
    %v2183 = vpack.c.b16 %v2143, %v2139
    %v2184 = vpack.c.b16 %v2144, %v2140
    %v2185 = vpack.c.b16 %v2145, %v2141
    %v2186 = vpack.c.b16 %v2150, %v2146
    %v2187 = vpack.c.b16 %v2151, %v2147
    %v2188 = vpack.c.b16 %v2152, %v2148
    %v2189 = vpack.c.b16 %v2153, %v2149
    %v2190 = vpack.c.b16 %v2158, %v2154
    %v2191 = vpack.c.b16 %v2159, %v2155
    %v2192 = vpack.c.b16 %v2160, %v2156
    %v2193 = vpack.c.b16 %v2161, %v2157
    %2226 = vmatprep.subr.bf16.mxu0 %v2191
    %2227 = vmatpush1.bf16.msra.mxu0 %v2190
    %2228 = vmatprep.subr.bf16.mxu0 %v2187
    %2229 = vmatpush1.bf16.msra.mxu0 %v2186
    %2230 = vmatprep.subr.bf16.mxu0 %v2183
    %2231 = vmatpush1.bf16.msra.mxu0 %v2182
    %2232 = vmatprep.subr.bf16.mxu0 %v2179
    %2233 = vmatpush1.bf16.msra.mxu0 %v2178
    %2234 = vmatprep.subr.bf16.mxu0 %v2175
    %2235 = vmatpush1.bf16.msra.mxu0 %v2174
    %2236 = vmatprep.subr.bf16.mxu0 %v2171
    %2237 = vmatpush1.bf16.msra.mxu0 %v2170
    %2238 = vmatprep.subr.bf16.mxu0 %v2167
    %2239 = vmatpush1.bf16.msra.mxu0 %v2166
    %2240 = vmatprep.subr.bf16.mxu0 %v2163
    %2241 = vmatpush1.bf16.msra.mxu0 %v2162
    %2242 = vmatprep.subr.bf16.mxu0 0
    %2243 = vmatpush2.bf16.msra.mxu0 0
    %2244 = vmatprep.subr.bf16.mxu0 0
    %2245 = vmatpush2.bf16.msra.mxu0 0
    %2246 = vmatprep.subr.bf16.mxu0 0
    %2247 = vmatpush2.bf16.msra.mxu0 0
    %2248 = vmatprep.subr.bf16.mxu0 0
    %2249 = vmatpush2.bf16.msra.mxu0 0
    %2250 = vmatprep.subr.bf16.mxu0 0
    %2251 = vmatpush2.bf16.msra.mxu0 0
    %2252 = vmatprep.subr.bf16.mxu0 0
    %2253 = vmatpush2.bf16.msra.mxu0 0
    %2254 = vmatprep.subr.bf16.mxu0 0
    %2255 = vmatpush2.bf16.msra.mxu0 0
    %2256 = vmatprep.subr.bf16.mxu0 0
    %2257 = vmatpush2.bf16.msra.mxu0 0
    %2258 = vmatprep.mubr.bf16.mxu0 0
    %2259 = vmatmul.mubr.bf16.gmra.mxu0 %v2033
    %v2260 = vpop.f32.mrf.mxu0
    %v2261 = vadd.f32 0.0, %v2260
    %v2262 = vpop.f32.mrf.mxu0
    %v2263 = vadd.f32 0.0, %v2262
    %v2264 = vpop.f32.mrf.mxu0
    %v2265 = vpop.f32.mrf.mxu0
    %2266 = vdwg.mxu0
    %2267 = vmatprep.subr.bf16.mxu0 %v2193
    %2268 = vmatpush1.bf16.msra.mxu0 %v2192
    %2269 = vmatprep.subr.bf16.mxu0 %v2189
    %2270 = vmatpush1.bf16.msra.mxu0 %v2188
    %2271 = vmatprep.subr.bf16.mxu0 %v2185
    %2272 = vmatpush1.bf16.msra.mxu0 %v2184
    %2273 = vmatprep.subr.bf16.mxu0 %v2181
    %2274 = vmatpush1.bf16.msra.mxu0 %v2180
    %2275 = vmatprep.subr.bf16.mxu0 %v2177
    %2276 = vmatpush1.bf16.msra.mxu0 %v2176
    %2277 = vmatprep.subr.bf16.mxu0 %v2173
    %2278 = vmatpush1.bf16.msra.mxu0 %v2172
    %2279 = vmatprep.subr.bf16.mxu0 %v2169
    %2280 = vmatpush1.bf16.msra.mxu0 %v2168
    %2281 = vmatprep.subr.bf16.mxu0 %v2165
    %2282 = vmatpush1.bf16.msra.mxu0 %v2164
    %2283 = vmatprep.subr.bf16.mxu0 0
    %2284 = vmatpush2.bf16.msra.mxu0 0
    %2285 = vmatprep.subr.bf16.mxu0 0
    %2286 = vmatpush2.bf16.msra.mxu0 0
    %2287 = vmatprep.subr.bf16.mxu0 0
    %2288 = vmatpush2.bf16.msra.mxu0 0
    %2289 = vmatprep.subr.bf16.mxu0 0
    %2290 = vmatpush2.bf16.msra.mxu0 0
    %2291 = vmatprep.subr.bf16.mxu0 0
    %2292 = vmatpush2.bf16.msra.mxu0 0
    %2293 = vmatprep.subr.bf16.mxu0 0
    %2294 = vmatpush2.bf16.msra.mxu0 0
    %2295 = vmatprep.subr.bf16.mxu0 0
    %2296 = vmatpush2.bf16.msra.mxu0 0
    %2297 = vmatprep.subr.bf16.mxu0 0
    %2298 = vmatpush2.bf16.msra.mxu0 0
    %2299 = vmatprep.mubr.bf16.mxu0 0
    %2300 = vmatmul.mubr.bf16.gmra.mxu0 %v2033
    %v2301 = vpop.f32.mrf.mxu0
    %v2302 = vadd.f32 0.0, %v2301
    %v2303 = vpop.f32.mrf.mxu0
    %v2304 = vadd.f32 0.0, %v2303
    %v2305 = vpop.f32.mrf.mxu0
    %v2306 = vpop.f32.mrf.mxu0
    %2307 = vdwg.mxu0
    %v2308 = vadd.f32 %v2029, %v2261
    %v2309 = vadd.f32 %v2030, %v2263
    %v2310 = vadd.f32 %v2031, %v2302
    %v2311 = vadd.f32 %v2032, %v2304
    %v2312 = vxor.u32 %v2308, 2147483648
    %v2313 = vmul.f32 %v2312, 1.442695
    %v2314 = vpow.pop %v2313
    %v2315 = vadd.f32 %v2314, 1.0
    %v2316 = vrcp.pop %v2315
    %v2317 = vmul.f32 1.0, %v2316
    %v2318 = vxor.u32 %v2309, 2147483648
    %v2319 = vmul.f32 %v2318, 1.442695
    %v2320 = vpow.pop %v2319
    %v2321 = vadd.f32 %v2320, 1.0
    %v2322 = vrcp.pop %v2321
    %v2323 = vmul.f32 1.0, %v2322
    %v2324 = vtanh.pop %v2310
    %v2325 = vxor.u32 %v2311, 2147483648
    %v2326 = vmul.f32 %v2325, 1.442695
    %v2327 = vpow.pop %v2326
    %v2328 = vadd.f32 %v2327, 1.0
    %v2329 = vrcp.pop %v2328
    %v2330 = vmul.f32 1.0, %v2329
    %v2331 = vmul.f32 %v2323, %v2028
    %v2332 = vmul.f32 %v2317, %v2324
    %v2333 = vadd.f32 %v2331, %v2332
    %v2334 = vtanh.pop %v2333
    %v2335 = vmul.f32 %v2330, %v2334
    %v2336 = vld [vmem:[#allocation2 + $0x20] sm:$0xff]
    %v2337 = vld [vmem:[#allocation2 + $0x28] sm:$0xff]
    %v2338 = vld [vmem:[#allocation2 + $0x30] sm:$0xff]
    %v2339 = vld [vmem:[#allocation2 + $0x38] sm:$0xff]
    %v2340 = vpack.c.bf16 %v2335, %v2335
    %2341 = vmatprep.subr.bf16.mxu0 %v2191
    %2342 = vmatpush1.bf16.msra.mxu0 %v2190
    %2343 = vmatprep.subr.bf16.mxu0 %v2187
    %2344 = vmatpush1.bf16.msra.mxu0 %v2186
    %2345 = vmatprep.subr.bf16.mxu0 %v2183
    %2346 = vmatpush1.bf16.msra.mxu0 %v2182
    %2347 = vmatprep.subr.bf16.mxu0 %v2179
    %2348 = vmatpush1.bf16.msra.mxu0 %v2178
    %2349 = vmatprep.subr.bf16.mxu0 %v2175
    %2350 = vmatpush1.bf16.msra.mxu0 %v2174
    %2351 = vmatprep.subr.bf16.mxu0 %v2171
    %2352 = vmatpush1.bf16.msra.mxu0 %v2170
    %2353 = vmatprep.subr.bf16.mxu0 %v2167
    %2354 = vmatpush1.bf16.msra.mxu0 %v2166
    %2355 = vmatprep.subr.bf16.mxu0 %v2163
    %2356 = vmatpush1.bf16.msra.mxu0 %v2162
    %2357 = vmatprep.subr.bf16.mxu0 0
    %2358 = vmatpush2.bf16.msra.mxu0 0
    %2359 = vmatprep.subr.bf16.mxu0 0
    %2360 = vmatpush2.bf16.msra.mxu0 0
    %2361 = vmatprep.subr.bf16.mxu0 0
    %2362 = vmatpush2.bf16.msra.mxu0 0
    %2363 = vmatprep.subr.bf16.mxu0 0
    %2364 = vmatpush2.bf16.msra.mxu0 0
    %2365 = vmatprep.subr.bf16.mxu0 0
    %2366 = vmatpush2.bf16.msra.mxu0 0
    %2367 = vmatprep.subr.bf16.mxu0 0
    %2368 = vmatpush2.bf16.msra.mxu0 0
    %2369 = vmatprep.subr.bf16.mxu0 0
    %2370 = vmatpush2.bf16.msra.mxu0 0
    %2371 = vmatprep.subr.bf16.mxu0 0
    %2372 = vmatpush2.bf16.msra.mxu0 0
    %2373 = vmatprep.mubr.bf16.mxu0 0
    %2374 = vmatmul.mubr.bf16.gmra.mxu0 %v2340
    %v2375 = vpop.f32.mrf.mxu0
    %v2376 = vadd.f32 0.0, %v2375
    %v2377 = vpop.f32.mrf.mxu0
    %v2378 = vadd.f32 0.0, %v2377
    %v2379 = vpop.f32.mrf.mxu0
    %v2380 = vpop.f32.mrf.mxu0
    %2381 = vdwg.mxu0
    %2382 = vmatprep.subr.bf16.mxu0 %v2193
    %2383 = vmatpush1.bf16.msra.mxu0 %v2192
    %2384 = vmatprep.subr.bf16.mxu0 %v2189
    %2385 = vmatpush1.bf16.msra.mxu0 %v2188
    %2386 = vmatprep.subr.bf16.mxu0 %v2185
    %2387 = vmatpush1.bf16.msra.mxu0 %v2184
    %2388 = vmatprep.subr.bf16.mxu0 %v2181
    %2389 = vmatpush1.bf16.msra.mxu0 %v2180
    %2390 = vmatprep.subr.bf16.mxu0 %v2177
    %2391 = vmatpush1.bf16.msra.mxu0 %v2176
    %2392 = vmatprep.subr.bf16.mxu0 %v2173
    %2393 = vmatpush1.bf16.msra.mxu0 %v2172
    %2394 = vmatprep.subr.bf16.mxu0 %v2169
    %2395 = vmatpush1.bf16.msra.mxu0 %v2168
    %2396 = vmatprep.subr.bf16.mxu0 %v2165
    %2397 = vmatpush1.bf16.msra.mxu0 %v2164
    %2398 = vmatprep.subr.bf16.mxu0 0
    %2399 = vmatpush2.bf16.msra.mxu0 0
    %2400 = vmatprep.subr.bf16.mxu0 0
    %2401 = vmatpush2.bf16.msra.mxu0 0
    %2402 = vmatprep.subr.bf16.mxu0 0
    %2403 = vmatpush2.bf16.msra.mxu0 0
    %2404 = vmatprep.subr.bf16.mxu0 0
    %2405 = vmatpush2.bf16.msra.mxu0 0
    %2406 = vmatprep.subr.bf16.mxu0 0
    %2407 = vmatpush2.bf16.msra.mxu0 0
    %2408 = vmatprep.subr.bf16.mxu0 0
    %2409 = vmatpush2.bf16.msra.mxu0 0
    %2410 = vmatprep.subr.bf16.mxu0 0
    %2411 = vmatpush2.bf16.msra.mxu0 0
    %2412 = vmatprep.subr.bf16.mxu0 0
    %2413 = vmatpush2.bf16.msra.mxu0 0
    %2414 = vmatprep.mubr.bf16.mxu0 0
    %2415 = vmatmul.mubr.bf16.gmra.mxu0 %v2340
    %v2416 = vpop.f32.mrf.mxu0
    %v2417 = vadd.f32 0.0, %v2416
    %v2418 = vpop.f32.mrf.mxu0
    %v2419 = vadd.f32 0.0, %v2418
    %v2420 = vpop.f32.mrf.mxu0
    %v2421 = vpop.f32.mrf.mxu0
    %2422 = vdwg.mxu0
    %v2423 = vadd.f32 %v2336, %v2376
    %v2424 = vadd.f32 %v2337, %v2378
    %v2425 = vadd.f32 %v2338, %v2417
    %v2426 = vadd.f32 %v2339, %v2419
    %v2427 = vxor.u32 %v2423, 2147483648
    %v2428 = vmul.f32 %v2427, 1.442695
    %v2429 = vpow.pop %v2428
    %v2430 = vadd.f32 %v2429, 1.0
    %v2431 = vrcp.pop %v2430
    %v2432 = vmul.f32 1.0, %v2431
    %v2433 = vxor.u32 %v2424, 2147483648
    %v2434 = vmul.f32 %v2433, 1.442695
    %v2435 = vpow.pop %v2434
    %v2436 = vadd.f32 %v2435, 1.0
    %v2437 = vrcp.pop %v2436
    %v2438 = vmul.f32 1.0, %v2437
    %v2439 = vtanh.pop %v2425
    %v2440 = vxor.u32 %v2426, 2147483648
    %v2441 = vmul.f32 %v2440, 1.442695
    %v2442 = vpow.pop %v2441
    %v2443 = vadd.f32 %v2442, 1.0
    %v2444 = vrcp.pop %v2443
    %v2445 = vmul.f32 1.0, %v2444
    %v2446 = vmul.f32 %v2438, %v2333
    %v2447 = vmul.f32 %v2432, %v2439
    %v2448 = vadd.f32 %v2446, %v2447
    %v2449 = vtanh.pop %v2448
    %v2450 = vmul.f32 %v2445, %v2449
    %v2451 = vld [vmem:[#allocation2 + $0x40] sm:$0xff]
    %v2452 = vld [vmem:[#allocation2 + $0x48] sm:$0xff]
    %v2453 = vld [vmem:[#allocation2 + $0x50] sm:$0xff]
    %v2454 = vld [vmem:[#allocation2 + $0x58] sm:$0xff]
    %v2455 = vpack.c.bf16 %v2450, %v2450
    %2456 = vmatprep.subr.bf16.mxu0 %v2191
    %2457 = vmatpush1.bf16.msra.mxu0 %v2190
    %2458 = vmatprep.subr.bf16.mxu0 %v2187
    %2459 = vmatpush1.bf16.msra.mxu0 %v2186
    %2460 = vmatprep.subr.bf16.mxu0 %v2183
    %2461 = vmatpush1.bf16.msra.mxu0 %v2182
    %2462 = vmatprep.subr.bf16.mxu0 %v2179
    %2463 = vmatpush1.bf16.msra.mxu0 %v2178
    %2464 = vmatprep.subr.bf16.mxu0 %v2175
    %2465 = vmatpush1.bf16.msra.mxu0 %v2174
    %2466 = vmatprep.subr.bf16.mxu0 %v2171
    %2467 = vmatpush1.bf16.msra.mxu0 %v2170
    %2468 = vmatprep.subr.bf16.mxu0 %v2167
    %2469 = vmatpush1.bf16.msra.mxu0 %v2166
    %2470 = vmatprep.subr.bf16.mxu0 %v2163
    %2471 = vmatpush1.bf16.msra.mxu0 %v2162
    %2472 = vmatprep.subr.bf16.mxu0 0
    %2473 = vmatpush2.bf16.msra.mxu0 0
    %2474 = vmatprep.subr.bf16.mxu0 0
    %2475 = vmatpush2.bf16.msra.mxu0 0
    %2476 = vmatprep.subr.bf16.mxu0 0
    %2477 = vmatpush2.bf16.msra.mxu0 0
    %2478 = vmatprep.subr.bf16.mxu0 0
    %2479 = vmatpush2.bf16.msra.mxu0 0
    %2480 = vmatprep.subr.bf16.mxu0 0
    %2481 = vmatpush2.bf16.msra.mxu0 0
    %2482 = vmatprep.subr.bf16.mxu0 0
    %2483 = vmatpush2.bf16.msra.mxu0 0
    %2484 = vmatprep.subr.bf16.mxu0 0
    %2485 = vmatpush2.bf16.msra.mxu0 0
    %2486 = vmatprep.subr.bf16.mxu0 0
    %2487 = vmatpush2.bf16.msra.mxu0 0
    %2488 = vmatprep.mubr.bf16.mxu0 0
    %2489 = vmatmul.mubr.bf16.gmra.mxu0 %v2455
    %v2490 = vpop.f32.mrf.mxu0
    %v2491 = vadd.f32 0.0, %v2490
    %v2492 = vpop.f32.mrf.mxu0
    %v2493 = vadd.f32 0.0, %v2492
    %v2494 = vpop.f32.mrf.mxu0
    %v2495 = vpop.f32.mrf.mxu0
    %2496 = vdwg.mxu0
    %2497 = vmatprep.subr.bf16.mxu0 %v2193
    %2498 = vmatpush1.bf16.msra.mxu0 %v2192
    %2499 = vmatprep.subr.bf16.mxu0 %v2189
    %2500 = vmatpush1.bf16.msra.mxu0 %v2188
    %2501 = vmatprep.subr.bf16.mxu0 %v2185
    %2502 = vmatpush1.bf16.msra.mxu0 %v2184
    %2503 = vmatprep.subr.bf16.mxu0 %v2181
    %2504 = vmatpush1.bf16.msra.mxu0 %v2180
    %2505 = vmatprep.subr.bf16.mxu0 %v2177
    %2506 = vmatpush1.bf16.msra.mxu0 %v2176
    %2507 = vmatprep.subr.bf16.mxu0 %v2173
    %2508 = vmatpush1.bf16.msra.mxu0 %v2172
    %2509 = vmatprep.subr.bf16.mxu0 %v2169
    %2510 = vmatpush1.bf16.msra.mxu0 %v2168
    %2511 = vmatprep.subr.bf16.mxu0 %v2165
    %2512 = vmatpush1.bf16.msra.mxu0 %v2164
    %2513 = vmatprep.subr.bf16.mxu0 0
    %2514 = vmatpush2.bf16.msra.mxu0 0
    %2515 = vmatprep.subr.bf16.mxu0 0
    %2516 = vmatpush2.bf16.msra.mxu0 0
    %2517 = vmatprep.subr.bf16.mxu0 0
    %2518 = vmatpush2.bf16.msra.mxu0 0
    %2519 = vmatprep.subr.bf16.mxu0 0
    %2520 = vmatpush2.bf16.msra.mxu0 0
    %2521 = vmatprep.subr.bf16.mxu0 0
    %2522 = vmatpush2.bf16.msra.mxu0 0
    %2523 = vmatprep.subr.bf16.mxu0 0
    %2524 = vmatpush2.bf16.msra.mxu0 0
    %2525 = vmatprep.subr.bf16.mxu0 0
    %2526 = vmatpush2.bf16.msra.mxu0 0
    %2527 = vmatprep.subr.bf16.mxu0 0
    %2528 = vmatpush2.bf16.msra.mxu0 0
    %2529 = vmatprep.mubr.bf16.mxu0 0
    %2530 = vmatmul.mubr.bf16.gmra.mxu0 %v2455
    %v2531 = vpop.f32.mrf.mxu0
    %v2532 = vadd.f32 0.0, %v2531
    %v2533 = vpop.f32.mrf.mxu0
    %v2534 = vadd.f32 0.0, %v2533
    %v2535 = vpop.f32.mrf.mxu0
    %v2536 = vpop.f32.mrf.mxu0
    %2537 = vdwg.mxu0
    %v2538 = vadd.f32 %v2451, %v2491
    %v2539 = vadd.f32 %v2452, %v2493
    %v2540 = vadd.f32 %v2453, %v2532
    %v2541 = vadd.f32 %v2454, %v2534
    %v2542 = vxor.u32 %v2538, 2147483648
    %v2543 = vmul.f32 %v2542, 1.442695
    %v2544 = vpow.pop %v2543
    %v2545 = vadd.f32 %v2544, 1.0
    %v2546 = vrcp.pop %v2545
    %v2547 = vmul.f32 1.0, %v2546
    %v2548 = vxor.u32 %v2539, 2147483648
    %v2549 = vmul.f32 %v2548, 1.442695
    %v2550 = vpow.pop %v2549
    %v2551 = vadd.f32 %v2550, 1.0
    %v2552 = vrcp.pop %v2551
    %v2553 = vmul.f32 1.0, %v2552
    %v2554 = vtanh.pop %v2540
    %v2555 = vxor.u32 %v2541, 2147483648
    %v2556 = vmul.f32 %v2555, 1.442695
    %v2557 = vpow.pop %v2556
    %v2558 = vadd.f32 %v2557, 1.0
    %v2559 = vrcp.pop %v2558
    %v2560 = vmul.f32 1.0, %v2559
    %v2561 = vmul.f32 %v2553, %v2448
    %v2562 = vmul.f32 %v2547, %v2554
    %v2563 = vadd.f32 %v2561, %v2562
    %v2564 = vtanh.pop %v2563
    %v2565 = vmul.f32 %v2560, %v2564
    %v2566 = vld [vmem:[#allocation2 + $0x60] sm:$0xff]
    %v2567 = vld [vmem:[#allocation2 + $0x68] sm:$0xff]
    %v2568 = vld [vmem:[#allocation2 + $0x70] sm:$0xff]
    %v2569 = vld [vmem:[#allocation2 + $0x78] sm:$0xff]
    %v2570 = vpack.c.bf16 %v2565, %v2565
    %2571 = vmatprep.subr.bf16.mxu0 %v2191
    %2572 = vmatpush1.bf16.msra.mxu0 %v2190
    %2573 = vmatprep.subr.bf16.mxu0 %v2187
    %2574 = vmatpush1.bf16.msra.mxu0 %v2186
    %2575 = vmatprep.subr.bf16.mxu0 %v2183
    %2576 = vmatpush1.bf16.msra.mxu0 %v2182
    %2577 = vmatprep.subr.bf16.mxu0 %v2179
    %2578 = vmatpush1.bf16.msra.mxu0 %v2178
    %2579 = vmatprep.subr.bf16.mxu0 %v2175
    %2580 = vmatpush1.bf16.msra.mxu0 %v2174
    %2581 = vmatprep.subr.bf16.mxu0 %v2171
    %2582 = vmatpush1.bf16.msra.mxu0 %v2170
    %2583 = vmatprep.subr.bf16.mxu0 %v2167
    %2584 = vmatpush1.bf16.msra.mxu0 %v2166
    %2585 = vmatprep.subr.bf16.mxu0 %v2163
    %2586 = vmatpush1.bf16.msra.mxu0 %v2162
    %2587 = vmatprep.subr.bf16.mxu0 0
    %2588 = vmatpush2.bf16.msra.mxu0 0
    %2589 = vmatprep.subr.bf16.mxu0 0
    %2590 = vmatpush2.bf16.msra.mxu0 0
    %2591 = vmatprep.subr.bf16.mxu0 0
    %2592 = vmatpush2.bf16.msra.mxu0 0
    %2593 = vmatprep.subr.bf16.mxu0 0
    %2594 = vmatpush2.bf16.msra.mxu0 0
    %2595 = vmatprep.subr.bf16.mxu0 0
    %2596 = vmatpush2.bf16.msra.mxu0 0
    %2597 = vmatprep.subr.bf16.mxu0 0
    %2598 = vmatpush2.bf16.msra.mxu0 0
    %2599 = vmatprep.subr.bf16.mxu0 0
    %2600 = vmatpush2.bf16.msra.mxu0 0
    %2601 = vmatprep.subr.bf16.mxu0 0
    %2602 = vmatpush2.bf16.msra.mxu0 0
    %2603 = vmatprep.mubr.bf16.mxu0 0
    %2604 = vmatmul.mubr.bf16.gmra.mxu0 %v2570
    %v2605 = vpop.f32.mrf.mxu0
    %v2606 = vadd.f32 0.0, %v2605
    %v2607 = vpop.f32.mrf.mxu0
    %v2608 = vadd.f32 0.0, %v2607
    %v2609 = vpop.f32.mrf.mxu0
    %v2610 = vpop.f32.mrf.mxu0
    %2611 = vdwg.mxu0
    %2612 = vmatprep.subr.bf16.mxu0 %v2193
    %2613 = vmatpush1.bf16.msra.mxu0 %v2192
    %2614 = vmatprep.subr.bf16.mxu0 %v2189
    %2615 = vmatpush1.bf16.msra.mxu0 %v2188
    %2616 = vmatprep.subr.bf16.mxu0 %v2185
    %2617 = vmatpush1.bf16.msra.mxu0 %v2184
    %2618 = vmatprep.subr.bf16.mxu0 %v2181
    %2619 = vmatpush1.bf16.msra.mxu0 %v2180
    %2620 = vmatprep.subr.bf16.mxu0 %v2177
    %2621 = vmatpush1.bf16.msra.mxu0 %v2176
    %2622 = vmatprep.subr.bf16.mxu0 %v2173
    %2623 = vmatpush1.bf16.msra.mxu0 %v2172
    %2624 = vmatprep.subr.bf16.mxu0 %v2169
    %2625 = vmatpush1.bf16.msra.mxu0 %v2168
    %2626 = vmatprep.subr.bf16.mxu0 %v2165
    %2627 = vmatpush1.bf16.msra.mxu0 %v2164
    %2628 = vmatprep.subr.bf16.mxu0 0
    %2629 = vmatpush2.bf16.msra.mxu0 0
    %2630 = vmatprep.subr.bf16.mxu0 0
    %2631 = vmatpush2.bf16.msra.mxu0 0
    %2632 = vmatprep.subr.bf16.mxu0 0
    %2633 = vmatpush2.bf16.msra.mxu0 0
    %2634 = vmatprep.subr.bf16.mxu0 0
    %2635 = vmatpush2.bf16.msra.mxu0 0
    %2636 = vmatprep.subr.bf16.mxu0 0
    %2637 = vmatpush2.bf16.msra.mxu0 0
    %2638 = vmatprep.subr.bf16.mxu0 0
    %2639 = vmatpush2.bf16.msra.mxu0 0
    %2640 = vmatprep.subr.bf16.mxu0 0
    %2641 = vmatpush2.bf16.msra.mxu0 0
    %2642 = vmatprep.subr.bf16.mxu0 0
    %2643 = vmatpush2.bf16.msra.mxu0 0
    %2644 = vmatprep.mubr.bf16.mxu0 0
    %2645 = vmatmul.mubr.bf16.gmra.mxu0 %v2570
    %v2646 = vpop.f32.mrf.mxu0
    %v2647 = vadd.f32 0.0, %v2646
    %v2648 = vpop.f32.mrf.mxu0
    %v2649 = vadd.f32 0.0, %v2648
    %v2650 = vpop.f32.mrf.mxu0
    %v2651 = vpop.f32.mrf.mxu0
    %2652 = vdwg.mxu0
    %v2653 = vadd.f32 %v2566, %v2606
    %v2654 = vadd.f32 %v2567, %v2608
    %v2655 = vadd.f32 %v2568, %v2647
    %v2656 = vadd.f32 %v2569, %v2649
    %v2657 = vxor.u32 %v2653, 2147483648
    %v2658 = vmul.f32 %v2657, 1.442695
    %v2659 = vpow.pop %v2658
    %v2660 = vadd.f32 %v2659, 1.0
    %v2661 = vrcp.pop %v2660
    %v2662 = vmul.f32 1.0, %v2661
    %v2663 = vxor.u32 %v2654, 2147483648
    %v2664 = vmul.f32 %v2663, 1.442695
    %v2665 = vpow.pop %v2664
    %v2666 = vadd.f32 %v2665, 1.0
    %v2667 = vrcp.pop %v2666
    %v2668 = vmul.f32 1.0, %v2667
    %v2669 = vtanh.pop %v2655
    %v2670 = vxor.u32 %v2656, 2147483648
    %v2671 = vmul.f32 %v2670, 1.442695
    %v2672 = vpow.pop %v2671
    %v2673 = vadd.f32 %v2672, 1.0
    %v2674 = vrcp.pop %v2673
    %v2675 = vmul.f32 1.0, %v2674
    %v2676 = vmul.f32 %v2668, %v2563
    %v2677 = vmul.f32 %v2662, %v2669
    %v2678 = vadd.f32 %v2676, %v2677
    %v2679 = vtanh.pop %v2678
    %v2680 = vmul.f32 %v2675, %v2679
    %v2681 = vld [vmem:[#allocation2 + $0x80] sm:$0xff]
    %v2682 = vld [vmem:[#allocation2 + $0x88] sm:$0xff]
    %v2683 = vld [vmem:[#allocation2 + $0x90] sm:$0xff]
    %v2684 = vld [vmem:[#allocation2 + $0x98] sm:$0xff]
    %v2685 = vpack.c.bf16 %v2680, %v2680
    %2686 = vmatprep.subr.bf16.mxu0 %v2191
    %2687 = vmatpush1.bf16.msra.mxu0 %v2190
    %2688 = vmatprep.subr.bf16.mxu0 %v2187
    %2689 = vmatpush1.bf16.msra.mxu0 %v2186
    %2690 = vmatprep.subr.bf16.mxu0 %v2183
    %2691 = vmatpush1.bf16.msra.mxu0 %v2182
    %2692 = vmatprep.subr.bf16.mxu0 %v2179
    %2693 = vmatpush1.bf16.msra.mxu0 %v2178
    %2694 = vmatprep.subr.bf16.mxu0 %v2175
    %2695 = vmatpush1.bf16.msra.mxu0 %v2174
    %2696 = vmatprep.subr.bf16.mxu0 %v2171
    %2697 = vmatpush1.bf16.msra.mxu0 %v2170
    %2698 = vmatprep.subr.bf16.mxu0 %v2167
    %2699 = vmatpush1.bf16.msra.mxu0 %v2166
    %2700 = vmatprep.subr.bf16.mxu0 %v2163
    %2701 = vmatpush1.bf16.msra.mxu0 %v2162
    %2702 = vmatprep.subr.bf16.mxu0 0
    %2703 = vmatpush2.bf16.msra.mxu0 0
    %2704 = vmatprep.subr.bf16.mxu0 0
    %2705 = vmatpush2.bf16.msra.mxu0 0
    %2706 = vmatprep.subr.bf16.mxu0 0
    %2707 = vmatpush2.bf16.msra.mxu0 0
    %2708 = vmatprep.subr.bf16.mxu0 0
    %2709 = vmatpush2.bf16.msra.mxu0 0
    %2710 = vmatprep.subr.bf16.mxu0 0
    %2711 = vmatpush2.bf16.msra.mxu0 0
    %2712 = vmatprep.subr.bf16.mxu0 0
    %2713 = vmatpush2.bf16.msra.mxu0 0
    %2714 = vmatprep.subr.bf16.mxu0 0
    %2715 = vmatpush2.bf16.msra.mxu0 0
    %2716 = vmatprep.subr.bf16.mxu0 0
    %2717 = vmatpush2.bf16.msra.mxu0 0
    %2718 = vmatprep.mubr.bf16.mxu0 0
    %2719 = vmatmul.mubr.bf16.gmra.mxu0 %v2685
    %v2720 = vpop.f32.mrf.mxu0
    %v2721 = vadd.f32 0.0, %v2720
    %v2722 = vpop.f32.mrf.mxu0
    %v2723 = vadd.f32 0.0, %v2722
    %v2724 = vpop.f32.mrf.mxu0
    %v2725 = vpop.f32.mrf.mxu0
    %2726 = vdwg.mxu0
    %2727 = vmatprep.subr.bf16.mxu0 %v2193
    %2728 = vmatpush1.bf16.msra.mxu0 %v2192
    %2729 = vmatprep.subr.bf16.mxu0 %v2189
    %2730 = vmatpush1.bf16.msra.mxu0 %v2188
    %2731 = vmatprep.subr.bf16.mxu0 %v2185
    %2732 = vmatpush1.bf16.msra.mxu0 %v2184
    %2733 = vmatprep.subr.bf16.mxu0 %v2181
    %2734 = vmatpush1.bf16.msra.mxu0 %v2180
    %2735 = vmatprep.subr.bf16.mxu0 %v2177
    %2736 = vmatpush1.bf16.msra.mxu0 %v2176
    %2737 = vmatprep.subr.bf16.mxu0 %v2173
    %2738 = vmatpush1.bf16.msra.mxu0 %v2172
    %2739 = vmatprep.subr.bf16.mxu0 %v2169
    %2740 = vmatpush1.bf16.msra.mxu0 %v2168
    %2741 = vmatprep.subr.bf16.mxu0 %v2165
    %2742 = vmatpush1.bf16.msra.mxu0 %v2164
    %2743 = vmatprep.subr.bf16.mxu0 0
    %2744 = vmatpush2.bf16.msra.mxu0 0
    %2745 = vmatprep.subr.bf16.mxu0 0
    %2746 = vmatpush2.bf16.msra.mxu0 0
    %2747 = vmatprep.subr.bf16.mxu0 0
    %2748 = vmatpush2.bf16.msra.mxu0 0
    %2749 = vmatprep.subr.bf16.mxu0 0
    %2750 = vmatpush2.bf16.msra.mxu0 0
    %2751 = vmatprep.subr.bf16.mxu0 0
    %2752 = vmatpush2.bf16.msra.mxu0 0
    %2753 = vmatprep.subr.bf16.mxu0 0
    %2754 = vmatpush2.bf16.msra.mxu0 0
    %2755 = vmatprep.subr.bf16.mxu0 0
    %2756 = vmatpush2.bf16.msra.mxu0 0
    %2757 = vmatprep.subr.bf16.mxu0 0
    %2758 = vmatpush2.bf16.msra.mxu0 0
    %2759 = vmatprep.mubr.bf16.mxu0 0
    %2760 = vmatmul.mubr.bf16.gmra.mxu0 %v2685
    %v2761 = vpop.f32.mrf.mxu0
    %v2762 = vadd.f32 0.0, %v2761
    %v2763 = vpop.f32.mrf.mxu0
    %v2764 = vadd.f32 0.0, %v2763
    %v2765 = vpop.f32.mrf.mxu0
    %v2766 = vpop.f32.mrf.mxu0
    %2767 = vdwg.mxu0
    %v2768 = vadd.f32 %v2681, %v2721
    %v2769 = vadd.f32 %v2682, %v2723
    %v2770 = vadd.f32 %v2683, %v2762
    %v2771 = vadd.f32 %v2684, %v2764
    %v2772 = vxor.u32 %v2768, 2147483648
    %v2773 = vmul.f32 %v2772, 1.442695
    %v2774 = vpow.pop %v2773
    %v2775 = vadd.f32 %v2774, 1.0
    %v2776 = vrcp.pop %v2775
    %v2777 = vmul.f32 1.0, %v2776
    %v2778 = vxor.u32 %v2769, 2147483648
    %v2779 = vmul.f32 %v2778, 1.442695
    %v2780 = vpow.pop %v2779
    %v2781 = vadd.f32 %v2780, 1.0
    %v2782 = vrcp.pop %v2781
    %v2783 = vmul.f32 1.0, %v2782
    %v2784 = vtanh.pop %v2770
    %v2785 = vxor.u32 %v2771, 2147483648
    %v2786 = vmul.f32 %v2785, 1.442695
    %v2787 = vpow.pop %v2786
    %v2788 = vadd.f32 %v2787, 1.0
    %v2789 = vrcp.pop %v2788
    %v2790 = vmul.f32 1.0, %v2789
    %v2791 = vmul.f32 %v2783, %v2678
    %v2792 = vmul.f32 %v2777, %v2784
    %v2793 = vadd.f32 %v2791, %v2792
    %v2794 = vtanh.pop %v2793
    %v2795 = vmul.f32 %v2790, %v2794
    %v2796 = vld [vmem:[#allocation2 + $0xa0] sm:$0xff]
    %v2797 = vld [vmem:[#allocation2 + $0xa8] sm:$0xff]
    %v2798 = vld [vmem:[#allocation2 + $0xb0] sm:$0xff]
    %v2799 = vld [vmem:[#allocation2 + $0xb8] sm:$0xff]
    %v2800 = vpack.c.bf16 %v2795, %v2795
    %2801 = vmatprep.subr.bf16.mxu0 %v2191
    %2802 = vmatpush1.bf16.msra.mxu0 %v2190
    %2803 = vmatprep.subr.bf16.mxu0 %v2187
    %2804 = vmatpush1.bf16.msra.mxu0 %v2186
    %2805 = vmatprep.subr.bf16.mxu0 %v2183
    %2806 = vmatpush1.bf16.msra.mxu0 %v2182
    %2807 = vmatprep.subr.bf16.mxu0 %v2179
    %2808 = vmatpush1.bf16.msra.mxu0 %v2178
    %2809 = vmatprep.subr.bf16.mxu0 %v2175
    %2810 = vmatpush1.bf16.msra.mxu0 %v2174
    %2811 = vmatprep.subr.bf16.mxu0 %v2171
    %2812 = vmatpush1.bf16.msra.mxu0 %v2170
    %2813 = vmatprep.subr.bf16.mxu0 %v2167
    %2814 = vmatpush1.bf16.msra.mxu0 %v2166
    %2815 = vmatprep.subr.bf16.mxu0 %v2163
    %2816 = vmatpush1.bf16.msra.mxu0 %v2162
    %2817 = vmatprep.subr.bf16.mxu0 0
    %2818 = vmatpush2.bf16.msra.mxu0 0
    %2819 = vmatprep.subr.bf16.mxu0 0
    %2820 = vmatpush2.bf16.msra.mxu0 0
    %2821 = vmatprep.subr.bf16.mxu0 0
    %2822 = vmatpush2.bf16.msra.mxu0 0
    %2823 = vmatprep.subr.bf16.mxu0 0
    %2824 = vmatpush2.bf16.msra.mxu0 0
    %2825 = vmatprep.subr.bf16.mxu0 0
    %2826 = vmatpush2.bf16.msra.mxu0 0
    %2827 = vmatprep.subr.bf16.mxu0 0
    %2828 = vmatpush2.bf16.msra.mxu0 0
    %2829 = vmatprep.subr.bf16.mxu0 0
    %2830 = vmatpush2.bf16.msra.mxu0 0
    %2831 = vmatprep.subr.bf16.mxu0 0
    %2832 = vmatpush2.bf16.msra.mxu0 0
    %2833 = vmatprep.mubr.bf16.mxu0 0
    %2834 = vmatmul.mubr.bf16.gmra.mxu0 %v2800
    %v2835 = vpop.f32.mrf.mxu0
    %v2836 = vadd.f32 0.0, %v2835
    %v2837 = vpop.f32.mrf.mxu0
    %v2838 = vadd.f32 0.0, %v2837
    %v2839 = vpop.f32.mrf.mxu0
    %v2840 = vpop.f32.mrf.mxu0
    %2841 = vdwg.mxu0
    %2842 = vmatprep.subr.bf16.mxu0 %v2193
    %2843 = vmatpush1.bf16.msra.mxu0 %v2192
    %2844 = vmatprep.subr.bf16.mxu0 %v2189
    %2845 = vmatpush1.bf16.msra.mxu0 %v2188
    %2846 = vmatprep.subr.bf16.mxu0 %v2185
    %2847 = vmatpush1.bf16.msra.mxu0 %v2184
    %2848 = vmatprep.subr.bf16.mxu0 %v2181
    %2849 = vmatpush1.bf16.msra.mxu0 %v2180
    %2850 = vmatprep.subr.bf16.mxu0 %v2177
    %2851 = vmatpush1.bf16.msra.mxu0 %v2176
    %2852 = vmatprep.subr.bf16.mxu0 %v2173
    %2853 = vmatpush1.bf16.msra.mxu0 %v2172
    %2854 = vmatprep.subr.bf16.mxu0 %v2169
    %2855 = vmatpush1.bf16.msra.mxu0 %v2168
    %2856 = vmatprep.subr.bf16.mxu0 %v2165
    %2857 = vmatpush1.bf16.msra.mxu0 %v2164
    %2858 = vmatprep.subr.bf16.mxu0 0
    %2859 = vmatpush2.bf16.msra.mxu0 0
    %2860 = vmatprep.subr.bf16.mxu0 0
    %2861 = vmatpush2.bf16.msra.mxu0 0
    %2862 = vmatprep.subr.bf16.mxu0 0
    %2863 = vmatpush2.bf16.msra.mxu0 0
    %2864 = vmatprep.subr.bf16.mxu0 0
    %2865 = vmatpush2.bf16.msra.mxu0 0
    %2866 = vmatprep.subr.bf16.mxu0 0
    %2867 = vmatpush2.bf16.msra.mxu0 0
    %2868 = vmatprep.subr.bf16.mxu0 0
    %2869 = vmatpush2.bf16.msra.mxu0 0
    %2870 = vmatprep.subr.bf16.mxu0 0
    %2871 = vmatpush2.bf16.msra.mxu0 0
    %2872 = vmatprep.subr.bf16.mxu0 0
    %2873 = vmatpush2.bf16.msra.mxu0 0
    %2874 = vmatprep.mubr.bf16.mxu0 0
    %2875 = vmatmul.mubr.bf16.gmra.mxu0 %v2800
    %v2876 = vpop.f32.mrf.mxu0
    %v2877 = vadd.f32 0.0, %v2876
    %v2878 = vpop.f32.mrf.mxu0
    %v2879 = vadd.f32 0.0, %v2878
    %v2880 = vpop.f32.mrf.mxu0
    %v2881 = vpop.f32.mrf.mxu0
    %2882 = vdwg.mxu0
    %v2883 = vadd.f32 %v2796, %v2836
    %v2884 = vadd.f32 %v2797, %v2838
    %v2885 = vadd.f32 %v2798, %v2877
    %v2886 = vadd.f32 %v2799, %v2879
    %v2887 = vxor.u32 %v2883, 2147483648
    %v2888 = vmul.f32 %v2887, 1.442695
    %v2889 = vpow.pop %v2888
    %v2890 = vadd.f32 %v2889, 1.0
    %v2891 = vrcp.pop %v2890
    %v2892 = vmul.f32 1.0, %v2891
    %v2893 = vxor.u32 %v2884, 2147483648
    %v2894 = vmul.f32 %v2893, 1.442695
    %v2895 = vpow.pop %v2894
    %v2896 = vadd.f32 %v2895, 1.0
    %v2897 = vrcp.pop %v2896
    %v2898 = vmul.f32 1.0, %v2897
    %v2899 = vtanh.pop %v2885
    %v2900 = vxor.u32 %v2886, 2147483648
    %v2901 = vmul.f32 %v2900, 1.442695
    %v2902 = vpow.pop %v2901
    %v2903 = vadd.f32 %v2902, 1.0
    %v2904 = vrcp.pop %v2903
    %v2905 = vmul.f32 1.0, %v2904
    %v2906 = vmul.f32 %v2898, %v2793
    %v2907 = vmul.f32 %v2892, %v2899
    %v2908 = vadd.f32 %v2906, %v2907
    %v2909 = vtanh.pop %v2908
    %v2910 = vmul.f32 %v2905, %v2909
    %v2911 = vld [vmem:[#allocation2 + $0xc0] sm:$0xff]
    %v2912 = vld [vmem:[#allocation2 + $0xc8] sm:$0xff]
    %v2913 = vld [vmem:[#allocation2 + $0xd0] sm:$0xff]
    %v2914 = vld [vmem:[#allocation2 + $0xd8] sm:$0xff]
    %v2915 = vpack.c.bf16 %v2910, %v2910
    %2916 = vmatprep.subr.bf16.mxu0 %v2191
    %2917 = vmatpush1.bf16.msra.mxu0 %v2190
    %2918 = vmatprep.subr.bf16.mxu0 %v2187
    %2919 = vmatpush1.bf16.msra.mxu0 %v2186
    %2920 = vmatprep.subr.bf16.mxu0 %v2183
    %2921 = vmatpush1.bf16.msra.mxu0 %v2182
    %2922 = vmatprep.subr.bf16.mxu0 %v2179
    %2923 = vmatpush1.bf16.msra.mxu0 %v2178
    %2924 = vmatprep.subr.bf16.mxu0 %v2175
    %2925 = vmatpush1.bf16.msra.mxu0 %v2174
    %2926 = vmatprep.subr.bf16.mxu0 %v2171
    %2927 = vmatpush1.bf16.msra.mxu0 %v2170
    %2928 = vmatprep.subr.bf16.mxu0 %v2167
    %2929 = vmatpush1.bf16.msra.mxu0 %v2166
    %2930 = vmatprep.subr.bf16.mxu0 %v2163
    %2931 = vmatpush1.bf16.msra.mxu0 %v2162
    %2932 = vmatprep.subr.bf16.mxu0 0
    %2933 = vmatpush2.bf16.msra.mxu0 0
    %2934 = vmatprep.subr.bf16.mxu0 0
    %2935 = vmatpush2.bf16.msra.mxu0 0
    %2936 = vmatprep.subr.bf16.mxu0 0
    %2937 = vmatpush2.bf16.msra.mxu0 0
    %2938 = vmatprep.subr.bf16.mxu0 0
    %2939 = vmatpush2.bf16.msra.mxu0 0
    %2940 = vmatprep.subr.bf16.mxu0 0
    %2941 = vmatpush2.bf16.msra.mxu0 0
    %2942 = vmatprep.subr.bf16.mxu0 0
    %2943 = vmatpush2.bf16.msra.mxu0 0
    %2944 = vmatprep.subr.bf16.mxu0 0
    %2945 = vmatpush2.bf16.msra.mxu0 0
    %2946 = vmatprep.subr.bf16.mxu0 0
    %2947 = vmatpush2.bf16.msra.mxu0 0
    %2948 = vmatprep.mubr.bf16.mxu0 0
    %2949 = vmatmul.mubr.bf16.gmra.mxu0 %v2915
    %v2950 = vpop.f32.mrf.mxu0
    %v2951 = vadd.f32 0.0, %v2950
    %v2952 = vpop.f32.mrf.mxu0
    %v2953 = vadd.f32 0.0, %v2952
    %v2954 = vpop.f32.mrf.mxu0
    %v2955 = vpop.f32.mrf.mxu0
    %2956 = vdwg.mxu0
    %2957 = vmatprep.subr.bf16.mxu0 %v2193
    %2958 = vmatpush1.bf16.msra.mxu0 %v2192
    %2959 = vmatprep.subr.bf16.mxu0 %v2189
    %2960 = vmatpush1.bf16.msra.mxu0 %v2188
    %2961 = vmatprep.subr.bf16.mxu0 %v2185
    %2962 = vmatpush1.bf16.msra.mxu0 %v2184
    %2963 = vmatprep.subr.bf16.mxu0 %v2181
    %2964 = vmatpush1.bf16.msra.mxu0 %v2180
    %2965 = vmatprep.subr.bf16.mxu0 %v2177
    %2966 = vmatpush1.bf16.msra.mxu0 %v2176
    %2967 = vmatprep.subr.bf16.mxu0 %v2173
    %2968 = vmatpush1.bf16.msra.mxu0 %v2172
    %2969 = vmatprep.subr.bf16.mxu0 %v2169
    %2970 = vmatpush1.bf16.msra.mxu0 %v2168
    %2971 = vmatprep.subr.bf16.mxu0 %v2165
    %2972 = vmatpush1.bf16.msra.mxu0 %v2164
    %2973 = vmatprep.subr.bf16.mxu0 0
    %2974 = vmatpush2.bf16.msra.mxu0 0
    %2975 = vmatprep.subr.bf16.mxu0 0
    %2976 = vmatpush2.bf16.msra.mxu0 0
    %2977 = vmatprep.subr.bf16.mxu0 0
    %2978 = vmatpush2.bf16.msra.mxu0 0
    %2979 = vmatprep.subr.bf16.mxu0 0
    %2980 = vmatpush2.bf16.msra.mxu0 0
    %2981 = vmatprep.subr.bf16.mxu0 0
    %2982 = vmatpush2.bf16.msra.mxu0 0
    %2983 = vmatprep.subr.bf16.mxu0 0
    %2984 = vmatpush2.bf16.msra.mxu0 0
    %2985 = vmatprep.subr.bf16.mxu0 0
    %2986 = vmatpush2.bf16.msra.mxu0 0
    %2987 = vmatprep.subr.bf16.mxu0 0
    %2988 = vmatpush2.bf16.msra.mxu0 0
    %2989 = vmatprep.mubr.bf16.mxu0 0
    %2990 = vmatmul.mubr.bf16.gmra.mxu0 %v2915
    %v2991 = vpop.f32.mrf.mxu0
    %v2992 = vadd.f32 0.0, %v2991
    %v2993 = vpop.f32.mrf.mxu0
    %v2994 = vadd.f32 0.0, %v2993
    %v2995 = vpop.f32.mrf.mxu0
    %v2996 = vpop.f32.mrf.mxu0
    %2997 = vdwg.mxu0
    %v2998 = vadd.f32 %v2911, %v2951
    %v2999 = vadd.f32 %v2912, %v2953
    %v3000 = vadd.f32 %v2913, %v2992
    %v3001 = vadd.f32 %v2914, %v2994
    %v3002 = vxor.u32 %v2998, 2147483648
    %v3003 = vmul.f32 %v3002, 1.442695
    %v3004 = vpow.pop %v3003
    %v3005 = vadd.f32 %v3004, 1.0
    %v3006 = vrcp.pop %v3005
    %v3007 = vmul.f32 1.0, %v3006
    %v3008 = vxor.u32 %v2999, 2147483648
    %v3009 = vmul.f32 %v3008, 1.442695
    %v3010 = vpow.pop %v3009
    %v3011 = vadd.f32 %v3010, 1.0
    %v3012 = vrcp.pop %v3011
    %v3013 = vmul.f32 1.0, %v3012
    %v3014 = vtanh.pop %v3000
    %v3015 = vxor.u32 %v3001, 2147483648
    %v3016 = vmul.f32 %v3015, 1.442695
    %v3017 = vpow.pop %v3016
    %v3018 = vadd.f32 %v3017, 1.0
    %v3019 = vrcp.pop %v3018
    %v3020 = vmul.f32 1.0, %v3019
    %v3021 = vmul.f32 %v3013, %v2908
    %v3022 = vmul.f32 %v3007, %v3014
    %v3023 = vadd.f32 %v3021, %v3022
    %v3024 = vtanh.pop %v3023
    %v3025 = vmul.f32 %v3020, %v3024
    %v3026 = vld [vmem:[#allocation2 + $0xe0] sm:$0xff]
    %v3027 = vld [vmem:[#allocation2 + $0xe8] sm:$0xff]
    %v3028 = vld [vmem:[#allocation2 + $0xf0] sm:$0xff]
    %v3029 = vld [vmem:[#allocation2 + $0xf8] sm:$0xff]
    %v3030 = vpack.c.bf16 %v3025, %v3025
    %3031 = vmatprep.subr.bf16.mxu0 %v2191
    %3032 = vmatpush1.bf16.msra.mxu0 %v2190
    %3033 = vmatprep.subr.bf16.mxu0 %v2187
    %3034 = vmatpush1.bf16.msra.mxu0 %v2186
    %3035 = vmatprep.subr.bf16.mxu0 %v2183
    %3036 = vmatpush1.bf16.msra.mxu0 %v2182
    %3037 = vmatprep.subr.bf16.mxu0 %v2179
    %3038 = vmatpush1.bf16.msra.mxu0 %v2178
    %3039 = vmatprep.subr.bf16.mxu0 %v2175
    %3040 = vmatpush1.bf16.msra.mxu0 %v2174
    %3041 = vmatprep.subr.bf16.mxu0 %v2171
    %3042 = vmatpush1.bf16.msra.mxu0 %v2170
    %3043 = vmatprep.subr.bf16.mxu0 %v2167
    %3044 = vmatpush1.bf16.msra.mxu0 %v2166
    %3045 = vmatprep.subr.bf16.mxu0 %v2163
    %3046 = vmatpush1.bf16.msra.mxu0 %v2162
    %3047 = vmatprep.subr.bf16.mxu0 0
    %3048 = vmatpush2.bf16.msra.mxu0 0
    %3049 = vmatprep.subr.bf16.mxu0 0
    %3050 = vmatpush2.bf16.msra.mxu0 0
    %3051 = vmatprep.subr.bf16.mxu0 0
    %3052 = vmatpush2.bf16.msra.mxu0 0
    %3053 = vmatprep.subr.bf16.mxu0 0
    %3054 = vmatpush2.bf16.msra.mxu0 0
    %3055 = vmatprep.subr.bf16.mxu0 0
    %3056 = vmatpush2.bf16.msra.mxu0 0
    %3057 = vmatprep.subr.bf16.mxu0 0
    %3058 = vmatpush2.bf16.msra.mxu0 0
    %3059 = vmatprep.subr.bf16.mxu0 0
    %3060 = vmatpush2.bf16.msra.mxu0 0
    %3061 = vmatprep.subr.bf16.mxu0 0
    %3062 = vmatpush2.bf16.msra.mxu0 0
    %3063 = vmatprep.mubr.bf16.mxu0 0
    %3064 = vmatmul.mubr.bf16.gmra.mxu0 %v3030
    %v3065 = vpop.f32.mrf.mxu0
    %v3066 = vadd.f32 0.0, %v3065
    %v3067 = vpop.f32.mrf.mxu0
    %v3068 = vadd.f32 0.0, %v3067
    %v3069 = vpop.f32.mrf.mxu0
    %v3070 = vpop.f32.mrf.mxu0
    %3071 = vdwg.mxu0
    %3072 = vmatprep.subr.bf16.mxu0 %v2193
    %3073 = vmatpush1.bf16.msra.mxu0 %v2192
    %3074 = vmatprep.subr.bf16.mxu0 %v2189
    %3075 = vmatpush1.bf16.msra.mxu0 %v2188
    %3076 = vmatprep.subr.bf16.mxu0 %v2185
    %3077 = vmatpush1.bf16.msra.mxu0 %v2184
    %3078 = vmatprep.subr.bf16.mxu0 %v2181
    %3079 = vmatpush1.bf16.msra.mxu0 %v2180
    %3080 = vmatprep.subr.bf16.mxu0 %v2177
    %3081 = vmatpush1.bf16.msra.mxu0 %v2176
    %3082 = vmatprep.subr.bf16.mxu0 %v2173
    %3083 = vmatpush1.bf16.msra.mxu0 %v2172
    %3084 = vmatprep.subr.bf16.mxu0 %v2169
    %3085 = vmatpush1.bf16.msra.mxu0 %v2168
    %3086 = vmatprep.subr.bf16.mxu0 %v2165
    %3087 = vmatpush1.bf16.msra.mxu0 %v2164
    %3088 = vmatprep.subr.bf16.mxu0 0
    %3089 = vmatpush2.bf16.msra.mxu0 0
    %3090 = vmatprep.subr.bf16.mxu0 0
    %3091 = vmatpush2.bf16.msra.mxu0 0
    %3092 = vmatprep.subr.bf16.mxu0 0
    %3093 = vmatpush2.bf16.msra.mxu0 0
    %3094 = vmatprep.subr.bf16.mxu0 0
    %3095 = vmatpush2.bf16.msra.mxu0 0
    %3096 = vmatprep.subr.bf16.mxu0 0
    %3097 = vmatpush2.bf16.msra.mxu0 0
    %3098 = vmatprep.subr.bf16.mxu0 0
    %3099 = vmatpush2.bf16.msra.mxu0 0
    %3100 = vmatprep.subr.bf16.mxu0 0
    %3101 = vmatpush2.bf16.msra.mxu0 0
    %3102 = vmatprep.subr.bf16.mxu0 0
    %3103 = vmatpush2.bf16.msra.mxu0 0
    %3104 = vmatprep.mubr.bf16.mxu0 0
    %3105 = vmatmul.mubr.bf16.gmra.mxu0 %v3030
    %v3106 = vpop.f32.mrf.mxu0
    %v3107 = vadd.f32 0.0, %v3106
    %v3108 = vpop.f32.mrf.mxu0
    %v3109 = vadd.f32 0.0, %v3108
    %v3110 = vpop.f32.mrf.mxu0
    %v3111 = vpop.f32.mrf.mxu0
    %3112 = vdwg.mxu0
    %v3113 = vadd.f32 %v3026, %v3066
    %v3114 = vadd.f32 %v3027, %v3068
    %v3115 = vadd.f32 %v3028, %v3107
    %v3116 = vadd.f32 %v3029, %v3109
    %v3117 = vxor.u32 %v3113, 2147483648
    %v3118 = vmul.f32 %v3117, 1.442695
    %v3119 = vpow.pop %v3118
    %v3120 = vadd.f32 %v3119, 1.0
    %v3121 = vrcp.pop %v3120
    %v3122 = vmul.f32 1.0, %v3121
    %v3123 = vxor.u32 %v3114, 2147483648
    %v3124 = vmul.f32 %v3123, 1.442695
    %v3125 = vpow.pop %v3124
    %v3126 = vadd.f32 %v3125, 1.0
    %v3127 = vrcp.pop %v3126
    %v3128 = vmul.f32 1.0, %v3127
    %v3129 = vtanh.pop %v3115
    %v3130 = vxor.u32 %v3116, 2147483648
    %v3131 = vmul.f32 %v3130, 1.442695
    %v3132 = vpow.pop %v3131
    %v3133 = vadd.f32 %v3132, 1.0
    %v3134 = vrcp.pop %v3133
    %v3135 = vmul.f32 1.0, %v3134
    %v3136 = vmul.f32 %v3128, %v3023
    %v3137 = vmul.f32 %v3122, %v3129
    %v3138 = vadd.f32 %v3136, %v3137
    %v3139 = vtanh.pop %v3138
    %v3140 = vmul.f32 %v3135, %v3139
    %3141 = vst [vmem:[%s10 + $0x8] sm:$0xff] %v3140
    %3142 = vst [vmem:[%s11 + $0x8] sm:$0xff] %v3138
    %3143 = vst [vmem:[%s9] sm:$0xff] %v2335
    %3144 = vst [vmem:[%s9 + $0x8] sm:$0xff] %v2450
    %3145 = vst [vmem:[%s9 + $0x10] sm:$0xff] %v2565
    %3146 = vst [vmem:[%s9 + $0x18] sm:$0xff] %v2680
    %3147 = vst [vmem:[%s9 + $0x20] sm:$0xff] %v2795
    %3148 = vst [vmem:[%s9 + $0x28] sm:$0xff] %v2910
    %3149 = vst [vmem:[%s9 + $0x30] sm:$0xff] %v3025
    %3150 = vst [vmem:[%s9 + $0x38] sm:$0xff] %v3140
    // Predicated region
    $region54: #{basic_rnn_decoder_lstm.1} parent=1 // pred_check
      _
    $region55: #{basic_rnn_decoder_lstm.1} parent=1 // pred_check_branch
      %3152 = sbr.rel (0) target = $region57
    $region56: #{basic_rnn_decoder_lstm.1} parent=1 // pred_region
      _
    $region57: #{basic_rnn_decoder_lstm.1} parent=1 // pred_fallthru
      _
    // Predicated region
    $region58: #{basic_rnn_decoder_lstm.1} parent=1 // pred_check
      _
    $region59: #{basic_rnn_decoder_lstm.1} parent=1 // pred_check_branch
      %3154 = sbr.rel (0) target = $region61
    $region60: #{basic_rnn_decoder_lstm.1} parent=1 // pred_region
      _
    $region61: #{basic_rnn_decoder_lstm.1} parent=1 // pred_fallthru
      _
    // Predicated region
    $region62: #{basic_rnn_decoder_lstm.1} parent=1 // pred_check
      _
    $region63: #{basic_rnn_decoder_lstm.1} parent=1 // pred_check_branch
      %3156 = sbr.rel (0) target = $region65
    $region64: #{basic_rnn_decoder_lstm.1} parent=1 // pred_region
      _
    $region65: #{basic_rnn_decoder_lstm.1} parent=1 // pred_fallthru
      _
    // Predicated region
    $region66: #{basic_rnn_decoder_lstm.1} parent=1 // pred_check
      _
    $region67: #{basic_rnn_decoder_lstm.1} parent=1 // pred_check_branch
      %3158 = sbr.rel (0) target = $region69
    $region68: #{basic_rnn_decoder_lstm.1} parent=1 // pred_region
      _
    $region69: #{basic_rnn_decoder_lstm.1} parent=1 // pred_fallthru
      _
    // Predicated region
    $region70: #{basic_rnn_decoder_lstm.1} parent=1 // pred_check
      _
    $region71: #{basic_rnn_decoder_lstm.1} parent=1 // pred_check_branch
      %3160 = sbr.rel (0) target = $region73
    $region72: #{basic_rnn_decoder_lstm.1} parent=1 // pred_region
      _
    $region73: #{basic_rnn_decoder_lstm.1} parent=1 // pred_fallthru
      _
    // Predicated region
    $region74: #{basic_rnn_decoder_lstm.1} parent=1 // pred_check
      _
    $region75: #{basic_rnn_decoder_lstm.1} parent=1 // pred_check_branch
      %3162 = sbr.rel (0) target = $region77
    $region76: #{basic_rnn_decoder_lstm.1} parent=1 // pred_region
      _
    $region77: #{basic_rnn_decoder_lstm.1} parent=1 // pred_fallthru
      _
    %3163 = vsyncpa [#allocation4], 1
    %3164 = vsyncpa [#allocation6], 1
    %3165 = vsyncpa [#allocation9], 1

</llo_original>
